<compile_context>
chip_gen: v7x
topology: tpu7x:2x2x1
jax: 0.10.0
libtpu: 0.0.40
codegen_flags: <defaults>
</compile_context>

<pallas_src>
import functools

import jax
import jax.numpy as jnp
from jax.experimental import pallas as pl
from jax.experimental.pallas import tpu as pltpu

_BRANCH_KEYS = ('d_w', 'd_b', 'mid_w', 'mid_b', 'g_w', 'g_b', 'fc_w', 'fc_b')
_NB = len(_BRANCH_KEYS)
_F32 = jnp.float32


# ------------------------------------------------------------------
# Packed-complex helpers (vectors carried lane-dense as [real | imag])
# ------------------------------------------------------------------

def _split(p):
    h = p.shape[-1] // 2
    return p[:, :h], p[:, h:]


def _pack(r, i):
    return jnp.concatenate([r, i], axis=-1)


def _cmul(a, b):                      # a * b (complex, packed)
    ar, ai = _split(a)
    br, bi = _split(b)
    return _pack(ar * br - ai * bi, ar * bi + ai * br)


def _cmul_conj(a, b):                 # conj(a) * b (complex, packed)
    ar, ai = _split(a)
    br, bi = _split(b)
    return _pack(ar * br + ai * bi, ar * bi - ai * br)


# ------------------------------------------------------------------
# In-kernel conv branch.
# Conv activations live in a (2C, bsz*L) layout: rows = [real chans; imag chans],
# lanes = batch-major length.  Weights are shared across the batch (no kron).
# ------------------------------------------------------------------

def _conv_branch(vec, prm, use_abs, thr, mask_m, mask_p, segmean, segones,
                 *, bsz, n, c):
    L = bsz * n

    # ---- (bsz, 2n) packed complex -> conv layout (2, L) ----------------------
    xr, xi = _split(vec)
    r_row = jnp.concatenate([xr[b:b + 1, :] for b in range(bsz)], axis=1)  # (1, L)
    i_row = jnp.concatenate([xi[b:b + 1, :] for b in range(bsz)], axis=1)
    ridx2 = jax.lax.broadcasted_iota(jnp.int32, (2, 1), 0)
    a0 = jnp.where(ridx2 == 0, r_row, i_row)                               # (2, L)

    # +-1 taps via lane rotation + boundary mask (no shift matmuls, no padding).
    def sprev(x):                     # x[l-1] within each batch segment
        return jnp.concatenate([x[:, -1:], x[:, :-1]], axis=1) * mask_m

    def snext(x):                     # x[l+1] within each batch segment
        return jnp.concatenate([x[:, 1:], x[:, :1]], axis=1) * mask_p

    def taps(x):                      # (K, L) -> (3K, L), tap order k = 0, 1, 2
        return jnp.concatenate([sprev(x), x, snext(x)], axis=0)

    # ---- conv_D: 1 complex channel in, C out (per-tap matmuls; K is only 2) --
    d_w = prm['d_w'][0]                                   # (3, 2C, 2)
    act = (prm['d_b'][0]
           + jnp.dot(d_w[0], sprev(a0), preferred_element_type=_F32)
           + jnp.dot(d_w[1], a0, preferred_element_type=_F32)
           + jnp.dot(d_w[2], snext(a0), preferred_element_type=_F32))     # (2C, L)

    mid_w = prm['mid_w'][0]                               # (4, 2C, 6C)
    mid_b = prm['mid_b'][0]                               # (4, 2C, 1)

    def mid(x, i, relu):              # one fused (2C, 6C) @ (6C, L) matmul
        o = jnp.dot(mid_w[i], taps(x), preferred_element_type=_F32) + mid_b[i]
        # TODO(synk): ComplexReLU assumed to be CReLU (ReLU on re & im parts).
        return jnp.maximum(o, 0.0) if relu else o

    act = mid(act, 0, True)           # conv1_forward + ComplexReLU
    act = mid(act, 1, False)          # conv2_forward

    # ---- AvgPool attention + complex soft threshold ---------------------------
    fr = act[:c, :]
    fi = act[c:, :]
    feat = jnp.sqrt(fr * fr + fi * fi) if use_abs else fr
    avg = jnp.dot(feat, segmean, preferred_element_type=_F32)             # (C, bsz)
    fc_w = prm['fc_w'][0]                                 # (2, C, C)
    fc_b = prm['fc_b'][0]                                 # (4, C, 1)
    h = jnp.dot(fc_w[0], avg, preferred_element_type=_F32) + fc_b[0]
    h = h * fc_b[1] + fc_b[2]                             # BatchNorm1d (eval, folded)
    h = jnp.maximum(h, 0.0)
    h = jnp.dot(fc_w[1], h, preferred_element_type=_F32) + fc_b[3]
    attn = jax.nn.sigmoid(h)                              # (C, bsz)
    corr = jnp.dot(attn * avg, segones, preferred_element_type=_F32)      # (C, L)

    nr = fr - corr                    # real-valued correction -> real part only
    mag = jnp.sqrt(nr * nr + fi * fi)
    nz = mag > 0.0
    scale = jnp.where(nz, jnp.maximum(mag - thr, 0.0) / jnp.where(nz, mag, 1.0), 0.0)
    act = jnp.concatenate([nr * scale, fi * scale], axis=0)               # (2C, L)

    act = mid(act, 2, True)           # conv1_backward + ComplexReLU
    act = mid(act, 3, False)          # conv2_backward

    # ---- conv_G: back to one complex channel ----------------------------------
    g = prm['g_b'][0] + jnp.dot(prm['g_w'][0], taps(act),
                                preferred_element_type=_F32)              # (2, L)

    # ---- conv layout (2, L) -> (bsz, 2n) packed complex ------------------------
    ridx_b = jax.lax.broadcasted_iota(jnp.int32, (bsz, 1), 0)
    out = jnp.zeros((bsz, 2 * n), _F32)
    for b in range(bsz):
        row = jnp.concatenate([g[0:1, b * n:(b + 1) * n],
                               g[1:2, b * n:(b + 1) * n]], axis=1)        # (1, 2n)
        out = out + jnp.where(ridx_b == b, row, 0.0)
    return out


# ------------------------------------------------------------------
# Fused whole-network kernel: grid = (layer_no,), state resident in VMEM scratch.
# ------------------------------------------------------------------

def _ogfreq_kernel(*refs, reslu, bsz, n, c):
    (thr_ref, y_ref, ahbh_cat_ref, apbp_stk_ref, ap_ref, bp_ref, bhp_ref,
     ahbh_stk_ref, mask_ref, segmean_ref, segones_ref) = refs[:11]
    xprm = dict(zip(_BRANCH_KEYS, refs[11:11 + _NB]))
    bprm = dict(zip(_BRANCH_KEYS, refs[11 + _NB:11 + 2 * _NB]))
    x_out, beta_out, xerr_out, yerr_out, beta_s, alpha_s = refs[11 + 2 * _NB:]

    l = pl.program_id(0)

    @pl.when(l == 0)
    def _():
        beta_s[...] = jnp.zeros_like(beta_s)
        alpha_s[...] = jnp.zeros_like(alpha_s)

    dot = functools.partial(jnp.dot, preferred_element_type=_F32)

    y_p = y_ref[...]
    beta_p = beta_s[...]
    alpha_p = alpha_s[...]
    mask = mask_ref[...]
    mask_m = mask[0:1, :]
    mask_p = mask[1:2, :]
    segmean = segmean_ref[...]
    segones = segones_ref[...]

    # ---- fused mat-vec chain ---------------------------------------------------
    ya = alpha_p + y_p                                        # y + alpha
    hcat = dot(ya, ahbh_cat_ref[...])                         # [AH ya | BH ya]
    ahy = hcat[:, :2 * n]
    aghy = hcat[:, 2 * n:]
    # AoriH_err + AgridH_err(1st) = 2*ya - (ahy @ A + aghy @ B)
    yerr = 2.0 * ya - dot(hcat, apbp_stk_ref[...])

    xf = ahy + reslu * _cmul_conj(beta_p, aghy)               # x_forward
    prod1 = reslu * _cmul(beta_p, xf)
    ya_recon = dot(jnp.concatenate([xf, prod1], axis=1), apbp_stk_ref[...])
    yerr = yerr + (ya_recon - ya)                             # + A_Agrid_err

    # ---- x conv branch (uses |.| for the attention feature) --------------------
    gx = _conv_branch(xf, xprm, True, thr_ref[l, 0], mask_m, mask_p,
                      segmean, segones, bsz=bsz, n=n, c=c)
    xn = xf + gx

    ax = dot(xn, ap_ref[...])                                 # A x
    by = ya - ax                                              # beta_y
    bh = dot(by, bhp_ref[...])                                # BH beta_y

    # ---- beta conv branch (uses .real for the attention feature) ---------------
    bf = reslu * _cmul_conj(xn, bh)
    gb = _conv_branch(bf, bprm, False, thr_ref[l, 1], mask_m, mask_p,
                      segmean, segones, bsz=bsz, n=n, c=c)
    bsum = bf + gb

    # beta[|beta| > 1/2] = sgn(beta) / 100
    br_, bi_ = _split(bsum)
    bmag = jnp.sqrt(br_ * br_ + bi_ * bi_)
    big = bmag > 0.5
    safe = jnp.where(big, bmag, 1.0)
    beta_new = _pack(jnp.where(big, br_ / safe * 0.01, br_),
                     jnp.where(big, bi_ / safe * 0.01, bi_))

    prod = reslu * _cmul(beta_new, xn)
    recon_bh = dot(bh, bp_ref[...])
    bx = dot(prod, bp_ref[...])                               # B (beta*reslu*x)
    yerr = yerr + (by - recon_bh)                             # AgridH_err (2nd)

    # x_err recon: ax @ AH + bx @ BH in a single matmul
    xerr_recon = dot(jnp.concatenate([ax, bx], axis=1), ahbh_stk_ref[...])

    # ---- state update + outputs ------------------------------------------------
    beta_s[...] = beta_new
    alpha_s[...] = ya - (ax + bx)
    x_out[...] = xn
    beta_out[...] = beta_new
    xerr_out[0] = (xn + prod - xerr_recon) * 0.5
    yerr_out[0] = yerr * 0.25


# ------------------------------------------------------------------
# pallas_call wrapper
# ------------------------------------------------------------------

def _const_spec(arr):
    nd = arr.ndim

    def idx(l):
        return (0,) * nd
    return pl.BlockSpec(tuple(arr.shape), idx)


def _layer_spec(arr):
    nd = arr.ndim

    def idx(l):
        return (l,) + (0,) * (nd - 1)
    return pl.BlockSpec((1,) + tuple(arr.shape[1:]), idx)


def _ogfreq_pallas(prep, y_p, *, layer_no, bsz, n, m, c, reslu):
    const_ops = [y_p, prep['ahbh_cat'], prep['apbp_stk'], prep['AP'],
                 prep['BP'], prep['BHP'], prep['ahbh_stk'],
                 prep['mask2'], prep['segmean'], prep['segones']]
    xops = [prep['x'][k] for k in _BRANCH_KEYS]
    bops = [prep['b'][k] for k in _BRANCH_KEYS]

    in_specs = ([pl.BlockSpec(memory_space=pltpu.MemorySpace.SMEM)]        # thr
                + [_const_spec(o) for o in const_ops]
                + [_layer_spec(o) for o in xops + bops])

    out_shape = [
        jax.ShapeDtypeStruct((bsz, 2 * n), _F32),               # x (last layer)
        jax.ShapeDtypeStruct((bsz, 2 * n), _F32),               # beta (last layer)
        jax.ShapeDtypeStruct((layer_no, bsz, 2 * n), _F32),     # per-layer x_err
        jax.ShapeDtypeStruct((layer_no, bsz, 2 * m), _F32),     # per-layer y_err
    ]
    out_specs = [
        pl.BlockSpec((bsz, 2 * n), lambda l: (0, 0)),
        pl.BlockSpec((bsz, 2 * n), lambda l: (0, 0)),
        pl.BlockSpec((1, bsz, 2 * n), lambda l: (l, 0, 0)),
        pl.BlockSpec((1, bsz, 2 * m), lambda l: (l, 0, 0)),
    ]

    kernel = functools.partial(_ogfreq_kernel, reslu=reslu, bsz=bsz, n=n, c=c)
    return pl.pallas_call(
        kernel,
        grid=(layer_no,),
        out_shape=out_shape,
        in_specs=in_specs,
        out_specs=out_specs,
        scratch_shapes=[pltpu.VMEM((bsz, 2 * n), _F32),          # beta state
                        pltpu.VMEM((bsz, 2 * m), _F32)],         # alpha state
        compiler_params=pltpu.CompilerParams(
            dimension_semantics=("arbitrary",)),
    )(prep['thr'], *const_ops, *xops, *bops)


# ------------------------------------------------------------------
# One-time parameter packing (block-complex operators, fused conv taps, masks)
# ------------------------------------------------------------------

def _pack_matvec_operator(mr, mi):
    """Complex M (P, Q) -> real (2Q, 2P): [xr|xi] @ op = [(Mx)_r | (Mx)_i]."""
    top = jnp.concatenate([mr.T, mi.T], axis=1)
    bot = jnp.concatenate([-mi.T, mr.T], axis=1)
    return jnp.concatenate([top, bot], axis=0).astype(_F32)


def _prep_branch(convs, fc):
    c_d, c1f, c2f, c1b, c2b, c_g = convs

    def tap_mats(cc):
        mats = []
        for k in range(3):
            wr = cc['wr'][k].T                               # (cout, cin)
            wi = cc['wi'][k].T
            top = jnp.concatenate([wr, -wi], axis=1)
            bot = jnp.concatenate([wi, wr], axis=1)
            mats.append(jnp.concatenate([top, bot], axis=0).astype(_F32))
        return mats

    def bias(cc):
        return jnp.concatenate([cc['br'], cc['bi']])[:, None].astype(_F32)

    d_w = jnp.stack(tap_mats(c_d), axis=0)                   # (3, 2C, 2)
    d_b = bias(c_d)                                          # (2C, 1)
    mid_w = jnp.stack([jnp.concatenate(tap_mats(cc), axis=1)
                       for cc in (c1f, c2f, c1b, c2b)], axis=0)   # (4, 2C, 6C)
    mid_b = jnp.stack([bias(cc) for cc in (c1f, c2f, c1b, c2b)], axis=0)
    g_w = jnp.concatenate(tap_mats(c_g), axis=1)             # (2, 6C)
    g_b = bias(c_g)                                          # (2, 1)

    fc_w = jnp.stack([fc['w1'], fc['w2']], axis=0).astype(_F32)   # (2, C, C)
    # TODO(synk): BatchNorm1d in eval mode with running stats (no batch stats).
    bn_scale = fc['bn_gamma'] * jax.lax.rsqrt(fc['bn_var'] + 1e-5)
    bn_shift = fc['bn_beta'] - fc['bn_mean'] * bn_scale
    fc_b = jnp.stack([fc['b1'][:, None], bn_scale[:, None],
                      bn_shift[:, None], fc['b2'][:, None]], axis=0).astype(_F32)
    return dict(d_w=d_w, d_b=d_b, mid_w=mid_w, mid_b=mid_b,
                g_w=g_w, g_b=g_b, fc_w=fc_w, fc_b=fc_b)


def prepare_params(params, bsz):
    """Build kernel-ready packed operators once (outside the hot path).
    Note: conv/FC weights are batch-independent now; only the tiny boundary masks
    and pooling matrices depend on bsz.  Assumes n_filters is a multiple of 8 so
    in-kernel sublane concatenations stay tile-aligned."""
    m, n = params['A_r'].shape
    AP = _pack_matvec_operator(params['A_r'], params['A_i'])        # (2n, 2m)
    AHP = _pack_matvec_operator(params['AH_r'], params['AH_i'])     # (2m, 2n)
    BP = _pack_matvec_operator(params['B_r'], params['B_i'])
    BHP = _pack_matvec_operator(params['BH_r'], params['BH_i'])

    L = bsz * n
    pos = jnp.arange(L, dtype=jnp.int32)
    seg = pos // n
    mask2 = jnp.stack([(pos % n != 0).astype(_F32),                 # tap x[l-1]
                       (pos % n != n - 1).astype(_F32)], axis=0)    # tap x[l+1]
    segmean = (seg[:, None] == jnp.arange(bsz)[None, :]).astype(_F32) / n   # (L, bsz)
    segones = (jnp.arange(bsz)[:, None] == seg[None, :]).astype(_F32)       # (bsz, L)

    xs, bs, thrs = [], [], []
    for lp in params['layers']:
        xs.append(_prep_branch((lp['conv_D'], lp['conv1_f'], lp['conv2_f'],
                                lp['conv1_b'], lp['conv2_b'], lp['conv_G']),
                               lp['fc']))
        bs.append(_prep_branch((lp['b_conv_D'], lp['b_conv1_f'], lp['b_conv2_f'],
                                lp['b_conv1_b'], lp['b_conv2_b'], lp['b_conv_G']),
                               lp['fc_beta']))
        thrs.append(jnp.concatenate([lp['soft_thr'], lp['beta_soft_thr']]))

    def stack_branch(branches):
        return {k: jnp.stack([br[k] for br in branches], axis=0)
                for k in _BRANCH_KEYS}

    return dict(
        AP=AP, BP=BP, BHP=BHP,
        ahbh_cat=jnp.concatenate([AHP, BHP], axis=1),       # (2m, 4n)
        apbp_stk=jnp.concatenate([AP, BP], axis=0),         # (4n, 2m)
        ahbh_stk=jnp.concatenate([AHP, BHP], axis=0),       # (4m, 2n)
        mask2=mask2, segmean=segmean, segones=segones,
        thr=jnp.stack(thrs, axis=0).astype(_F32),           # (layer_no, 2) SMEM
        x=stack_branch(xs), b=stack_branch(bs),
    )


# ------------------------------------------------------------------
# Forward pass
# ------------------------------------------------------------------

def _to_complex(p):
    h = p.shape[-1] // 2
    return (p[..., :h] + 1j * p[..., h:]).astype(jnp.complex64)


def ogfreq_forward(prep, y_in, *, layer_no):
    bsz = y_in.shape[0]
    m = y_in.shape[-1]                       # signal_dim
    n = prep['AP'].shape[0] // 2             # fr_size == inner
    c = prep['x']['fc_w'].shape[-1]          # n_filters
    reslu = 1.0 / (n - 1)

    y_p = jnp.concatenate([y_in[:, 0, :], y_in[:, 1, :]], axis=-1).astype(_F32)
    x_p, beta_p, xerr_p, yerr_p = _ogfreq_pallas(
        prep, y_p, layer_no=layer_no, bsz=bsz, n=n, m=m, c=c, reslu=reslu)

    x_err_layers = [_to_complex(xerr_p[i])[..., None] for i in range(layer_no)]
    beta_err_layers = [_to_complex(yerr_p[i])[..., None] for i in range(layer_no)]
    return _to_complex(x_p), x_err_layers, _to_complex(beta_p), beta_err_layers


# ------------------------------------------------------------------
# Parameter init (logical, torch-like shapes; packed later by prepare_params)
# ------------------------------------------------------------------

def init_params(key, signal_dim, fr_size, n_filters, layer_no):
    keys = iter(jax.random.split(key, 4096))

    def nrm(shape, scale=0.1):
        return jax.random.normal(next(keys), shape, _F32) * scale

    const = float(fr_size)
    params = {
        'A_r': jax.random.normal(next(keys), (signal_dim, fr_size), _F32) / const,
        'A_i': jax.random.normal(next(keys), (signal_dim, fr_size), _F32) / const,
        'AH_r': jax.random.normal(next(keys), (fr_size, signal_dim), _F32) / const,
        'AH_i': jax.random.normal(next(keys), (fr_size, signal_dim), _F32) / const,
        'B_r': jax.random.normal(next(keys), (signal_dim, fr_size), _F32) / const,
        'B_i': jax.random.normal(next(keys), (signal_dim, fr_size), _F32) / const,
        'BH_r': jax.random.normal(next(keys), (fr_size, signal_dim), _F32) / const,
        'BH_i': jax.random.normal(next(keys), (fr_size, signal_dim), _F32) / const,
    }

    def conv(cin, cout):
        return dict(wr=nrm((3, cin, cout)), wi=nrm((3, cin, cout)),
                    br=nrm((cout,)), bi=nrm((cout,)))

    def fc(nf):
        return dict(w1=nrm((nf, nf)), b1=nrm((nf,)),
                    w2=nrm((nf, nf)), b2=nrm((nf,)),
                    bn_gamma=jnp.ones((nf,), _F32),
                    bn_beta=jnp.zeros((nf,), _F32),
                    bn_mean=jnp.zeros((nf,), _F32),
                    bn_var=jnp.ones((nf,), _F32))

    layers = []
    for _ in range(layer_no):
        layers.append(dict(
            soft_thr=jnp.full((1,), 0.01, _F32),
            beta_soft_thr=jnp.full((1,), 0.01, _F32),
            conv_D=conv(1, n_filters), conv1_f=conv(n_filters, n_filters),
            conv2_f=conv(n_filters, n_filters), conv1_b=conv(n_filters, n_filters),
            conv2_b=conv(n_filters, n_filters), conv_G=conv(n_filters, 1),
            fc=fc(n_filters),
            b_conv_D=conv(1, n_filters), b_conv1_f=conv(n_filters, n_filters),
            b_conv2_f=conv(n_filters, n_filters), b_conv1_b=conv(n_filters, n_filters),
            b_conv2_b=conv(n_filters, n_filters), b_conv_G=conv(n_filters, 1),
            fc_beta=fc(n_filters),
        ))
    params['layers'] = layers
    return params


if __name__ == "__main__":
    bsz = 2
    signal_dim = 8     # length of the measured signal
    fr_size = 32       # frequency-grid size (== inner)
    n_filters = 8
    layer_no = 2

    key = jax.random.PRNGKey(0)
    k_in, k_par = jax.random.split(key)
    y_in = jax.random.normal(k_in, (bsz, 2, signal_dim), _F32)
    params = init_params(k_par, signal_dim, fr_size, n_filters, layer_no)
    prep = prepare_params(params, bsz)     # one-time packing (batch-independent weights)

    fwd = jax.jit(functools.partial(ogfreq_forward, layer_no=layer_no))
    out = fwd(prep, y_in)
    jax.block_until_ready(out)

    x_final, x_err_layers, beta_final, beta_err_layers = out
    assert x_final.shape == (bsz, fr_size) and x_final.dtype == jnp.complex64
    assert beta_final.shape == (bsz, fr_size)
    assert len(x_err_layers) == layer_no and x_err_layers[0].shape == (bsz, fr_size, 1)
    assert len(beta_err_layers) == layer_no and beta_err_layers[0].shape == (bsz, signal_dim, 1)
    print("KERNEL_OK")
</pallas_src>

<mosaic_0001>
module attributes {stable_mosaic.version = 11 : i64} {
  func.func @_ogfreq_kernel(%arg0: i32, %arg1: memref<2x2xf32, #tpu.memory_space<smem>>, %arg2: memref<2x16xf32, #tpu.memory_space<vmem>>, %arg3: memref<16x128xf32, #tpu.memory_space<vmem>>, %arg4: memref<128x16xf32, #tpu.memory_space<vmem>>, %arg5: memref<64x16xf32, #tpu.memory_space<vmem>>, %arg6: memref<64x16xf32, #tpu.memory_space<vmem>>, %arg7: memref<16x64xf32, #tpu.memory_space<vmem>>, %arg8: memref<32x64xf32, #tpu.memory_space<vmem>>, %arg9: memref<2x64xf32, #tpu.memory_space<vmem>>, %arg10: memref<64x2xf32, #tpu.memory_space<vmem>>, %arg11: memref<2x64xf32, #tpu.memory_space<vmem>>, %arg12: memref<1x3x16x2xf32, #tpu.memory_space<vmem>>, %arg13: memref<1x16x1xf32, #tpu.memory_space<vmem>>, %arg14: memref<1x4x16x48xf32, #tpu.memory_space<vmem>>, %arg15: memref<1x4x16x1xf32, #tpu.memory_space<vmem>>, %arg16: memref<1x2x48xf32, #tpu.memory_space<vmem>>, %arg17: memref<1x2x1xf32, #tpu.memory_space<vmem>>, %arg18: memref<1x2x8x8xf32, #tpu.memory_space<vmem>>, %arg19: memref<1x4x8x1xf32, #tpu.memory_space<vmem>>, %arg20: memref<1x3x16x2xf32, #tpu.memory_space<vmem>>, %arg21: memref<1x16x1xf32, #tpu.memory_space<vmem>>, %arg22: memref<1x4x16x48xf32, #tpu.memory_space<vmem>>, %arg23: memref<1x4x16x1xf32, #tpu.memory_space<vmem>>, %arg24: memref<1x2x48xf32, #tpu.memory_space<vmem>>, %arg25: memref<1x2x1xf32, #tpu.memory_space<vmem>>, %arg26: memref<1x2x8x8xf32, #tpu.memory_space<vmem>>, %arg27: memref<1x4x8x1xf32, #tpu.memory_space<vmem>>, %arg28: memref<2x64xf32, #tpu.memory_space<vmem>>, %arg29: memref<2x64xf32, #tpu.memory_space<vmem>>, %arg30: memref<1x2x64xf32, #tpu.memory_space<vmem>>, %arg31: memref<1x2x16xf32, #tpu.memory_space<vmem>>, %arg32: memref<2x64xf32, #tpu.memory_space<vmem>>, %arg33: memref<2x16xf32, #tpu.memory_space<vmem>>) attributes {dimension_semantics = [#tpu.dimension_semantics<arbitrary>], iteration_bounds = array<i64: 2>, scalar_prefetch = 0 : i64, scratch_operands = 2 : i64, tpu.core_type = #tpu.core_type<tc>, window_params = [{transform_indices = @transform_0, window_bounds = array<i64: 2, 2>}, {pipeline_mode = #tpu.pipeline_mode<synchronous>, transform_indices = @transform_1, window_bounds = array<i64: 2, 16>}, {pipeline_mode = #tpu.pipeline_mode<synchronous>, transform_indices = @transform_2, window_bounds = array<i64: 16, 128>}, {pipeline_mode = #tpu.pipeline_mode<synchronous>, transform_indices = @transform_3, window_bounds = array<i64: 128, 16>}, {pipeline_mode = #tpu.pipeline_mode<synchronous>, transform_indices = @transform_4, window_bounds = array<i64: 64, 16>}, {pipeline_mode = #tpu.pipeline_mode<synchronous>, transform_indices = @transform_5, window_bounds = array<i64: 64, 16>}, {pipeline_mode = #tpu.pipeline_mode<synchronous>, transform_indices = @transform_6, window_bounds = array<i64: 16, 64>}, {pipeline_mode = #tpu.pipeline_mode<synchronous>, transform_indices = @transform_7, window_bounds = array<i64: 32, 64>}, {pipeline_mode = #tpu.pipeline_mode<synchronous>, transform_indices = @transform_8, window_bounds = array<i64: 2, 64>}, {pipeline_mode = #tpu.pipeline_mode<synchronous>, transform_indices = @transform_9, window_bounds = array<i64: 64, 2>}, {pipeline_mode = #tpu.pipeline_mode<synchronous>, transform_indices = @transform_10, window_bounds = array<i64: 2, 64>}, {transform_indices = @transform_11, window_bounds = array<i64: 1, 3, 16, 2>}, {transform_indices = @transform_12, window_bounds = array<i64: 1, 16, 1>}, {transform_indices = @transform_13, window_bounds = array<i64: 1, 4, 16, 48>}, {transform_indices = @transform_14, window_bounds = array<i64: 1, 4, 16, 1>}, {transform_indices = @transform_15, window_bounds = array<i64: 1, 2, 48>}, {transform_indices = @transform_16, window_bounds = array<i64: 1, 2, 1>}, {transform_indices = @transform_17, window_bounds = array<i64: 1, 2, 8, 8>}, {transform_indices = @transform_18, window_bounds = array<i64: 1, 4, 8, 1>}, {transform_indices = @transform_19, window_bounds = array<i64: 1, 3, 16, 2>}, {transform_indices = @transform_20, window_bounds = array<i64: 1, 16, 1>}, {transform_indices = @transform_21, window_bounds = array<i64: 1, 4, 16, 48>}, {transform_indices = @transform_22, window_bounds = array<i64: 1, 4, 16, 1>}, {transform_indices = @transform_23, window_bounds = array<i64: 1, 2, 48>}, {transform_indices = @transform_24, window_bounds = array<i64: 1, 2, 1>}, {transform_indices = @transform_25, window_bounds = array<i64: 1, 2, 8, 8>}, {transform_indices = @transform_26, window_bounds = array<i64: 1, 4, 8, 1>}, {pipeline_mode = #tpu.pipeline_mode<synchronous>, transform_indices = @transform_27, window_bounds = array<i64: 2, 64>}, {pipeline_mode = #tpu.pipeline_mode<synchronous>, transform_indices = @transform_28, window_bounds = array<i64: 2, 64>}, {transform_indices = @transform_29, window_bounds = array<i64: 1, 2, 64>}, {transform_indices = @transform_30, window_bounds = array<i64: 1, 2, 16>}]} {
    %c0_i32 = arith.constant 0 : i32
    %0 = arith.cmpi eq, %arg0, %c0_i32 : i32
    %1 = arith.extui %0 : i1 to i32
    %c0_i32_0 = arith.constant 0 : i32
    %2 = arith.cmpi ne, %1, %c0_i32_0 : i32
    scf.if %2 {
      %cst_170 = arith.constant 0.000000e+00 : f32
      %592 = vector.broadcast %cst_170 : f32 to vector<2x64xf32>
      %c0_171 = arith.constant 0 : index
      %c0_172 = arith.constant 0 : index
      %593 = vector.load %arg32[%c0_171, %c0_172] : memref<2x64xf32, #tpu.memory_space<vmem>>, vector<2x64xf32>
      tpu.vector_store %arg32[%c0_171, %c0_172], %592 {strides = array<i32>} : memref<2x64xf32, #tpu.memory_space<vmem>>, vector<2x64xf32>,
      %cst_173 = arith.constant 0.000000e+00 : f32
      %594 = vector.broadcast %cst_173 : f32 to vector<2x16xf32>
      %c0_174 = arith.constant 0 : index
      %c0_175 = arith.constant 0 : index
      %595 = vector.load %arg33[%c0_174, %c0_175] : memref<2x16xf32, #tpu.memory_space<vmem>>, vector<2x16xf32>
      tpu.vector_store %arg33[%c0_174, %c0_175], %594 {strides = array<i32>} : memref<2x16xf32, #tpu.memory_space<vmem>>, vector<2x16xf32>,
    } else {
    }
    %c0 = arith.constant 0 : index
    %c0_1 = arith.constant 0 : index
    %3 = vector.load %arg2[%c0, %c0_1] : memref<2x16xf32, #tpu.memory_space<vmem>>, vector<2x16xf32>
    %c0_2 = arith.constant 0 : index
    %c0_3 = arith.constant 0 : index
    %4 = vector.load %arg32[%c0_2, %c0_3] : memref<2x64xf32, #tpu.memory_space<vmem>>, vector<2x64xf32>
    %c0_4 = arith.constant 0 : index
    %c0_5 = arith.constant 0 : index
    %5 = vector.load %arg33[%c0_4, %c0_5] : memref<2x16xf32, #tpu.memory_space<vmem>>, vector<2x16xf32>
    %c0_6 = arith.constant 0 : index
    %c0_7 = arith.constant 0 : index
    %6 = vector.load %arg9[%c0_6, %c0_7] : memref<2x64xf32, #tpu.memory_space<vmem>>, vector<2x64xf32>
    %7 = vector.extract_strided_slice %6 {offsets = [0, 0], sizes = [1, 64], strides = [1, 1]} : vector<2x64xf32> to vector<1x64xf32>
    %8 = vector.extract_strided_slice %6 {offsets = [1, 0], sizes = [1, 64], strides = [1, 1]} : vector<2x64xf32> to vector<1x64xf32>
    %c0_8 = arith.constant 0 : index
    %c0_9 = arith.constant 0 : index
    %9 = vector.load %arg10[%c0_8, %c0_9] : memref<64x2xf32, #tpu.memory_space<vmem>>, vector<64x2xf32>
    %c0_10 = arith.constant 0 : index
    %c0_11 = arith.constant 0 : index
    %10 = vector.load %arg11[%c0_10, %c0_11] : memref<2x64xf32, #tpu.memory_space<vmem>>, vector<2x64xf32>
    %11 = arith.addf %5, %3 : vector<2x16xf32>
    %c0_12 = arith.constant 0 : index
    %c0_13 = arith.constant 0 : index
    %12 = vector.load %arg3[%c0_12, %c0_13] : memref<16x128xf32, #tpu.memory_space<vmem>>, vector<16x128xf32>
    %cst = arith.constant dense<0.000000e+00> : vector<2x128xf32>
    %13 = tpu.matmul %11, %12, %cst {dimension_numbers = #tpu.dot_dimension_numbers<[1], [0], [0], [1], [0, 0, 1, 1], [], []>} : vector<2x16xf32>, vector<16x128xf32>, vector<2x128xf32> -> vector<2x128xf32>
    %14 = vector.extract_strided_slice %13 {offsets = [0, 0], sizes = [2, 64], strides = [1, 1]} : vector<2x128xf32> to vector<2x64xf32>
    %15 = vector.extract_strided_slice %13 {offsets = [0, 64], sizes = [2, 64], strides = [1, 1]} : vector<2x128xf32> to vector<2x64xf32>
    %cst_14 = arith.constant 2.000000e+00 : f32
    %16 = vector.broadcast %cst_14 : f32 to vector<2x16xf32>
    %17 = arith.mulf %16, %11 : vector<2x16xf32>
    %c0_15 = arith.constant 0 : index
    %c0_16 = arith.constant 0 : index
    %18 = vector.load %arg4[%c0_15, %c0_16] : memref<128x16xf32, #tpu.memory_space<vmem>>, vector<128x16xf32>
    %cst_17 = arith.constant dense<0.000000e+00> : vector<2x16xf32>
    %19 = tpu.matmul %13, %18, %cst_17 {dimension_numbers = #tpu.dot_dimension_numbers<[1], [0], [0], [1], [0, 0, 1, 1], [], []>} : vector<2x128xf32>, vector<128x16xf32>, vector<2x16xf32> -> vector<2x16xf32>
    %20 = arith.subf %17, %19 : vector<2x16xf32>
    %21 = vector.extract_strided_slice %4 {offsets = [0, 0], sizes = [2, 32], strides = [1, 1]} : vector<2x64xf32> to vector<2x32xf32>
    %22 = vector.extract_strided_slice %4 {offsets = [0, 32], sizes = [2, 32], strides = [1, 1]} : vector<2x64xf32> to vector<2x32xf32>
    %23 = vector.extract_strided_slice %15 {offsets = [0, 0], sizes = [2, 32], strides = [1, 1]} : vector<2x64xf32> to vector<2x32xf32>
    %24 = vector.extract_strided_slice %15 {offsets = [0, 32], sizes = [2, 32], strides = [1, 1]} : vector<2x64xf32> to vector<2x32xf32>
    %25 = arith.mulf %21, %23 : vector<2x32xf32>
    %26 = arith.mulf %22, %24 : vector<2x32xf32>
    %27 = arith.addf %25, %26 : vector<2x32xf32>
    %28 = arith.mulf %21, %24 : vector<2x32xf32>
    %29 = arith.mulf %22, %23 : vector<2x32xf32>
    %30 = arith.subf %28, %29 : vector<2x32xf32>
    %31 = tpu.concatenate %27, %30 in 1 : vector<2x32xf32>, vector<2x32xf32> -> vector<2x64xf32>
    %cst_18 = arith.constant 0.0322580636 : f32
    %32 = vector.broadcast %cst_18 : f32 to vector<2x64xf32>
    %33 = arith.mulf %32, %31 : vector<2x64xf32>
    %34 = arith.addf %14, %33 : vector<2x64xf32>
    %35 = vector.extract_strided_slice %4 {offsets = [0, 0], sizes = [2, 32], strides = [1, 1]} : vector<2x64xf32> to vector<2x32xf32>
    %36 = vector.extract_strided_slice %4 {offsets = [0, 32], sizes = [2, 32], strides = [1, 1]} : vector<2x64xf32> to vector<2x32xf32>
    %37 = vector.extract_strided_slice %34 {offsets = [0, 0], sizes = [2, 32], strides = [1, 1]} : vector<2x64xf32> to vector<2x32xf32>
    %38 = vector.extract_strided_slice %34 {offsets = [0, 32], sizes = [2, 32], strides = [1, 1]} : vector<2x64xf32> to vector<2x32xf32>
    %39 = arith.mulf %35, %37 : vector<2x32xf32>
    %40 = arith.mulf %36, %38 : vector<2x32xf32>
    %41 = arith.subf %39, %40 : vector<2x32xf32>
    %42 = arith.mulf %35, %38 : vector<2x32xf32>
    %43 = arith.mulf %36, %37 : vector<2x32xf32>
    %44 = arith.addf %42, %43 : vector<2x32xf32>
    %45 = tpu.concatenate %41, %44 in 1 : vector<2x32xf32>, vector<2x32xf32> -> vector<2x64xf32>
    %cst_19 = arith.constant 0.0322580636 : f32
    %46 = vector.broadcast %cst_19 : f32 to vector<2x64xf32>
    %47 = arith.mulf %46, %45 : vector<2x64xf32>
    %48 = tpu.concatenate %34, %47 in 1 : vector<2x64xf32>, vector<2x64xf32> -> vector<2x128xf32>
    %c0_20 = arith.constant 0 : index
    %c0_21 = arith.constant 0 : index
    %49 = vector.load %arg4[%c0_20, %c0_21] : memref<128x16xf32, #tpu.memory_space<vmem>>, vector<128x16xf32>
    %cst_22 = arith.constant dense<0.000000e+00> : vector<2x16xf32>
    %50 = tpu.matmul %48, %49, %cst_22 {dimension_numbers = #tpu.dot_dimension_numbers<[1], [0], [0], [1], [0, 0, 1, 1], [], []>} : vector<2x128xf32>, vector<128x16xf32>, vector<2x16xf32> -> vector<2x16xf32>
    %51 = arith.subf %50, %11 : vector<2x16xf32>
    %52 = arith.addf %20, %51 : vector<2x16xf32>
    %53 = arith.index_cast %arg0 : i32 to index
    %c0_23 = arith.constant 0 : index
    %54 = memref.load %arg1[%53, %c0_23] : memref<2x2xf32, #tpu.memory_space<smem>>
    %55 = vector.extract_strided_slice %34 {offsets = [0, 0], sizes = [2, 32], strides = [1, 1]} : vector<2x64xf32> to vector<2x32xf32>
    %56 = vector.extract_strided_slice %34 {offsets = [0, 32], sizes = [2, 32], strides = [1, 1]} : vector<2x64xf32> to vector<2x32xf32>
    %57 = vector.extract_strided_slice %55 {offsets = [0, 0], sizes = [1, 32], strides = [1, 1]} : vector<2x32xf32> to vector<1x32xf32>
    %58 = vector.extract_strided_slice %55 {offsets = [1, 0], sizes = [1, 32], strides = [1, 1]} : vector<2x32xf32> to vector<1x32xf32>
    %59 = tpu.concatenate %57, %58 in 1 : vector<1x32xf32>, vector<1x32xf32> -> vector<1x64xf32>
    %60 = vector.extract_strided_slice %56 {offsets = [0, 0], sizes = [1, 32], strides = [1, 1]} : vector<2x32xf32> to vector<1x32xf32>
    %61 = vector.extract_strided_slice %56 {offsets = [1, 0], sizes = [1, 32], strides = [1, 1]} : vector<2x32xf32> to vector<1x32xf32>
    %62 = tpu.concatenate %60, %61 in 1 : vector<1x32xf32>, vector<1x32xf32> -> vector<1x64xf32>
    %63 = tpu.iota {dimensions = array<i32: 0>} : vector<2x1xi32>
    %c0_i32_24 = arith.constant 0 : i32
    %64 = vector.broadcast %c0_i32_24 : i32 to vector<2x1xi32>
    %65 = arith.cmpi eq, %63, %64 : vector<2x1xi32>
    %66 = vector.shape_cast %65 : vector<2x1xi1> to vector<2x1xi1>
    %67 = vector.broadcast %66 : vector<2x1xi1> to vector<2x64xi1>
    %68 = vector.shape_cast %59 : vector<1x64xf32> to vector<1x64xf32>
    %69 = vector.broadcast %68 : vector<1x64xf32> to vector<2x64xf32>
    %70 = vector.shape_cast %62 : vector<1x64xf32> to vector<1x64xf32>
    %71 = vector.broadcast %70 : vector<1x64xf32> to vector<2x64xf32>
    %72 = arith.select %67, %69, %71 : vector<2x64xi1>, vector<2x64xf32>
    %c0_25 = arith.constant 0 : index
    %c0_26 = arith.constant 0 : index
    %c0_27 = arith.constant 0 : index
    %c0_28 = arith.constant 0 : index
    %73 = vector.load %arg12[%c0_25, %c0_26, %c0_27, %c0_28] : memref<1x3x16x2xf32, #tpu.memory_space<vmem>>, vector<1x3x16x2xf32>
    %74 = vector.shape_cast %73 : vector<1x3x16x2xf32> to vector<3x16x2xf32>
    %c0_29 = arith.constant 0 : index
    %c0_30 = arith.constant 0 : index
    %c0_31 = arith.constant 0 : index
    %75 = vector.load %arg13[%c0_29, %c0_30, %c0_31] : memref<1x16x1xf32, #tpu.memory_space<vmem>>, vector<1x16x1xf32>
    %76 = vector.shape_cast %75 : vector<1x16x1xf32> to vector<16x1xf32>
    %77 = vector.extract_strided_slice %74 {offsets = [0, 0, 0], sizes = [1, 16, 2], strides = [1, 1, 1]} : vector<3x16x2xf32> to vector<1x16x2xf32>
    %78 = vector.shape_cast %77 : vector<1x16x2xf32> to vector<16x2xf32>
    %79 = vector.extract_strided_slice %72 {offsets = [0, 63], sizes = [2, 1], strides = [1, 1]} : vector<2x64xf32> to vector<2x1xf32>
    %80 = vector.extract_strided_slice %72 {offsets = [0, 0], sizes = [2, 63], strides = [1, 1]} : vector<2x64xf32> to vector<2x63xf32>
    %81 = tpu.concatenate %79, %80 in 1 : vector<2x1xf32>, vector<2x63xf32> -> vector<2x64xf32>
    %82 = vector.broadcast %7 : vector<1x64xf32> to vector<2x64xf32>
    %83 = arith.mulf %81, %82 : vector<2x64xf32>
    %cst_32 = arith.constant dense<0.000000e+00> : vector<16x64xf32>
    %84 = tpu.matmul %78, %83, %cst_32 {dimension_numbers = #tpu.dot_dimension_numbers<[1], [0], [0], [1], [0, 0, 1, 1], [], []>} : vector<16x2xf32>, vector<2x64xf32>, vector<16x64xf32> -> vector<16x64xf32>
    %85 = vector.broadcast %76 : vector<16x1xf32> to vector<16x64xf32>
    %86 = arith.addf %85, %84 : vector<16x64xf32>
    %87 = vector.extract_strided_slice %74 {offsets = [1, 0, 0], sizes = [1, 16, 2], strides = [1, 1, 1]} : vector<3x16x2xf32> to vector<1x16x2xf32>
    %88 = vector.shape_cast %87 : vector<1x16x2xf32> to vector<16x2xf32>
    %cst_33 = arith.constant dense<0.000000e+00> : vector<16x64xf32>
    %89 = tpu.matmul %88, %72, %cst_33 {dimension_numbers = #tpu.dot_dimension_numbers<[1], [0], [0], [1], [0, 0, 1, 1], [], []>} : vector<16x2xf32>, vector<2x64xf32>, vector<16x64xf32> -> vector<16x64xf32>
    %90 = arith.addf %86, %89 : vector<16x64xf32>
    %91 = vector.extract_strided_slice %74 {offsets = [2, 0, 0], sizes = [1, 16, 2], strides = [1, 1, 1]} : vector<3x16x2xf32> to vector<1x16x2xf32>
    %92 = vector.shape_cast %91 : vector<1x16x2xf32> to vector<16x2xf32>
    %93 = vector.extract_strided_slice %72 {offsets = [0, 1], sizes = [2, 63], strides = [1, 1]} : vector<2x64xf32> to vector<2x63xf32>
    %94 = vector.extract_strided_slice %72 {offsets = [0, 0], sizes = [2, 1], strides = [1, 1]} : vector<2x64xf32> to vector<2x1xf32>
    %95 = tpu.concatenate %93, %94 in 1 : vector<2x63xf32>, vector<2x1xf32> -> vector<2x64xf32>
    %96 = vector.broadcast %8 : vector<1x64xf32> to vector<2x64xf32>
    %97 = arith.mulf %95, %96 : vector<2x64xf32>
    %cst_34 = arith.constant dense<0.000000e+00> : vector<16x64xf32>
    %98 = tpu.matmul %92, %97, %cst_34 {dimension_numbers = #tpu.dot_dimension_numbers<[1], [0], [0], [1], [0, 0, 1, 1], [], []>} : vector<16x2xf32>, vector<2x64xf32>, vector<16x64xf32> -> vector<16x64xf32>
    %99 = arith.addf %90, %98 : vector<16x64xf32>
    %c0_35 = arith.constant 0 : index
    %c0_36 = arith.constant 0 : index
    %c0_37 = arith.constant 0 : index
    %c0_38 = arith.constant 0 : index
    %100 = vector.load %arg14[%c0_35, %c0_36, %c0_37, %c0_38] : memref<1x4x16x48xf32, #tpu.memory_space<vmem>>, vector<1x4x16x48xf32>
    %101 = vector.shape_cast %100 : vector<1x4x16x48xf32> to vector<4x16x48xf32>
    %c0_39 = arith.constant 0 : index
    %c0_40 = arith.constant 0 : index
    %c0_41 = arith.constant 0 : index
    %c0_42 = arith.constant 0 : index
    %102 = vector.load %arg15[%c0_39, %c0_40, %c0_41, %c0_42] : memref<1x4x16x1xf32, #tpu.memory_space<vmem>>, vector<1x4x16x1xf32>
    %103 = vector.shape_cast %102 : vector<1x4x16x1xf32> to vector<4x16x1xf32>
    %104 = vector.extract_strided_slice %101 {offsets = [0, 0, 0], sizes = [1, 16, 48], strides = [1, 1, 1]} : vector<4x16x48xf32> to vector<1x16x48xf32>
    %105 = vector.shape_cast %104 : vector<1x16x48xf32> to vector<16x48xf32>
    %106 = vector.extract_strided_slice %99 {offsets = [0, 63], sizes = [16, 1], strides = [1, 1]} : vector<16x64xf32> to vector<16x1xf32>
    %107 = vector.extract_strided_slice %99 {offsets = [0, 0], sizes = [16, 63], strides = [1, 1]} : vector<16x64xf32> to vector<16x63xf32>
    %108 = tpu.concatenate %106, %107 in 1 : vector<16x1xf32>, vector<16x63xf32> -> vector<16x64xf32>
    %109 = vector.broadcast %7 : vector<1x64xf32> to vector<16x64xf32>
    %110 = arith.mulf %108, %109 : vector<16x64xf32>
    %111 = vector.extract_strided_slice %99 {offsets = [0, 1], sizes = [16, 63], strides = [1, 1]} : vector<16x64xf32> to vector<16x63xf32>
    %112 = vector.extract_strided_slice %99 {offsets = [0, 0], sizes = [16, 1], strides = [1, 1]} : vector<16x64xf32> to vector<16x1xf32>
    %113 = tpu.concatenate %111, %112 in 1 : vector<16x63xf32>, vector<16x1xf32> -> vector<16x64xf32>
    %114 = vector.broadcast %8 : vector<1x64xf32> to vector<16x64xf32>
    %115 = arith.mulf %113, %114 : vector<16x64xf32>
    %116 = tpu.concatenate %110, %99, %115 in 0 : vector<16x64xf32>, vector<16x64xf32>, vector<16x64xf32> -> vector<48x64xf32>
    %cst_43 = arith.constant dense<0.000000e+00> : vector<16x64xf32>
    %117 = tpu.matmul %105, %116, %cst_43 {dimension_numbers = #tpu.dot_dimension_numbers<[1], [0], [0], [1], [0, 0, 1, 1], [], []>} : vector<16x48xf32>, vector<48x64xf32>, vector<16x64xf32> -> vector<16x64xf32>
    %118 = vector.extract_strided_slice %103 {offsets = [0, 0, 0], sizes = [1, 16, 1], strides = [1, 1, 1]} : vector<4x16x1xf32> to vector<1x16x1xf32>
    %119 = vector.shape_cast %118 : vector<1x16x1xf32> to vector<16x1xf32>
    %120 = vector.broadcast %119 : vector<16x1xf32> to vector<16x64xf32>
    %121 = arith.addf %117, %120 : vector<16x64xf32>
    %cst_44 = arith.constant 0.000000e+00 : f32
    %122 = vector.broadcast %cst_44 : f32 to vector<16x64xf32>
    %123 = arith.maximumf %121, %122 : vector<16x64xf32>
    %124 = vector.extract_strided_slice %101 {offsets = [1, 0, 0], sizes = [1, 16, 48], strides = [1, 1, 1]} : vector<4x16x48xf32> to vector<1x16x48xf32>
    %125 = vector.shape_cast %124 : vector<1x16x48xf32> to vector<16x48xf32>
    %126 = vector.extract_strided_slice %123 {offsets = [0, 63], sizes = [16, 1], strides = [1, 1]} : vector<16x64xf32> to vector<16x1xf32>
    %127 = vector.extract_strided_slice %123 {offsets = [0, 0], sizes = [16, 63], strides = [1, 1]} : vector<16x64xf32> to vector<16x63xf32>
    %128 = tpu.concatenate %126, %127 in 1 : vector<16x1xf32>, vector<16x63xf32> -> vector<16x64xf32>
    %129 = vector.broadcast %7 : vector<1x64xf32> to vector<16x64xf32>
    %130 = arith.mulf %128, %129 : vector<16x64xf32>
    %131 = vector.extract_strided_slice %123 {offsets = [0, 1], sizes = [16, 63], strides = [1, 1]} : vector<16x64xf32> to vector<16x63xf32>
    %132 = vector.extract_strided_slice %123 {offsets = [0, 0], sizes = [16, 1], strides = [1, 1]} : vector<16x64xf32> to vector<16x1xf32>
    %133 = tpu.concatenate %131, %132 in 1 : vector<16x63xf32>, vector<16x1xf32> -> vector<16x64xf32>
    %134 = vector.broadcast %8 : vector<1x64xf32> to vector<16x64xf32>
    %135 = arith.mulf %133, %134 : vector<16x64xf32>
    %136 = tpu.concatenate %130, %123, %135 in 0 : vector<16x64xf32>, vector<16x64xf32>, vector<16x64xf32> -> vector<48x64xf32>
    %cst_45 = arith.constant dense<0.000000e+00> : vector<16x64xf32>
    %137 = tpu.matmul %125, %136, %cst_45 {dimension_numbers = #tpu.dot_dimension_numbers<[1], [0], [0], [1], [0, 0, 1, 1], [], []>} : vector<16x48xf32>, vector<48x64xf32>, vector<16x64xf32> -> vector<16x64xf32>
    %138 = vector.extract_strided_slice %103 {offsets = [1, 0, 0], sizes = [1, 16, 1], strides = [1, 1, 1]} : vector<4x16x1xf32> to vector<1x16x1xf32>
    %139 = vector.shape_cast %138 : vector<1x16x1xf32> to vector<16x1xf32>
    %140 = vector.broadcast %139 : vector<16x1xf32> to vector<16x64xf32>
    %141 = arith.addf %137, %140 : vector<16x64xf32>
    %142 = vector.extract_strided_slice %141 {offsets = [0, 0], sizes = [8, 64], strides = [1, 1]} : vector<16x64xf32> to vector<8x64xf32>
    %143 = vector.extract_strided_slice %141 {offsets = [8, 0], sizes = [8, 64], strides = [1, 1]} : vector<16x64xf32> to vector<8x64xf32>
    %144 = arith.mulf %142, %142 : vector<8x64xf32>
    %145 = arith.mulf %143, %143 : vector<8x64xf32>
    %146 = arith.addf %144, %145 : vector<8x64xf32>
    %147 = math.sqrt %146 : vector<8x64xf32>
    %cst_46 = arith.constant dense<0.000000e+00> : vector<8x2xf32>
    %148 = tpu.matmul %147, %9, %cst_46 {dimension_numbers = #tpu.dot_dimension_numbers<[1], [0], [0], [1], [0, 0, 1, 1], [], []>} : vector<8x64xf32>, vector<64x2xf32>, vector<8x2xf32> -> vector<8x2xf32>
    %c0_47 = arith.constant 0 : index
    %c0_48 = arith.constant 0 : index
    %c0_49 = arith.constant 0 : index
    %c0_50 = arith.constant 0 : index
    %149 = vector.load %arg18[%c0_47, %c0_48, %c0_49, %c0_50] : memref<1x2x8x8xf32, #tpu.memory_space<vmem>>, vector<1x2x8x8xf32>
    %150 = vector.shape_cast %149 : vector<1x2x8x8xf32> to vector<2x8x8xf32>
    %c0_51 = arith.constant 0 : index
    %c0_52 = arith.constant 0 : index
    %c0_53 = arith.constant 0 : index
    %c0_54 = arith.constant 0 : index
    %151 = vector.load %arg19[%c0_51, %c0_52, %c0_53, %c0_54] : memref<1x4x8x1xf32, #tpu.memory_space<vmem>>, vector<1x4x8x1xf32>
    %152 = vector.shape_cast %151 : vector<1x4x8x1xf32> to vector<4x8x1xf32>
    %153 = vector.extract_strided_slice %150 {offsets = [0, 0, 0], sizes = [1, 8, 8], strides = [1, 1, 1]} : vector<2x8x8xf32> to vector<1x8x8xf32>
    %154 = vector.shape_cast %153 : vector<1x8x8xf32> to vector<8x8xf32>
    %cst_55 = arith.constant dense<0.000000e+00> : vector<8x2xf32>
    %155 = tpu.matmul %154, %148, %cst_55 {dimension_numbers = #tpu.dot_dimension_numbers<[1], [0], [0], [1], [0, 0, 1, 1], [], []>} : vector<8x8xf32>, vector<8x2xf32>, vector<8x2xf32> -> vector<8x2xf32>
    %156 = vector.extract_strided_slice %152 {offsets = [0, 0, 0], sizes = [1, 8, 1], strides = [1, 1, 1]} : vector<4x8x1xf32> to vector<1x8x1xf32>
    %157 = vector.shape_cast %156 : vector<1x8x1xf32> to vector<8x1xf32>
    %158 = vector.broadcast %157 : vector<8x1xf32> to vector<8x2xf32>
    %159 = arith.addf %155, %158 : vector<8x2xf32>
    %160 = vector.extract_strided_slice %152 {offsets = [1, 0, 0], sizes = [1, 8, 1], strides = [1, 1, 1]} : vector<4x8x1xf32> to vector<1x8x1xf32>
    %161 = vector.shape_cast %160 : vector<1x8x1xf32> to vector<8x1xf32>
    %162 = vector.broadcast %161 : vector<8x1xf32> to vector<8x2xf32>
    %163 = arith.mulf %159, %162 : vector<8x2xf32>
    %164 = vector.extract_strided_slice %152 {offsets = [2, 0, 0], sizes = [1, 8, 1], strides = [1, 1, 1]} : vector<4x8x1xf32> to vector<1x8x1xf32>
    %165 = vector.shape_cast %164 : vector<1x8x1xf32> to vector<8x1xf32>
    %166 = vector.broadcast %165 : vector<8x1xf32> to vector<8x2xf32>
    %167 = arith.addf %163, %166 : vector<8x2xf32>
    %cst_56 = arith.constant 0.000000e+00 : f32
    %168 = vector.broadcast %cst_56 : f32 to vector<8x2xf32>
    %169 = arith.maximumf %167, %168 : vector<8x2xf32>
    %170 = vector.extract_strided_slice %150 {offsets = [1, 0, 0], sizes = [1, 8, 8], strides = [1, 1, 1]} : vector<2x8x8xf32> to vector<1x8x8xf32>
    %171 = vector.shape_cast %170 : vector<1x8x8xf32> to vector<8x8xf32>
    %cst_57 = arith.constant dense<0.000000e+00> : vector<8x2xf32>
    %172 = tpu.matmul %171, %169, %cst_57 {dimension_numbers = #tpu.dot_dimension_numbers<[1], [0], [0], [1], [0, 0, 1, 1], [], []>} : vector<8x8xf32>, vector<8x2xf32>, vector<8x2xf32> -> vector<8x2xf32>
    %173 = vector.extract_strided_slice %152 {offsets = [3, 0, 0], sizes = [1, 8, 1], strides = [1, 1, 1]} : vector<4x8x1xf32> to vector<1x8x1xf32>
    %174 = vector.shape_cast %173 : vector<1x8x1xf32> to vector<8x1xf32>
    %175 = vector.broadcast %174 : vector<8x1xf32> to vector<8x2xf32>
    %176 = arith.addf %172, %175 : vector<8x2xf32>
    %177 = arith.negf %176 : vector<8x2xf32>
    %178 = math.exp %177 : vector<8x2xf32>
    %cst_58 = arith.constant 1.000000e+00 : f32
    %179 = vector.broadcast %cst_58 : f32 to vector<8x2xf32>
    %180 = arith.addf %179, %178 : vector<8x2xf32>
    %181 = arith.divf %179, %180 : vector<8x2xf32>
    %182 = arith.mulf %181, %148 : vector<8x2xf32>
    %cst_59 = arith.constant dense<0.000000e+00> : vector<8x64xf32>
    %183 = tpu.matmul %182, %10, %cst_59 {dimension_numbers = #tpu.dot_dimension_numbers<[1], [0], [0], [1], [0, 0, 1, 1], [], []>} : vector<8x2xf32>, vector<2x64xf32>, vector<8x64xf32> -> vector<8x64xf32>
    %184 = arith.subf %142, %183 : vector<8x64xf32>
    %185 = arith.mulf %184, %184 : vector<8x64xf32>
    %186 = arith.mulf %143, %143 : vector<8x64xf32>
    %187 = arith.addf %185, %186 : vector<8x64xf32>
    %188 = math.sqrt %187 : vector<8x64xf32>
    %cst_60 = arith.constant 0.000000e+00 : f32
    %189 = vector.broadcast %cst_60 : f32 to vector<8x64xf32>
    %190 = arith.cmpf ogt, %188, %189 : vector<8x64xf32>
    %191 = vector.broadcast %54 : f32 to vector<8x64xf32>
    %192 = arith.subf %188, %191 : vector<8x64xf32>
    %cst_61 = arith.constant 0.000000e+00 : f32
    %193 = vector.broadcast %cst_61 : f32 to vector<8x64xf32>
    %194 = arith.maximumf %192, %193 : vector<8x64xf32>
    %cst_62 = arith.constant 1.000000e+00 : f32
    %195 = vector.broadcast %cst_62 : f32 to vector<8x64xf32>
    %196 = arith.select %190, %188, %195 : vector<8x64xi1>, vector<8x64xf32>
    %197 = arith.divf %194, %196 : vector<8x64xf32>
    %cst_63 = arith.constant 0.000000e+00 : f32
    %198 = vector.broadcast %cst_63 : f32 to vector<8x64xf32>
    %199 = arith.select %190, %197, %198 : vector<8x64xi1>, vector<8x64xf32>
    %200 = arith.mulf %184, %199 : vector<8x64xf32>
    %201 = arith.mulf %143, %199 : vector<8x64xf32>
    %202 = tpu.concatenate %200, %201 in 0 : vector<8x64xf32>, vector<8x64xf32> -> vector<16x64xf32>
    %203 = vector.extract_strided_slice %101 {offsets = [2, 0, 0], sizes = [1, 16, 48], strides = [1, 1, 1]} : vector<4x16x48xf32> to vector<1x16x48xf32>
    %204 = vector.shape_cast %203 : vector<1x16x48xf32> to vector<16x48xf32>
    %205 = vector.extract_strided_slice %202 {offsets = [0, 63], sizes = [16, 1], strides = [1, 1]} : vector<16x64xf32> to vector<16x1xf32>
    %206 = vector.extract_strided_slice %202 {offsets = [0, 0], sizes = [16, 63], strides = [1, 1]} : vector<16x64xf32> to vector<16x63xf32>
    %207 = tpu.concatenate %205, %206 in 1 : vector<16x1xf32>, vector<16x63xf32> -> vector<16x64xf32>
    %208 = vector.broadcast %7 : vector<1x64xf32> to vector<16x64xf32>
    %209 = arith.mulf %207, %208 : vector<16x64xf32>
    %210 = vector.extract_strided_slice %202 {offsets = [0, 1], sizes = [16, 63], strides = [1, 1]} : vector<16x64xf32> to vector<16x63xf32>
    %211 = vector.extract_strided_slice %202 {offsets = [0, 0], sizes = [16, 1], strides = [1, 1]} : vector<16x64xf32> to vector<16x1xf32>
    %212 = tpu.concatenate %210, %211 in 1 : vector<16x63xf32>, vector<16x1xf32> -> vector<16x64xf32>
    %213 = vector.broadcast %8 : vector<1x64xf32> to vector<16x64xf32>
    %214 = arith.mulf %212, %213 : vector<16x64xf32>
    %215 = tpu.concatenate %209, %202, %214 in 0 : vector<16x64xf32>, vector<16x64xf32>, vector<16x64xf32> -> vector<48x64xf32>
    %cst_64 = arith.constant dense<0.000000e+00> : vector<16x64xf32>
    %216 = tpu.matmul %204, %215, %cst_64 {dimension_numbers = #tpu.dot_dimension_numbers<[1], [0], [0], [1], [0, 0, 1, 1], [], []>} : vector<16x48xf32>, vector<48x64xf32>, vector<16x64xf32> -> vector<16x64xf32>
    %217 = vector.extract_strided_slice %103 {offsets = [2, 0, 0], sizes = [1, 16, 1], strides = [1, 1, 1]} : vector<4x16x1xf32> to vector<1x16x1xf32>
    %218 = vector.shape_cast %217 : vector<1x16x1xf32> to vector<16x1xf32>
    %219 = vector.broadcast %218 : vector<16x1xf32> to vector<16x64xf32>
    %220 = arith.addf %216, %219 : vector<16x64xf32>
    %cst_65 = arith.constant 0.000000e+00 : f32
    %221 = vector.broadcast %cst_65 : f32 to vector<16x64xf32>
    %222 = arith.maximumf %220, %221 : vector<16x64xf32>
    %223 = vector.extract_strided_slice %101 {offsets = [3, 0, 0], sizes = [1, 16, 48], strides = [1, 1, 1]} : vector<4x16x48xf32> to vector<1x16x48xf32>
    %224 = vector.shape_cast %223 : vector<1x16x48xf32> to vector<16x48xf32>
    %225 = vector.extract_strided_slice %222 {offsets = [0, 63], sizes = [16, 1], strides = [1, 1]} : vector<16x64xf32> to vector<16x1xf32>
    %226 = vector.extract_strided_slice %222 {offsets = [0, 0], sizes = [16, 63], strides = [1, 1]} : vector<16x64xf32> to vector<16x63xf32>
    %227 = tpu.concatenate %225, %226 in 1 : vector<16x1xf32>, vector<16x63xf32> -> vector<16x64xf32>
    %228 = vector.broadcast %7 : vector<1x64xf32> to vector<16x64xf32>
    %229 = arith.mulf %227, %228 : vector<16x64xf32>
    %230 = vector.extract_strided_slice %222 {offsets = [0, 1], sizes = [16, 63], strides = [1, 1]} : vector<16x64xf32> to vector<16x63xf32>
    %231 = vector.extract_strided_slice %222 {offsets = [0, 0], sizes = [16, 1], strides = [1, 1]} : vector<16x64xf32> to vector<16x1xf32>
    %232 = tpu.concatenate %230, %231 in 1 : vector<16x63xf32>, vector<16x1xf32> -> vector<16x64xf32>
    %233 = vector.broadcast %8 : vector<1x64xf32> to vector<16x64xf32>
    %234 = arith.mulf %232, %233 : vector<16x64xf32>
    %235 = tpu.concatenate %229, %222, %234 in 0 : vector<16x64xf32>, vector<16x64xf32>, vector<16x64xf32> -> vector<48x64xf32>
    %cst_66 = arith.constant dense<0.000000e+00> : vector<16x64xf32>
    %236 = tpu.matmul %224, %235, %cst_66 {dimension_numbers = #tpu.dot_dimension_numbers<[1], [0], [0], [1], [0, 0, 1, 1], [], []>} : vector<16x48xf32>, vector<48x64xf32>, vector<16x64xf32> -> vector<16x64xf32>
    %237 = vector.extract_strided_slice %103 {offsets = [3, 0, 0], sizes = [1, 16, 1], strides = [1, 1, 1]} : vector<4x16x1xf32> to vector<1x16x1xf32>
    %238 = vector.shape_cast %237 : vector<1x16x1xf32> to vector<16x1xf32>
    %239 = vector.broadcast %238 : vector<16x1xf32> to vector<16x64xf32>
    %240 = arith.addf %236, %239 : vector<16x64xf32>
    %c0_67 = arith.constant 0 : index
    %c0_68 = arith.constant 0 : index
    %c0_69 = arith.constant 0 : index
    %241 = vector.load %arg17[%c0_67, %c0_68, %c0_69] : memref<1x2x1xf32, #tpu.memory_space<vmem>>, vector<1x2x1xf32>
    %242 = vector.shape_cast %241 : vector<1x2x1xf32> to vector<2x1xf32>
    %c0_70 = arith.constant 0 : index
    %c0_71 = arith.constant 0 : index
    %c0_72 = arith.constant 0 : index
    %243 = vector.load %arg16[%c0_70, %c0_71, %c0_72] : memref<1x2x48xf32, #tpu.memory_space<vmem>>, vector<1x2x48xf32>
    %244 = vector.shape_cast %243 : vector<1x2x48xf32> to vector<2x48xf32>
    %245 = vector.extract_strided_slice %240 {offsets = [0, 63], sizes = [16, 1], strides = [1, 1]} : vector<16x64xf32> to vector<16x1xf32>
    %246 = vector.extract_strided_slice %240 {offsets = [0, 0], sizes = [16, 63], strides = [1, 1]} : vector<16x64xf32> to vector<16x63xf32>
    %247 = tpu.concatenate %245, %246 in 1 : vector<16x1xf32>, vector<16x63xf32> -> vector<16x64xf32>
    %248 = vector.broadcast %7 : vector<1x64xf32> to vector<16x64xf32>
    %249 = arith.mulf %247, %248 : vector<16x64xf32>
    %250 = vector.extract_strided_slice %240 {offsets = [0, 1], sizes = [16, 63], strides = [1, 1]} : vector<16x64xf32> to vector<16x63xf32>
    %251 = vector.extract_strided_slice %240 {offsets = [0, 0], sizes = [16, 1], strides = [1, 1]} : vector<16x64xf32> to vector<16x1xf32>
    %252 = tpu.concatenate %250, %251 in 1 : vector<16x63xf32>, vector<16x1xf32> -> vector<16x64xf32>
    %253 = vector.broadcast %8 : vector<1x64xf32> to vector<16x64xf32>
    %254 = arith.mulf %252, %253 : vector<16x64xf32>
    %255 = tpu.concatenate %249, %240, %254 in 0 : vector<16x64xf32>, vector<16x64xf32>, vector<16x64xf32> -> vector<48x64xf32>
    %cst_73 = arith.constant dense<0.000000e+00> : vector<2x64xf32>
    %256 = tpu.matmul %244, %255, %cst_73 {dimension_numbers = #tpu.dot_dimension_numbers<[1], [0], [0], [1], [0, 0, 1, 1], [], []>} : vector<2x48xf32>, vector<48x64xf32>, vector<2x64xf32> -> vector<2x64xf32>
    %257 = vector.broadcast %242 : vector<2x1xf32> to vector<2x64xf32>
    %258 = arith.addf %257, %256 : vector<2x64xf32>
    %259 = tpu.iota {dimensions = array<i32: 0>} : vector<2x1xi32>
    %cst_74 = arith.constant 0.000000e+00 : f32
    %260 = vector.broadcast %cst_74 : f32 to vector<2x64xf32>
    %261 = vector.extract_strided_slice %258 {offsets = [0, 0], sizes = [1, 32], strides = [1, 1]} : vector<2x64xf32> to vector<1x32xf32>
    %262 = vector.extract_strided_slice %258 {offsets = [1, 0], sizes = [1, 32], strides = [1, 1]} : vector<2x64xf32> to vector<1x32xf32>
    %263 = tpu.concatenate %261, %262 in 1 : vector<1x32xf32>, vector<1x32xf32> -> vector<1x64xf32>
    %c0_i32_75 = arith.constant 0 : i32
    %264 = vector.broadcast %c0_i32_75 : i32 to vector<2x1xi32>
    %265 = arith.cmpi eq, %259, %264 : vector<2x1xi32>
    %cst_76 = arith.constant 0.000000e+00 : f32
    %266 = vector.shape_cast %265 : vector<2x1xi1> to vector<2x1xi1>
    %267 = vector.broadcast %266 : vector<2x1xi1> to vector<2x64xi1>
    %268 = vector.shape_cast %263 : vector<1x64xf32> to vector<1x64xf32>
    %269 = vector.broadcast %268 : vector<1x64xf32> to vector<2x64xf32>
    %270 = vector.broadcast %cst_76 : f32 to vector<2x64xf32>
    %271 = arith.select %267, %269, %270 : vector<2x64xi1>, vector<2x64xf32>
    %272 = arith.addf %260, %271 : vector<2x64xf32>
    %273 = vector.extract_strided_slice %258 {offsets = [0, 32], sizes = [1, 32], strides = [1, 1]} : vector<2x64xf32> to vector<1x32xf32>
    %274 = vector.extract_strided_slice %258 {offsets = [1, 32], sizes = [1, 32], strides = [1, 1]} : vector<2x64xf32> to vector<1x32xf32>
    %275 = tpu.concatenate %273, %274 in 1 : vector<1x32xf32>, vector<1x32xf32> -> vector<1x64xf32>
    %c1_i32 = arith.constant 1 : i32
    %276 = vector.broadcast %c1_i32 : i32 to vector<2x1xi32>
    %277 = arith.cmpi eq, %259, %276 : vector<2x1xi32>
    %cst_77 = arith.constant 0.000000e+00 : f32
    %278 = vector.shape_cast %277 : vector<2x1xi1> to vector<2x1xi1>
    %279 = vector.broadcast %278 : vector<2x1xi1> to vector<2x64xi1>
    %280 = vector.shape_cast %275 : vector<1x64xf32> to vector<1x64xf32>
    %281 = vector.broadcast %280 : vector<1x64xf32> to vector<2x64xf32>
    %282 = vector.broadcast %cst_77 : f32 to vector<2x64xf32>
    %283 = arith.select %279, %281, %282 : vector<2x64xi1>, vector<2x64xf32>
    %284 = arith.addf %272, %283 : vector<2x64xf32>
    %285 = arith.addf %34, %284 : vector<2x64xf32>
    %c0_78 = arith.constant 0 : index
    %c0_79 = arith.constant 0 : index
    %286 = vector.load %arg5[%c0_78, %c0_79] : memref<64x16xf32, #tpu.memory_space<vmem>>, vector<64x16xf32>
    %cst_80 = arith.constant dense<0.000000e+00> : vector<2x16xf32>
    %287 = tpu.matmul %285, %286, %cst_80 {dimension_numbers = #tpu.dot_dimension_numbers<[1], [0], [0], [1], [0, 0, 1, 1], [], []>} : vector<2x64xf32>, vector<64x16xf32>, vector<2x16xf32> -> vector<2x16xf32>
    %288 = arith.subf %11, %287 : vector<2x16xf32>
    %c0_81 = arith.constant 0 : index
    %c0_82 = arith.constant 0 : index
    %289 = vector.load %arg7[%c0_81, %c0_82] : memref<16x64xf32, #tpu.memory_space<vmem>>, vector<16x64xf32>
    %cst_83 = arith.constant dense<0.000000e+00> : vector<2x64xf32>
    %290 = tpu.matmul %288, %289, %cst_83 {dimension_numbers = #tpu.dot_dimension_numbers<[1], [0], [0], [1], [0, 0, 1, 1], [], []>} : vector<2x16xf32>, vector<16x64xf32>, vector<2x64xf32> -> vector<2x64xf32>
    %291 = vector.extract_strided_slice %285 {offsets = [0, 0], sizes = [2, 32], strides = [1, 1]} : vector<2x64xf32> to vector<2x32xf32>
    %292 = vector.extract_strided_slice %285 {offsets = [0, 32], sizes = [2, 32], strides = [1, 1]} : vector<2x64xf32> to vector<2x32xf32>
    %293 = vector.extract_strided_slice %290 {offsets = [0, 0], sizes = [2, 32], strides = [1, 1]} : vector<2x64xf32> to vector<2x32xf32>
    %294 = vector.extract_strided_slice %290 {offsets = [0, 32], sizes = [2, 32], strides = [1, 1]} : vector<2x64xf32> to vector<2x32xf32>
    %295 = arith.mulf %291, %293 : vector<2x32xf32>
    %296 = arith.mulf %292, %294 : vector<2x32xf32>
    %297 = arith.addf %295, %296 : vector<2x32xf32>
    %298 = arith.mulf %291, %294 : vector<2x32xf32>
    %299 = arith.mulf %292, %293 : vector<2x32xf32>
    %300 = arith.subf %298, %299 : vector<2x32xf32>
    %301 = tpu.concatenate %297, %300 in 1 : vector<2x32xf32>, vector<2x32xf32> -> vector<2x64xf32>
    %cst_84 = arith.constant 0.0322580636 : f32
    %302 = vector.broadcast %cst_84 : f32 to vector<2x64xf32>
    %303 = arith.mulf %302, %301 : vector<2x64xf32>
    %304 = arith.index_cast %arg0 : i32 to index
    %c1 = arith.constant 1 : index
    %305 = memref.load %arg1[%304, %c1] : memref<2x2xf32, #tpu.memory_space<smem>>
    %306 = vector.extract_strided_slice %303 {offsets = [0, 0], sizes = [2, 32], strides = [1, 1]} : vector<2x64xf32> to vector<2x32xf32>
    %307 = vector.extract_strided_slice %303 {offsets = [0, 32], sizes = [2, 32], strides = [1, 1]} : vector<2x64xf32> to vector<2x32xf32>
    %308 = vector.extract_strided_slice %306 {offsets = [0, 0], sizes = [1, 32], strides = [1, 1]} : vector<2x32xf32> to vector<1x32xf32>
    %309 = vector.extract_strided_slice %306 {offsets = [1, 0], sizes = [1, 32], strides = [1, 1]} : vector<2x32xf32> to vector<1x32xf32>
    %310 = tpu.concatenate %308, %309 in 1 : vector<1x32xf32>, vector<1x32xf32> -> vector<1x64xf32>
    %311 = vector.extract_strided_slice %307 {offsets = [0, 0], sizes = [1, 32], strides = [1, 1]} : vector<2x32xf32> to vector<1x32xf32>
    %312 = vector.extract_strided_slice %307 {offsets = [1, 0], sizes = [1, 32], strides = [1, 1]} : vector<2x32xf32> to vector<1x32xf32>
    %313 = tpu.concatenate %311, %312 in 1 : vector<1x32xf32>, vector<1x32xf32> -> vector<1x64xf32>
    %314 = tpu.iota {dimensions = array<i32: 0>} : vector<2x1xi32>
    %c0_i32_85 = arith.constant 0 : i32
    %315 = vector.broadcast %c0_i32_85 : i32 to vector<2x1xi32>
    %316 = arith.cmpi eq, %314, %315 : vector<2x1xi32>
    %317 = vector.shape_cast %316 : vector<2x1xi1> to vector<2x1xi1>
    %318 = vector.broadcast %317 : vector<2x1xi1> to vector<2x64xi1>
    %319 = vector.shape_cast %310 : vector<1x64xf32> to vector<1x64xf32>
    %320 = vector.broadcast %319 : vector<1x64xf32> to vector<2x64xf32>
    %321 = vector.shape_cast %313 : vector<1x64xf32> to vector<1x64xf32>
    %322 = vector.broadcast %321 : vector<1x64xf32> to vector<2x64xf32>
    %323 = arith.select %318, %320, %322 : vector<2x64xi1>, vector<2x64xf32>
    %c0_86 = arith.constant 0 : index
    %c0_87 = arith.constant 0 : index
    %c0_88 = arith.constant 0 : index
    %c0_89 = arith.constant 0 : index
    %324 = vector.load %arg20[%c0_86, %c0_87, %c0_88, %c0_89] : memref<1x3x16x2xf32, #tpu.memory_space<vmem>>, vector<1x3x16x2xf32>
    %325 = vector.shape_cast %324 : vector<1x3x16x2xf32> to vector<3x16x2xf32>
    %c0_90 = arith.constant 0 : index
    %c0_91 = arith.constant 0 : index
    %c0_92 = arith.constant 0 : index
    %326 = vector.load %arg21[%c0_90, %c0_91, %c0_92] : memref<1x16x1xf32, #tpu.memory_space<vmem>>, vector<1x16x1xf32>
    %327 = vector.shape_cast %326 : vector<1x16x1xf32> to vector<16x1xf32>
    %328 = vector.extract_strided_slice %325 {offsets = [0, 0, 0], sizes = [1, 16, 2], strides = [1, 1, 1]} : vector<3x16x2xf32> to vector<1x16x2xf32>
    %329 = vector.shape_cast %328 : vector<1x16x2xf32> to vector<16x2xf32>
    %330 = vector.extract_strided_slice %323 {offsets = [0, 63], sizes = [2, 1], strides = [1, 1]} : vector<2x64xf32> to vector<2x1xf32>
    %331 = vector.extract_strided_slice %323 {offsets = [0, 0], sizes = [2, 63], strides = [1, 1]} : vector<2x64xf32> to vector<2x63xf32>
    %332 = tpu.concatenate %330, %331 in 1 : vector<2x1xf32>, vector<2x63xf32> -> vector<2x64xf32>
    %333 = vector.broadcast %7 : vector<1x64xf32> to vector<2x64xf32>
    %334 = arith.mulf %332, %333 : vector<2x64xf32>
    %cst_93 = arith.constant dense<0.000000e+00> : vector<16x64xf32>
    %335 = tpu.matmul %329, %334, %cst_93 {dimension_numbers = #tpu.dot_dimension_numbers<[1], [0], [0], [1], [0, 0, 1, 1], [], []>} : vector<16x2xf32>, vector<2x64xf32>, vector<16x64xf32> -> vector<16x64xf32>
    %336 = vector.broadcast %327 : vector<16x1xf32> to vector<16x64xf32>
    %337 = arith.addf %336, %335 : vector<16x64xf32>
    %338 = vector.extract_strided_slice %325 {offsets = [1, 0, 0], sizes = [1, 16, 2], strides = [1, 1, 1]} : vector<3x16x2xf32> to vector<1x16x2xf32>
    %339 = vector.shape_cast %338 : vector<1x16x2xf32> to vector<16x2xf32>
    %cst_94 = arith.constant dense<0.000000e+00> : vector<16x64xf32>
    %340 = tpu.matmul %339, %323, %cst_94 {dimension_numbers = #tpu.dot_dimension_numbers<[1], [0], [0], [1], [0, 0, 1, 1], [], []>} : vector<16x2xf32>, vector<2x64xf32>, vector<16x64xf32> -> vector<16x64xf32>
    %341 = arith.addf %337, %340 : vector<16x64xf32>
    %342 = vector.extract_strided_slice %325 {offsets = [2, 0, 0], sizes = [1, 16, 2], strides = [1, 1, 1]} : vector<3x16x2xf32> to vector<1x16x2xf32>
    %343 = vector.shape_cast %342 : vector<1x16x2xf32> to vector<16x2xf32>
    %344 = vector.extract_strided_slice %323 {offsets = [0, 1], sizes = [2, 63], strides = [1, 1]} : vector<2x64xf32> to vector<2x63xf32>
    %345 = vector.extract_strided_slice %323 {offsets = [0, 0], sizes = [2, 1], strides = [1, 1]} : vector<2x64xf32> to vector<2x1xf32>
    %346 = tpu.concatenate %344, %345 in 1 : vector<2x63xf32>, vector<2x1xf32> -> vector<2x64xf32>
    %347 = vector.broadcast %8 : vector<1x64xf32> to vector<2x64xf32>
    %348 = arith.mulf %346, %347 : vector<2x64xf32>
    %cst_95 = arith.constant dense<0.000000e+00> : vector<16x64xf32>
    %349 = tpu.matmul %343, %348, %cst_95 {dimension_numbers = #tpu.dot_dimension_numbers<[1], [0], [0], [1], [0, 0, 1, 1], [], []>} : vector<16x2xf32>, vector<2x64xf32>, vector<16x64xf32> -> vector<16x64xf32>
    %350 = arith.addf %341, %349 : vector<16x64xf32>
    %c0_96 = arith.constant 0 : index
    %c0_97 = arith.constant 0 : index
    %c0_98 = arith.constant 0 : index
    %c0_99 = arith.constant 0 : index
    %351 = vector.load %arg22[%c0_96, %c0_97, %c0_98, %c0_99] : memref<1x4x16x48xf32, #tpu.memory_space<vmem>>, vector<1x4x16x48xf32>
    %352 = vector.shape_cast %351 : vector<1x4x16x48xf32> to vector<4x16x48xf32>
    %c0_100 = arith.constant 0 : index
    %c0_101 = arith.constant 0 : index
    %c0_102 = arith.constant 0 : index
    %c0_103 = arith.constant 0 : index
    %353 = vector.load %arg23[%c0_100, %c0_101, %c0_102, %c0_103] : memref<1x4x16x1xf32, #tpu.memory_space<vmem>>, vector<1x4x16x1xf32>
    %354 = vector.shape_cast %353 : vector<1x4x16x1xf32> to vector<4x16x1xf32>
    %355 = vector.extract_strided_slice %352 {offsets = [0, 0, 0], sizes = [1, 16, 48], strides = [1, 1, 1]} : vector<4x16x48xf32> to vector<1x16x48xf32>
    %356 = vector.shape_cast %355 : vector<1x16x48xf32> to vector<16x48xf32>
    %357 = vector.extract_strided_slice %350 {offsets = [0, 63], sizes = [16, 1], strides = [1, 1]} : vector<16x64xf32> to vector<16x1xf32>
    %358 = vector.extract_strided_slice %350 {offsets = [0, 0], sizes = [16, 63], strides = [1, 1]} : vector<16x64xf32> to vector<16x63xf32>
    %359 = tpu.concatenate %357, %358 in 1 : vector<16x1xf32>, vector<16x63xf32> -> vector<16x64xf32>
    %360 = vector.broadcast %7 : vector<1x64xf32> to vector<16x64xf32>
    %361 = arith.mulf %359, %360 : vector<16x64xf32>
    %362 = vector.extract_strided_slice %350 {offsets = [0, 1], sizes = [16, 63], strides = [1, 1]} : vector<16x64xf32> to vector<16x63xf32>
    %363 = vector.extract_strided_slice %350 {offsets = [0, 0], sizes = [16, 1], strides = [1, 1]} : vector<16x64xf32> to vector<16x1xf32>
    %364 = tpu.concatenate %362, %363 in 1 : vector<16x63xf32>, vector<16x1xf32> -> vector<16x64xf32>
    %365 = vector.broadcast %8 : vector<1x64xf32> to vector<16x64xf32>
    %366 = arith.mulf %364, %365 : vector<16x64xf32>
    %367 = tpu.concatenate %361, %350, %366 in 0 : vector<16x64xf32>, vector<16x64xf32>, vector<16x64xf32> -> vector<48x64xf32>
    %cst_104 = arith.constant dense<0.000000e+00> : vector<16x64xf32>
    %368 = tpu.matmul %356, %367, %cst_104 {dimension_numbers = #tpu.dot_dimension_numbers<[1], [0], [0], [1], [0, 0, 1, 1], [], []>} : vector<16x48xf32>, vector<48x64xf32>, vector<16x64xf32> -> vector<16x64xf32>
    %369 = vector.extract_strided_slice %354 {offsets = [0, 0, 0], sizes = [1, 16, 1], strides = [1, 1, 1]} : vector<4x16x1xf32> to vector<1x16x1xf32>
    %370 = vector.shape_cast %369 : vector<1x16x1xf32> to vector<16x1xf32>
    %371 = vector.broadcast %370 : vector<16x1xf32> to vector<16x64xf32>
    %372 = arith.addf %368, %371 : vector<16x64xf32>
    %cst_105 = arith.constant 0.000000e+00 : f32
    %373 = vector.broadcast %cst_105 : f32 to vector<16x64xf32>
    %374 = arith.maximumf %372, %373 : vector<16x64xf32>
    %375 = vector.extract_strided_slice %352 {offsets = [1, 0, 0], sizes = [1, 16, 48], strides = [1, 1, 1]} : vector<4x16x48xf32> to vector<1x16x48xf32>
    %376 = vector.shape_cast %375 : vector<1x16x48xf32> to vector<16x48xf32>
    %377 = vector.extract_strided_slice %374 {offsets = [0, 63], sizes = [16, 1], strides = [1, 1]} : vector<16x64xf32> to vector<16x1xf32>
    %378 = vector.extract_strided_slice %374 {offsets = [0, 0], sizes = [16, 63], strides = [1, 1]} : vector<16x64xf32> to vector<16x63xf32>
    %379 = tpu.concatenate %377, %378 in 1 : vector<16x1xf32>, vector<16x63xf32> -> vector<16x64xf32>
    %380 = vector.broadcast %7 : vector<1x64xf32> to vector<16x64xf32>
    %381 = arith.mulf %379, %380 : vector<16x64xf32>
    %382 = vector.extract_strided_slice %374 {offsets = [0, 1], sizes = [16, 63], strides = [1, 1]} : vector<16x64xf32> to vector<16x63xf32>
    %383 = vector.extract_strided_slice %374 {offsets = [0, 0], sizes = [16, 1], strides = [1, 1]} : vector<16x64xf32> to vector<16x1xf32>
    %384 = tpu.concatenate %382, %383 in 1 : vector<16x63xf32>, vector<16x1xf32> -> vector<16x64xf32>
    %385 = vector.broadcast %8 : vector<1x64xf32> to vector<16x64xf32>
    %386 = arith.mulf %384, %385 : vector<16x64xf32>
    %387 = tpu.concatenate %381, %374, %386 in 0 : vector<16x64xf32>, vector<16x64xf32>, vector<16x64xf32> -> vector<48x64xf32>
    %cst_106 = arith.constant dense<0.000000e+00> : vector<16x64xf32>
    %388 = tpu.matmul %376, %387, %cst_106 {dimension_numbers = #tpu.dot_dimension_numbers<[1], [0], [0], [1], [0, 0, 1, 1], [], []>} : vector<16x48xf32>, vector<48x64xf32>, vector<16x64xf32> -> vector<16x64xf32>
    %389 = vector.extract_strided_slice %354 {offsets = [1, 0, 0], sizes = [1, 16, 1], strides = [1, 1, 1]} : vector<4x16x1xf32> to vector<1x16x1xf32>
    %390 = vector.shape_cast %389 : vector<1x16x1xf32> to vector<16x1xf32>
    %391 = vector.broadcast %390 : vector<16x1xf32> to vector<16x64xf32>
    %392 = arith.addf %388, %391 : vector<16x64xf32>
    %393 = vector.extract_strided_slice %392 {offsets = [0, 0], sizes = [8, 64], strides = [1, 1]} : vector<16x64xf32> to vector<8x64xf32>
    %394 = vector.extract_strided_slice %392 {offsets = [8, 0], sizes = [8, 64], strides = [1, 1]} : vector<16x64xf32> to vector<8x64xf32>
    %cst_107 = arith.constant dense<0.000000e+00> : vector<8x2xf32>
    %395 = tpu.matmul %393, %9, %cst_107 {dimension_numbers = #tpu.dot_dimension_numbers<[1], [0], [0], [1], [0, 0, 1, 1], [], []>} : vector<8x64xf32>, vector<64x2xf32>, vector<8x2xf32> -> vector<8x2xf32>
    %c0_108 = arith.constant 0 : index
    %c0_109 = arith.constant 0 : index
    %c0_110 = arith.constant 0 : index
    %c0_111 = arith.constant 0 : index
    %396 = vector.load %arg26[%c0_108, %c0_109, %c0_110, %c0_111] : memref<1x2x8x8xf32, #tpu.memory_space<vmem>>, vector<1x2x8x8xf32>
    %397 = vector.shape_cast %396 : vector<1x2x8x8xf32> to vector<2x8x8xf32>
    %c0_112 = arith.constant 0 : index
    %c0_113 = arith.constant 0 : index
    %c0_114 = arith.constant 0 : index
    %c0_115 = arith.constant 0 : index
    %398 = vector.load %arg27[%c0_112, %c0_113, %c0_114, %c0_115] : memref<1x4x8x1xf32, #tpu.memory_space<vmem>>, vector<1x4x8x1xf32>
    %399 = vector.shape_cast %398 : vector<1x4x8x1xf32> to vector<4x8x1xf32>
    %400 = vector.extract_strided_slice %397 {offsets = [0, 0, 0], sizes = [1, 8, 8], strides = [1, 1, 1]} : vector<2x8x8xf32> to vector<1x8x8xf32>
    %401 = vector.shape_cast %400 : vector<1x8x8xf32> to vector<8x8xf32>
    %cst_116 = arith.constant dense<0.000000e+00> : vector<8x2xf32>
    %402 = tpu.matmul %401, %395, %cst_116 {dimension_numbers = #tpu.dot_dimension_numbers<[1], [0], [0], [1], [0, 0, 1, 1], [], []>} : vector<8x8xf32>, vector<8x2xf32>, vector<8x2xf32> -> vector<8x2xf32>
    %403 = vector.extract_strided_slice %399 {offsets = [0, 0, 0], sizes = [1, 8, 1], strides = [1, 1, 1]} : vector<4x8x1xf32> to vector<1x8x1xf32>
    %404 = vector.shape_cast %403 : vector<1x8x1xf32> to vector<8x1xf32>
    %405 = vector.broadcast %404 : vector<8x1xf32> to vector<8x2xf32>
    %406 = arith.addf %402, %405 : vector<8x2xf32>
    %407 = vector.extract_strided_slice %399 {offsets = [1, 0, 0], sizes = [1, 8, 1], strides = [1, 1, 1]} : vector<4x8x1xf32> to vector<1x8x1xf32>
    %408 = vector.shape_cast %407 : vector<1x8x1xf32> to vector<8x1xf32>
    %409 = vector.broadcast %408 : vector<8x1xf32> to vector<8x2xf32>
    %410 = arith.mulf %406, %409 : vector<8x2xf32>
    %411 = vector.extract_strided_slice %399 {offsets = [2, 0, 0], sizes = [1, 8, 1], strides = [1, 1, 1]} : vector<4x8x1xf32> to vector<1x8x1xf32>
    %412 = vector.shape_cast %411 : vector<1x8x1xf32> to vector<8x1xf32>
    %413 = vector.broadcast %412 : vector<8x1xf32> to vector<8x2xf32>
    %414 = arith.addf %410, %413 : vector<8x2xf32>
    %cst_117 = arith.constant 0.000000e+00 : f32
    %415 = vector.broadcast %cst_117 : f32 to vector<8x2xf32>
    %416 = arith.maximumf %414, %415 : vector<8x2xf32>
    %417 = vector.extract_strided_slice %397 {offsets = [1, 0, 0], sizes = [1, 8, 8], strides = [1, 1, 1]} : vector<2x8x8xf32> to vector<1x8x8xf32>
    %418 = vector.shape_cast %417 : vector<1x8x8xf32> to vector<8x8xf32>
    %cst_118 = arith.constant dense<0.000000e+00> : vector<8x2xf32>
    %419 = tpu.matmul %418, %416, %cst_118 {dimension_numbers = #tpu.dot_dimension_numbers<[1], [0], [0], [1], [0, 0, 1, 1], [], []>} : vector<8x8xf32>, vector<8x2xf32>, vector<8x2xf32> -> vector<8x2xf32>
    %420 = vector.extract_strided_slice %399 {offsets = [3, 0, 0], sizes = [1, 8, 1], strides = [1, 1, 1]} : vector<4x8x1xf32> to vector<1x8x1xf32>
    %421 = vector.shape_cast %420 : vector<1x8x1xf32> to vector<8x1xf32>
    %422 = vector.broadcast %421 : vector<8x1xf32> to vector<8x2xf32>
    %423 = arith.addf %419, %422 : vector<8x2xf32>
    %424 = arith.negf %423 : vector<8x2xf32>
    %425 = math.exp %424 : vector<8x2xf32>
    %cst_119 = arith.constant 1.000000e+00 : f32
    %426 = vector.broadcast %cst_119 : f32 to vector<8x2xf32>
    %427 = arith.addf %426, %425 : vector<8x2xf32>
    %428 = arith.divf %426, %427 : vector<8x2xf32>
    %429 = arith.mulf %428, %395 : vector<8x2xf32>
    %cst_120 = arith.constant dense<0.000000e+00> : vector<8x64xf32>
    %430 = tpu.matmul %429, %10, %cst_120 {dimension_numbers = #tpu.dot_dimension_numbers<[1], [0], [0], [1], [0, 0, 1, 1], [], []>} : vector<8x2xf32>, vector<2x64xf32>, vector<8x64xf32> -> vector<8x64xf32>
    %431 = arith.subf %393, %430 : vector<8x64xf32>
    %432 = arith.mulf %431, %431 : vector<8x64xf32>
    %433 = arith.mulf %394, %394 : vector<8x64xf32>
    %434 = arith.addf %432, %433 : vector<8x64xf32>
    %435 = math.sqrt %434 : vector<8x64xf32>
    %cst_121 = arith.constant 0.000000e+00 : f32
    %436 = vector.broadcast %cst_121 : f32 to vector<8x64xf32>
    %437 = arith.cmpf ogt, %435, %436 : vector<8x64xf32>
    %438 = vector.broadcast %305 : f32 to vector<8x64xf32>
    %439 = arith.subf %435, %438 : vector<8x64xf32>
    %cst_122 = arith.constant 0.000000e+00 : f32
    %440 = vector.broadcast %cst_122 : f32 to vector<8x64xf32>
    %441 = arith.maximumf %439, %440 : vector<8x64xf32>
    %cst_123 = arith.constant 1.000000e+00 : f32
    %442 = vector.broadcast %cst_123 : f32 to vector<8x64xf32>
    %443 = arith.select %437, %435, %442 : vector<8x64xi1>, vector<8x64xf32>
    %444 = arith.divf %441, %443 : vector<8x64xf32>
    %cst_124 = arith.constant 0.000000e+00 : f32
    %445 = vector.broadcast %cst_124 : f32 to vector<8x64xf32>
    %446 = arith.select %437, %444, %445 : vector<8x64xi1>, vector<8x64xf32>
    %447 = arith.mulf %431, %446 : vector<8x64xf32>
    %448 = arith.mulf %394, %446 : vector<8x64xf32>
    %449 = tpu.concatenate %447, %448 in 0 : vector<8x64xf32>, vector<8x64xf32> -> vector<16x64xf32>
    %450 = vector.extract_strided_slice %352 {offsets = [2, 0, 0], sizes = [1, 16, 48], strides = [1, 1, 1]} : vector<4x16x48xf32> to vector<1x16x48xf32>
    %451 = vector.shape_cast %450 : vector<1x16x48xf32> to vector<16x48xf32>
    %452 = vector.extract_strided_slice %449 {offsets = [0, 63], sizes = [16, 1], strides = [1, 1]} : vector<16x64xf32> to vector<16x1xf32>
    %453 = vector.extract_strided_slice %449 {offsets = [0, 0], sizes = [16, 63], strides = [1, 1]} : vector<16x64xf32> to vector<16x63xf32>
    %454 = tpu.concatenate %452, %453 in 1 : vector<16x1xf32>, vector<16x63xf32> -> vector<16x64xf32>
    %455 = vector.broadcast %7 : vector<1x64xf32> to vector<16x64xf32>
    %456 = arith.mulf %454, %455 : vector<16x64xf32>
    %457 = vector.extract_strided_slice %449 {offsets = [0, 1], sizes = [16, 63], strides = [1, 1]} : vector<16x64xf32> to vector<16x63xf32>
    %458 = vector.extract_strided_slice %449 {offsets = [0, 0], sizes = [16, 1], strides = [1, 1]} : vector<16x64xf32> to vector<16x1xf32>
    %459 = tpu.concatenate %457, %458 in 1 : vector<16x63xf32>, vector<16x1xf32> -> vector<16x64xf32>
    %460 = vector.broadcast %8 : vector<1x64xf32> to vector<16x64xf32>
    %461 = arith.mulf %459, %460 : vector<16x64xf32>
    %462 = tpu.concatenate %456, %449, %461 in 0 : vector<16x64xf32>, vector<16x64xf32>, vector<16x64xf32> -> vector<48x64xf32>
    %cst_125 = arith.constant dense<0.000000e+00> : vector<16x64xf32>
    %463 = tpu.matmul %451, %462, %cst_125 {dimension_numbers = #tpu.dot_dimension_numbers<[1], [0], [0], [1], [0, 0, 1, 1], [], []>} : vector<16x48xf32>, vector<48x64xf32>, vector<16x64xf32> -> vector<16x64xf32>
    %464 = vector.extract_strided_slice %354 {offsets = [2, 0, 0], sizes = [1, 16, 1], strides = [1, 1, 1]} : vector<4x16x1xf32> to vector<1x16x1xf32>
    %465 = vector.shape_cast %464 : vector<1x16x1xf32> to vector<16x1xf32>
    %466 = vector.broadcast %465 : vector<16x1xf32> to vector<16x64xf32>
    %467 = arith.addf %463, %466 : vector<16x64xf32>
    %cst_126 = arith.constant 0.000000e+00 : f32
    %468 = vector.broadcast %cst_126 : f32 to vector<16x64xf32>
    %469 = arith.maximumf %467, %468 : vector<16x64xf32>
    %470 = vector.extract_strided_slice %352 {offsets = [3, 0, 0], sizes = [1, 16, 48], strides = [1, 1, 1]} : vector<4x16x48xf32> to vector<1x16x48xf32>
    %471 = vector.shape_cast %470 : vector<1x16x48xf32> to vector<16x48xf32>
    %472 = vector.extract_strided_slice %469 {offsets = [0, 63], sizes = [16, 1], strides = [1, 1]} : vector<16x64xf32> to vector<16x1xf32>
    %473 = vector.extract_strided_slice %469 {offsets = [0, 0], sizes = [16, 63], strides = [1, 1]} : vector<16x64xf32> to vector<16x63xf32>
    %474 = tpu.concatenate %472, %473 in 1 : vector<16x1xf32>, vector<16x63xf32> -> vector<16x64xf32>
    %475 = vector.broadcast %7 : vector<1x64xf32> to vector<16x64xf32>
    %476 = arith.mulf %474, %475 : vector<16x64xf32>
    %477 = vector.extract_strided_slice %469 {offsets = [0, 1], sizes = [16, 63], strides = [1, 1]} : vector<16x64xf32> to vector<16x63xf32>
    %478 = vector.extract_strided_slice %469 {offsets = [0, 0], sizes = [16, 1], strides = [1, 1]} : vector<16x64xf32> to vector<16x1xf32>
    %479 = tpu.concatenate %477, %478 in 1 : vector<16x63xf32>, vector<16x1xf32> -> vector<16x64xf32>
    %480 = vector.broadcast %8 : vector<1x64xf32> to vector<16x64xf32>
    %481 = arith.mulf %479, %480 : vector<16x64xf32>
    %482 = tpu.concatenate %476, %469, %481 in 0 : vector<16x64xf32>, vector<16x64xf32>, vector<16x64xf32> -> vector<48x64xf32>
    %cst_127 = arith.constant dense<0.000000e+00> : vector<16x64xf32>
    %483 = tpu.matmul %471, %482, %cst_127 {dimension_numbers = #tpu.dot_dimension_numbers<[1], [0], [0], [1], [0, 0, 1, 1], [], []>} : vector<16x48xf32>, vector<48x64xf32>, vector<16x64xf32> -> vector<16x64xf32>
    %484 = vector.extract_strided_slice %354 {offsets = [3, 0, 0], sizes = [1, 16, 1], strides = [1, 1, 1]} : vector<4x16x1xf32> to vector<1x16x1xf32>
    %485 = vector.shape_cast %484 : vector<1x16x1xf32> to vector<16x1xf32>
    %486 = vector.broadcast %485 : vector<16x1xf32> to vector<16x64xf32>
    %487 = arith.addf %483, %486 : vector<16x64xf32>
    %c0_128 = arith.constant 0 : index
    %c0_129 = arith.constant 0 : index
    %c0_130 = arith.constant 0 : index
    %488 = vector.load %arg25[%c0_128, %c0_129, %c0_130] : memref<1x2x1xf32, #tpu.memory_space<vmem>>, vector<1x2x1xf32>
    %489 = vector.shape_cast %488 : vector<1x2x1xf32> to vector<2x1xf32>
    %c0_131 = arith.constant 0 : index
    %c0_132 = arith.constant 0 : index
    %c0_133 = arith.constant 0 : index
    %490 = vector.load %arg24[%c0_131, %c0_132, %c0_133] : memref<1x2x48xf32, #tpu.memory_space<vmem>>, vector<1x2x48xf32>
    %491 = vector.shape_cast %490 : vector<1x2x48xf32> to vector<2x48xf32>
    %492 = vector.extract_strided_slice %487 {offsets = [0, 63], sizes = [16, 1], strides = [1, 1]} : vector<16x64xf32> to vector<16x1xf32>
    %493 = vector.extract_strided_slice %487 {offsets = [0, 0], sizes = [16, 63], strides = [1, 1]} : vector<16x64xf32> to vector<16x63xf32>
    %494 = tpu.concatenate %492, %493 in 1 : vector<16x1xf32>, vector<16x63xf32> -> vector<16x64xf32>
    %495 = vector.broadcast %7 : vector<1x64xf32> to vector<16x64xf32>
    %496 = arith.mulf %494, %495 : vector<16x64xf32>
    %497 = vector.extract_strided_slice %487 {offsets = [0, 1], sizes = [16, 63], strides = [1, 1]} : vector<16x64xf32> to vector<16x63xf32>
    %498 = vector.extract_strided_slice %487 {offsets = [0, 0], sizes = [16, 1], strides = [1, 1]} : vector<16x64xf32> to vector<16x1xf32>
    %499 = tpu.concatenate %497, %498 in 1 : vector<16x63xf32>, vector<16x1xf32> -> vector<16x64xf32>
    %500 = vector.broadcast %8 : vector<1x64xf32> to vector<16x64xf32>
    %501 = arith.mulf %499, %500 : vector<16x64xf32>
    %502 = tpu.concatenate %496, %487, %501 in 0 : vector<16x64xf32>, vector<16x64xf32>, vector<16x64xf32> -> vector<48x64xf32>
    %cst_134 = arith.constant dense<0.000000e+00> : vector<2x64xf32>
    %503 = tpu.matmul %491, %502, %cst_134 {dimension_numbers = #tpu.dot_dimension_numbers<[1], [0], [0], [1], [0, 0, 1, 1], [], []>} : vector<2x48xf32>, vector<48x64xf32>, vector<2x64xf32> -> vector<2x64xf32>
    %504 = vector.broadcast %489 : vector<2x1xf32> to vector<2x64xf32>
    %505 = arith.addf %504, %503 : vector<2x64xf32>
    %506 = tpu.iota {dimensions = array<i32: 0>} : vector<2x1xi32>
    %cst_135 = arith.constant 0.000000e+00 : f32
    %507 = vector.broadcast %cst_135 : f32 to vector<2x64xf32>
    %508 = vector.extract_strided_slice %505 {offsets = [0, 0], sizes = [1, 32], strides = [1, 1]} : vector<2x64xf32> to vector<1x32xf32>
    %509 = vector.extract_strided_slice %505 {offsets = [1, 0], sizes = [1, 32], strides = [1, 1]} : vector<2x64xf32> to vector<1x32xf32>
    %510 = tpu.concatenate %508, %509 in 1 : vector<1x32xf32>, vector<1x32xf32> -> vector<1x64xf32>
    %c0_i32_136 = arith.constant 0 : i32
    %511 = vector.broadcast %c0_i32_136 : i32 to vector<2x1xi32>
    %512 = arith.cmpi eq, %506, %511 : vector<2x1xi32>
    %cst_137 = arith.constant 0.000000e+00 : f32
    %513 = vector.shape_cast %512 : vector<2x1xi1> to vector<2x1xi1>
    %514 = vector.broadcast %513 : vector<2x1xi1> to vector<2x64xi1>
    %515 = vector.shape_cast %510 : vector<1x64xf32> to vector<1x64xf32>
    %516 = vector.broadcast %515 : vector<1x64xf32> to vector<2x64xf32>
    %517 = vector.broadcast %cst_137 : f32 to vector<2x64xf32>
    %518 = arith.select %514, %516, %517 : vector<2x64xi1>, vector<2x64xf32>
    %519 = arith.addf %507, %518 : vector<2x64xf32>
    %520 = vector.extract_strided_slice %505 {offsets = [0, 32], sizes = [1, 32], strides = [1, 1]} : vector<2x64xf32> to vector<1x32xf32>
    %521 = vector.extract_strided_slice %505 {offsets = [1, 32], sizes = [1, 32], strides = [1, 1]} : vector<2x64xf32> to vector<1x32xf32>
    %522 = tpu.concatenate %520, %521 in 1 : vector<1x32xf32>, vector<1x32xf32> -> vector<1x64xf32>
    %c1_i32_138 = arith.constant 1 : i32
    %523 = vector.broadcast %c1_i32_138 : i32 to vector<2x1xi32>
    %524 = arith.cmpi eq, %506, %523 : vector<2x1xi32>
    %cst_139 = arith.constant 0.000000e+00 : f32
    %525 = vector.shape_cast %524 : vector<2x1xi1> to vector<2x1xi1>
    %526 = vector.broadcast %525 : vector<2x1xi1> to vector<2x64xi1>
    %527 = vector.shape_cast %522 : vector<1x64xf32> to vector<1x64xf32>
    %528 = vector.broadcast %527 : vector<1x64xf32> to vector<2x64xf32>
    %529 = vector.broadcast %cst_139 : f32 to vector<2x64xf32>
    %530 = arith.select %526, %528, %529 : vector<2x64xi1>, vector<2x64xf32>
    %531 = arith.addf %519, %530 : vector<2x64xf32>
    %532 = arith.addf %303, %531 : vector<2x64xf32>
    %533 = vector.extract_strided_slice %532 {offsets = [0, 0], sizes = [2, 32], strides = [1, 1]} : vector<2x64xf32> to vector<2x32xf32>
    %534 = vector.extract_strided_slice %532 {offsets = [0, 32], sizes = [2, 32], strides = [1, 1]} : vector<2x64xf32> to vector<2x32xf32>
    %535 = arith.mulf %533, %533 : vector<2x32xf32>
    %536 = arith.mulf %534, %534 : vector<2x32xf32>
    %537 = arith.addf %535, %536 : vector<2x32xf32>
    %538 = math.sqrt %537 : vector<2x32xf32>
    %cst_140 = arith.constant 5.000000e-01 : f32
    %539 = vector.broadcast %cst_140 : f32 to vector<2x32xf32>
    %540 = arith.cmpf ogt, %538, %539 : vector<2x32xf32>
    %cst_141 = arith.constant 1.000000e+00 : f32
    %541 = vector.broadcast %cst_141 : f32 to vector<2x32xf32>
    %542 = arith.select %540, %538, %541 : vector<2x32xi1>, vector<2x32xf32>
    %543 = arith.divf %533, %542 : vector<2x32xf32>
    %cst_142 = arith.constant 0.00999999977 : f32
    %544 = vector.broadcast %cst_142 : f32 to vector<2x32xf32>
    %545 = arith.mulf %543, %544 : vector<2x32xf32>
    %546 = arith.select %540, %545, %533 : vector<2x32xi1>, vector<2x32xf32>
    %547 = arith.divf %534, %542 : vector<2x32xf32>
    %cst_143 = arith.constant 0.00999999977 : f32
    %548 = vector.broadcast %cst_143 : f32 to vector<2x32xf32>
    %549 = arith.mulf %547, %548 : vector<2x32xf32>
    %550 = arith.select %540, %549, %534 : vector<2x32xi1>, vector<2x32xf32>
    %551 = tpu.concatenate %546, %550 in 1 : vector<2x32xf32>, vector<2x32xf32> -> vector<2x64xf32>
    %552 = vector.extract_strided_slice %551 {offsets = [0, 0], sizes = [2, 32], strides = [1, 1]} : vector<2x64xf32> to vector<2x32xf32>
    %553 = vector.extract_strided_slice %551 {offsets = [0, 32], sizes = [2, 32], strides = [1, 1]} : vector<2x64xf32> to vector<2x32xf32>
    %554 = vector.extract_strided_slice %285 {offsets = [0, 0], sizes = [2, 32], strides = [1, 1]} : vector<2x64xf32> to vector<2x32xf32>
    %555 = vector.extract_strided_slice %285 {offsets = [0, 32], sizes = [2, 32], strides = [1, 1]} : vector<2x64xf32> to vector<2x32xf32>
    %556 = arith.mulf %552, %554 : vector<2x32xf32>
    %557 = arith.mulf %553, %555 : vector<2x32xf32>
    %558 = arith.subf %556, %557 : vector<2x32xf32>
    %559 = arith.mulf %552, %555 : vector<2x32xf32>
    %560 = arith.mulf %553, %554 : vector<2x32xf32>
    %561 = arith.addf %559, %560 : vector<2x32xf32>
    %562 = tpu.concatenate %558, %561 in 1 : vector<2x32xf32>, vector<2x32xf32> -> vector<2x64xf32>
    %cst_144 = arith.constant 0.0322580636 : f32
    %563 = vector.broadcast %cst_144 : f32 to vector<2x64xf32>
    %564 = arith.mulf %563, %562 : vector<2x64xf32>
    %c0_145 = arith.constant 0 : index
    %c0_146 = arith.constant 0 : index
    %565 = vector.load %arg6[%c0_145, %c0_146] : memref<64x16xf32, #tpu.memory_space<vmem>>, vector<64x16xf32>
    %cst_147 = arith.constant dense<0.000000e+00> : vector<2x16xf32>
    %566 = tpu.matmul %290, %565, %cst_147 {dimension_numbers = #tpu.dot_dimension_numbers<[1], [0], [0], [1], [0, 0, 1, 1], [], []>} : vector<2x64xf32>, vector<64x16xf32>, vector<2x16xf32> -> vector<2x16xf32>
    %c0_148 = arith.constant 0 : index
    %c0_149 = arith.constant 0 : index
    %567 = vector.load %arg6[%c0_148, %c0_149] : memref<64x16xf32, #tpu.memory_space<vmem>>, vector<64x16xf32>
    %cst_150 = arith.constant dense<0.000000e+00> : vector<2x16xf32>
    %568 = tpu.matmul %564, %567, %cst_150 {dimension_numbers = #tpu.dot_dimension_numbers<[1], [0], [0], [1], [0, 0, 1, 1], [], []>} : vector<2x64xf32>, vector<64x16xf32>, vector<2x16xf32> -> vector<2x16xf32>
    %569 = arith.subf %288, %566 : vector<2x16xf32>
    %570 = arith.addf %52, %569 : vector<2x16xf32>
    %571 = tpu.concatenate %287, %568 in 1 : vector<2x16xf32>, vector<2x16xf32> -> vector<2x32xf32>
    %c0_151 = arith.constant 0 : index
    %c0_152 = arith.constant 0 : index
    %572 = vector.load %arg8[%c0_151, %c0_152] : memref<32x64xf32, #tpu.memory_space<vmem>>, vector<32x64xf32>
    %cst_153 = arith.constant dense<0.000000e+00> : vector<2x64xf32>
    %573 = tpu.matmul %571, %572, %cst_153 {dimension_numbers = #tpu.dot_dimension_numbers<[1], [0], [0], [1], [0, 0, 1, 1], [], []>} : vector<2x32xf32>, vector<32x64xf32>, vector<2x64xf32> -> vector<2x64xf32>
    %c0_154 = arith.constant 0 : index
    %c0_155 = arith.constant 0 : index
    %574 = vector.load %arg32[%c0_154, %c0_155] : memref<2x64xf32, #tpu.memory_space<vmem>>, vector<2x64xf32>
    tpu.vector_store %arg32[%c0_154, %c0_155], %551 {strides = array<i32>} : memref<2x64xf32, #tpu.memory_space<vmem>>, vector<2x64xf32>,
    %575 = arith.addf %287, %568 : vector<2x16xf32>
    %576 = arith.subf %11, %575 : vector<2x16xf32>
    %c0_156 = arith.constant 0 : index
    %c0_157 = arith.constant 0 : index
    %577 = vector.load %arg33[%c0_156, %c0_157] : memref<2x16xf32, #tpu.memory_space<vmem>>, vector<2x16xf32>
    tpu.vector_store %arg33[%c0_156, %c0_157], %576 {strides = array<i32>} : memref<2x16xf32, #tpu.memory_space<vmem>>, vector<2x16xf32>,
    %c0_158 = arith.constant 0 : index
    %c0_159 = arith.constant 0 : index
    %578 = vector.load %arg28[%c0_158, %c0_159] : memref<2x64xf32, #tpu.memory_space<vmem>>, vector<2x64xf32>
    tpu.vector_store %arg28[%c0_158, %c0_159], %285 {strides = array<i32>} : memref<2x64xf32, #tpu.memory_space<vmem>>, vector<2x64xf32>,
    %c0_160 = arith.constant 0 : index
    %c0_161 = arith.constant 0 : index
    %579 = vector.load %arg29[%c0_160, %c0_161] : memref<2x64xf32, #tpu.memory_space<vmem>>, vector<2x64xf32>
    tpu.vector_store %arg29[%c0_160, %c0_161], %551 {strides = array<i32>} : memref<2x64xf32, #tpu.memory_space<vmem>>, vector<2x64xf32>,
    %580 = arith.addf %285, %564 : vector<2x64xf32>
    %581 = arith.subf %580, %573 : vector<2x64xf32>
    %cst_162 = arith.constant 5.000000e-01 : f32
    %582 = vector.broadcast %cst_162 : f32 to vector<2x64xf32>
    %583 = arith.mulf %581, %582 : vector<2x64xf32>
    %c0_163 = arith.constant 0 : index
    %c0_164 = arith.constant 0 : index
    %c0_165 = arith.constant 0 : index
    %584 = vector.load %arg30[%c0_163, %c0_164, %c0_165] : memref<1x2x64xf32, #tpu.memory_space<vmem>>, vector<1x2x64xf32>
    %585 = vector.shape_cast %584 : vector<1x2x64xf32> to vector<2x64xf32>
    %586 = vector.shape_cast %583 : vector<2x64xf32> to vector<1x2x64xf32>
    tpu.vector_store %arg30[%c0_163, %c0_164, %c0_165], %586 {strides = array<i32>} : memref<1x2x64xf32, #tpu.memory_space<vmem>>, vector<1x2x64xf32>,
    %cst_166 = arith.constant 2.500000e-01 : f32
    %587 = vector.broadcast %cst_166 : f32 to vector<2x16xf32>
    %588 = arith.mulf %570, %587 : vector<2x16xf32>
    %c0_167 = arith.constant 0 : index
    %c0_168 = arith.constant 0 : index
    %c0_169 = arith.constant 0 : index
    %589 = vector.load %arg31[%c0_167, %c0_168, %c0_169] : memref<1x2x16xf32, #tpu.memory_space<vmem>>, vector<1x2x16xf32>
    %590 = vector.shape_cast %589 : vector<1x2x16xf32> to vector<2x16xf32>
    %591 = vector.shape_cast %588 : vector<2x16xf32> to vector<1x2x16xf32>
    tpu.vector_store %arg31[%c0_167, %c0_168, %c0_169], %591 {strides = array<i32>} : memref<1x2x16xf32, #tpu.memory_space<vmem>>, vector<1x2x16xf32>,
    return
  }
  func.func @transform_0(%arg0: i32) -> (i32, i32) {
    %c0_i32 = arith.constant 0 : i32
    %c0_i32_0 = arith.constant 0 : i32
    %c0_i32_1 = arith.constant 0 : i32
    return %c0_i32, %c0_i32_0 : i32, i32
  }
  func.func @transform_1(%arg0: i32) -> (i32, i32) {
    %c0_i32 = arith.constant 0 : i32
    %c0_i32_0 = arith.constant 0 : i32
    %c0_i32_1 = arith.constant 0 : i32
    return %c0_i32, %c0_i32_0 : i32, i32
  }
  func.func @transform_2(%arg0: i32) -> (i32, i32) {
    %c0_i32 = arith.constant 0 : i32
    %c0_i32_0 = arith.constant 0 : i32
    %c0_i32_1 = arith.constant 0 : i32
    return %c0_i32, %c0_i32_0 : i32, i32
  }
  func.func @transform_3(%arg0: i32) -> (i32, i32) {
    %c0_i32 = arith.constant 0 : i32
    %c0_i32_0 = arith.constant 0 : i32
    %c0_i32_1 = arith.constant 0 : i32
    return %c0_i32, %c0_i32_0 : i32, i32
  }
  func.func @transform_4(%arg0: i32) -> (i32, i32) {
    %c0_i32 = arith.constant 0 : i32
    %c0_i32_0 = arith.constant 0 : i32
    %c0_i32_1 = arith.constant 0 : i32
    return %c0_i32, %c0_i32_0 : i32, i32
  }
  func.func @transform_5(%arg0: i32) -> (i32, i32) {
    %c0_i32 = arith.constant 0 : i32
    %c0_i32_0 = arith.constant 0 : i32
    %c0_i32_1 = arith.constant 0 : i32
    return %c0_i32, %c0_i32_0 : i32, i32
  }
  func.func @transform_6(%arg0: i32) -> (i32, i32) {
    %c0_i32 = arith.constant 0 : i32
    %c0_i32_0 = arith.constant 0 : i32
    %c0_i32_1 = arith.constant 0 : i32
    return %c0_i32, %c0_i32_0 : i32, i32
  }
  func.func @transform_7(%arg0: i32) -> (i32, i32) {
    %c0_i32 = arith.constant 0 : i32
    %c0_i32_0 = arith.constant 0 : i32
    %c0_i32_1 = arith.constant 0 : i32
    return %c0_i32, %c0_i32_0 : i32, i32
  }
  func.func @transform_8(%arg0: i32) -> (i32, i32) {
    %c0_i32 = arith.constant 0 : i32
    %c0_i32_0 = arith.constant 0 : i32
    %c0_i32_1 = arith.constant 0 : i32
    return %c0_i32, %c0_i32_0 : i32, i32
  }
  func.func @transform_9(%arg0: i32) -> (i32, i32) {
    %c0_i32 = arith.constant 0 : i32
    %c0_i32_0 = arith.constant 0 : i32
    %c0_i32_1 = arith.constant 0 : i32
    return %c0_i32, %c0_i32_0 : i32, i32
  }
  func.func @transform_10(%arg0: i32) -> (i32, i32) {
    %c0_i32 = arith.constant 0 : i32
    %c0_i32_0 = arith.constant 0 : i32
    %c0_i32_1 = arith.constant 0 : i32
    return %c0_i32, %c0_i32_0 : i32, i32
  }
  func.func @transform_11(%arg0: i32) -> (i32, i32, i32, i32) {
    %c0_i32 = arith.constant 0 : i32
    %c0_i32_0 = arith.constant 0 : i32
    %c0_i32_1 = arith.constant 0 : i32
    %c0_i32_2 = arith.constant 0 : i32
    return %arg0, %c0_i32, %c0_i32_0, %c0_i32_1 : i32, i32, i32, i32
  }
  func.func @transform_12(%arg0: i32) -> (i32, i32, i32) {
    %c0_i32 = arith.constant 0 : i32
    %c0_i32_0 = arith.constant 0 : i32
    %c0_i32_1 = arith.constant 0 : i32
    return %arg0, %c0_i32, %c0_i32_0 : i32, i32, i32
  }
  func.func @transform_13(%arg0: i32) -> (i32, i32, i32, i32) {
    %c0_i32 = arith.constant 0 : i32
    %c0_i32_0 = arith.constant 0 : i32
    %c0_i32_1 = arith.constant 0 : i32
    %c0_i32_2 = arith.constant 0 : i32
    return %arg0, %c0_i32, %c0_i32_0, %c0_i32_1 : i32, i32, i32, i32
  }
  func.func @transform_14(%arg0: i32) -> (i32, i32, i32, i32) {
    %c0_i32 = arith.constant 0 : i32
    %c0_i32_0 = arith.constant 0 : i32
    %c0_i32_1 = arith.constant 0 : i32
    %c0_i32_2 = arith.constant 0 : i32
    return %arg0, %c0_i32, %c0_i32_0, %c0_i32_1 : i32, i32, i32, i32
  }
  func.func @transform_15(%arg0: i32) -> (i32, i32, i32) {
    %c0_i32 = arith.constant 0 : i32
    %c0_i32_0 = arith.constant 0 : i32
    %c0_i32_1 = arith.constant 0 : i32
    return %arg0, %c0_i32, %c0_i32_0 : i32, i32, i32
  }
  func.func @transform_16(%arg0: i32) -> (i32, i32, i32) {
    %c0_i32 = arith.constant 0 : i32
    %c0_i32_0 = arith.constant 0 : i32
    %c0_i32_1 = arith.constant 0 : i32
    return %arg0, %c0_i32, %c0_i32_0 : i32, i32, i32
  }
  func.func @transform_17(%arg0: i32) -> (i32, i32, i32, i32) {
    %c0_i32 = arith.constant 0 : i32
    %c0_i32_0 = arith.constant 0 : i32
    %c0_i32_1 = arith.constant 0 : i32
    %c0_i32_2 = arith.constant 0 : i32
    return %arg0, %c0_i32, %c0_i32_0, %c0_i32_1 : i32, i32, i32, i32
  }
  func.func @transform_18(%arg0: i32) -> (i32, i32, i32, i32) {
    %c0_i32 = arith.constant 0 : i32
    %c0_i32_0 = arith.constant 0 : i32
    %c0_i32_1 = arith.constant 0 : i32
    %c0_i32_2 = arith.constant 0 : i32
    return %arg0, %c0_i32, %c0_i32_0, %c0_i32_1 : i32, i32, i32, i32
  }
  func.func @transform_19(%arg0: i32) -> (i32, i32, i32, i32) {
    %c0_i32 = arith.constant 0 : i32
    %c0_i32_0 = arith.constant 0 : i32
    %c0_i32_1 = arith.constant 0 : i32
    %c0_i32_2 = arith.constant 0 : i32
    return %arg0, %c0_i32, %c0_i32_0, %c0_i32_1 : i32, i32, i32, i32
  }
  func.func @transform_20(%arg0: i32) -> (i32, i32, i32) {
    %c0_i32 = arith.constant 0 : i32
    %c0_i32_0 = arith.constant 0 : i32
    %c0_i32_1 = arith.constant 0 : i32
    return %arg0, %c0_i32, %c0_i32_0 : i32, i32, i32
  }
  func.func @transform_21(%arg0: i32) -> (i32, i32, i32, i32) {
    %c0_i32 = arith.constant 0 : i32
    %c0_i32_0 = arith.constant 0 : i32
    %c0_i32_1 = arith.constant 0 : i32
    %c0_i32_2 = arith.constant 0 : i32
    return %arg0, %c0_i32, %c0_i32_0, %c0_i32_1 : i32, i32, i32, i32
  }
  func.func @transform_22(%arg0: i32) -> (i32, i32, i32, i32) {
    %c0_i32 = arith.constant 0 : i32
    %c0_i32_0 = arith.constant 0 : i32
    %c0_i32_1 = arith.constant 0 : i32
    %c0_i32_2 = arith.constant 0 : i32
    return %arg0, %c0_i32, %c0_i32_0, %c0_i32_1 : i32, i32, i32, i32
  }
  func.func @transform_23(%arg0: i32) -> (i32, i32, i32) {
    %c0_i32 = arith.constant 0 : i32
    %c0_i32_0 = arith.constant 0 : i32
    %c0_i32_1 = arith.constant 0 : i32
    return %arg0, %c0_i32, %c0_i32_0 : i32, i32, i32
  }
  func.func @transform_24(%arg0: i32) -> (i32, i32, i32) {
    %c0_i32 = arith.constant 0 : i32
    %c0_i32_0 = arith.constant 0 : i32
    %c0_i32_1 = arith.constant 0 : i32
    return %arg0, %c0_i32, %c0_i32_0 : i32, i32, i32
  }
  func.func @transform_25(%arg0: i32) -> (i32, i32, i32, i32) {
    %c0_i32 = arith.constant 0 : i32
    %c0_i32_0 = arith.constant 0 : i32
    %c0_i32_1 = arith.constant 0 : i32
    %c0_i32_2 = arith.constant 0 : i32
    return %arg0, %c0_i32, %c0_i32_0, %c0_i32_1 : i32, i32, i32, i32
  }
  func.func @transform_26(%arg0: i32) -> (i32, i32, i32, i32) {
    %c0_i32 = arith.constant 0 : i32
    %c0_i32_0 = arith.constant 0 : i32
    %c0_i32_1 = arith.constant 0 : i32
    %c0_i32_2 = arith.constant 0 : i32
    return %arg0, %c0_i32, %c0_i32_0, %c0_i32_1 : i32, i32, i32, i32
  }
  func.func @transform_27(%arg0: i32) -> (i32, i32) {
    %c0_i32 = arith.constant 0 : i32
    %c0_i32_0 = arith.constant 0 : i32
    %c0_i32_1 = arith.constant 0 : i32
    return %c0_i32, %c0_i32_0 : i32, i32
  }
  func.func @transform_28(%arg0: i32) -> (i32, i32) {
    %c0_i32 = arith.constant 0 : i32
    %c0_i32_0 = arith.constant 0 : i32
    %c0_i32_1 = arith.constant 0 : i32
    return %c0_i32, %c0_i32_0 : i32, i32
  }
  func.func @transform_29(%arg0: i32) -> (i32, i32, i32) {
    %c0_i32 = arith.constant 0 : i32
    %c0_i32_0 = arith.constant 0 : i32
    %c0_i32_1 = arith.constant 0 : i32
    return %arg0, %c0_i32, %c0_i32_0 : i32, i32, i32
  }
  func.func @transform_30(%arg0: i32) -> (i32, i32, i32) {
    %c0_i32 = arith.constant 0 : i32
    %c0_i32_0 = arith.constant 0 : i32
    %c0_i32_1 = arith.constant 0 : i32
    return %arg0, %c0_i32, %c0_i32_0 : i32, i32, i32
  }
}

</mosaic_0001>

<llo_original>
// kernel: custom-call.3
$region0: #{custom-call.3}
  %s0 = inlined_call_operand.vmem [shape: f32[2,32], index: 0, kind: input, shape index: {}]
  %s1 = inlined_call_operand.vmem [shape: f32[2,32], index: 1, kind: input, shape index: {}]
  %s2 = inlined_call_operand.hbm [shape: c64[2,32], index: 2, kind: output, shape index: {}]
  %s3 = scalar_lea.hbm %s2, 32
  $region1: #{custom-call.3} parent=0
    #allocation0 [shape = 's32[1]{0}', space=sflag, size = 0x4, scoped, tag = 'scoped memory for custom-call.3']
    %4 = vsyncpa [#allocation0], 0
    %s5 = sshll.u32 %s0, 4
    %s6 = int_to_ptr.vmem [resolvable:$true] %s5
    %8 = dma.vmem_to_hbm [thread:$0]  %s6, 32, %s2, [#allocation0]
    %9 = dma.done [#allocation0], 32
    %10 = vsyncpa [#allocation0], 1
  $region2: #{custom-call.3} parent=0
    #allocation1 [shape = 's32[1]{0}', space=sflag, size = 0x4, scoped, tag = 'scoped memory for custom-call.3']
    %11 = vsyncpa [#allocation1], 0
    %s12 = sshll.u32 %s1, 4
    %s13 = int_to_ptr.vmem [resolvable:$true] %s12
    %15 = dma.vmem_to_hbm [thread:$0]  %s13, 32, %s3, [#allocation1]
    %16 = dma.done [#allocation1], 32
    %17 = vsyncpa [#allocation1], 1

// kernel: custom-call.2
$region0: #{custom-call.2}
  %s0 = inlined_call_operand.vmem [shape: f32[2,32,1], index: 0, kind: input, shape index: {}]
  %s1 = inlined_call_operand.vmem [shape: f32[2,32,1], index: 1, kind: input, shape index: {}]
  %s2 = inlined_call_operand.hbm [shape: c64[2,32,1], index: 2, kind: output, shape index: {}]
  %s3 = scalar_lea.hbm %s2, 32
  $region1: #{custom-call.2} parent=0
    #allocation0 [shape = 's32[1]{0}', space=sflag, size = 0x4, scoped, tag = 'scoped memory for custom-call.2']
    %4 = vsyncpa [#allocation0], 0
    %s5 = sshll.u32 %s0, 4
    %s6 = int_to_ptr.vmem [resolvable:$true] %s5
    %8 = dma.vmem_to_hbm [thread:$0]  %s6, 32, %s2, [#allocation0]
    %9 = dma.done [#allocation0], 32
    %10 = vsyncpa [#allocation0], 1
  $region2: #{custom-call.2} parent=0
    #allocation1 [shape = 's32[1]{0}', space=sflag, size = 0x4, scoped, tag = 'scoped memory for custom-call.2']
    %11 = vsyncpa [#allocation1], 0
    %s12 = sshll.u32 %s1, 4
    %s13 = int_to_ptr.vmem [resolvable:$true] %s12
    %15 = dma.vmem_to_hbm [thread:$0]  %s13, 32, %s3, [#allocation1]
    %16 = dma.done [#allocation1], 32
    %17 = vsyncpa [#allocation1], 1

// kernel: custom-call.5
$region0: #{custom-call.5}
  %s0 = inlined_call_operand.vmem [shape: f32[2,8,1], index: 0, kind: input, shape index: {}]
  %s1 = inlined_call_operand.vmem [shape: f32[2,8,1], index: 1, kind: input, shape index: {}]
  %s2 = inlined_call_operand.hbm [shape: c64[2,8,1], index: 2, kind: output, shape index: {}]
  %s3 = scalar_lea.hbm %s2, 32
  $region1: #{custom-call.5} parent=0
    #allocation0 [shape = 's32[1]{0}', space=sflag, size = 0x4, scoped, tag = 'scoped memory for custom-call.5']
    %4 = vsyncpa [#allocation0], 0
    %s5 = sshll.u32 %s0, 4
    %s6 = int_to_ptr.vmem [resolvable:$true] %s5
    %8 = dma.vmem_to_hbm [thread:$0]  %s6, 32, %s2, [#allocation0]
    %9 = dma.done [#allocation0], 32
    %10 = vsyncpa [#allocation0], 1
  $region2: #{custom-call.5} parent=0
    #allocation1 [shape = 's32[1]{0}', space=sflag, size = 0x4, scoped, tag = 'scoped memory for custom-call.5']
    %11 = vsyncpa [#allocation1], 0
    %s12 = sshll.u32 %s1, 4
    %s13 = int_to_ptr.vmem [resolvable:$true] %s12
    %15 = dma.vmem_to_hbm [thread:$0]  %s13, 32, %s3, [#allocation1]
    %16 = dma.done [#allocation1], 32
    %17 = vsyncpa [#allocation1], 1

// kernel: ogfreq_forward.1
$region0: #{ogfreq_forward.1}
  #allocation0 [shape = 'u32[]', space=smem, size = 0x4, offset = 0x4, fixed_abs, tag = 'smem constant byte address 0x4 - core index']
  #allocation1 [shape = 'u32[144,128]{1,0:T(1,128)}', space=vmem, size = 0x12000, scoped, tag = 'internal scratch']
  #allocation2 [shape = 'f32[2,64]{1,0:T(2,128)}', space=vmem, size = 0x400, scoped, tag = 'scratch operand']
  #allocation3 [shape = 'f32[2,16]{1,0:T(2,128)}', space=vmem, size = 0x400, scoped, tag = 'scratch operand']
  %s0 = inlined_call_operand.smem [shape: u32[31], index: -1, kind: input, shape index: {}]
  %s1 = sld [smem:[%s0]]
  %s2 = scalar_lea.smem %s0, 1
  %s3 = sld [smem:[%s2]]
  %s4 = scalar_lea.smem %s0, 2
  %s5 = sld [smem:[%s4]]
  %s6 = scalar_lea.smem %s0, 3
  %s7 = sld [smem:[%s6]]
  %s8 = scalar_lea.smem %s0, 4
  %s9 = sld [smem:[%s8]]
  %s10 = scalar_lea.smem %s0, 5
  %s11 = sld [smem:[%s10]]
  %s12 = scalar_lea.smem %s0, 6
  %s13 = sld [smem:[%s12]]
  %s14 = scalar_lea.smem %s0, 7
  %s15 = sld [smem:[%s14]]
  %s16 = scalar_lea.smem %s0, 8
  %s17 = sld [smem:[%s16]]
  %s18 = scalar_lea.smem %s0, 9
  %s19 = sld [smem:[%s18]]
  %s20 = scalar_lea.smem %s0, 10
  %s21 = sld [smem:[%s20]]
  %s22 = scalar_lea.smem %s0, 11
  %s23 = sld [smem:[%s22]]
  %s24 = scalar_lea.smem %s0, 12
  %s25 = sld [smem:[%s24]]
  %s26 = scalar_lea.smem %s0, 13
  %s27 = sld [smem:[%s26]]
  %s28 = scalar_lea.smem %s0, 14
  %s29 = sld [smem:[%s28]]
  %s30 = scalar_lea.smem %s0, 15
  %s31 = sld [smem:[%s30]]
  %s32 = scalar_lea.smem %s0, 16
  %s33 = sld [smem:[%s32]]
  %s34 = scalar_lea.smem %s0, 17
  %s35 = sld [smem:[%s34]]
  %s36 = scalar_lea.smem %s0, 18
  %s37 = sld [smem:[%s36]]
  %s38 = scalar_lea.smem %s0, 19
  %s39 = sld [smem:[%s38]]
  %s40 = scalar_lea.smem %s0, 20
  %s41 = sld [smem:[%s40]]
  %s42 = scalar_lea.smem %s0, 21
  %s43 = sld [smem:[%s42]]
  %s44 = scalar_lea.smem %s0, 22
  %s45 = sld [smem:[%s44]]
  %s46 = scalar_lea.smem %s0, 23
  %s47 = sld [smem:[%s46]]
  %s48 = scalar_lea.smem %s0, 24
  %s49 = sld [smem:[%s48]]
  %s50 = scalar_lea.smem %s0, 25
  %s51 = sld [smem:[%s50]]
  %s52 = scalar_lea.smem %s0, 26
  %s53 = sld [smem:[%s52]]
  %s54 = scalar_lea.smem %s0, 27
  %s55 = sld [smem:[%s54]]
  %s56 = scalar_lea.smem %s0, 28
  %s57 = sld [smem:[%s56]]
  %s58 = scalar_lea.smem %s0, 29
  %s59 = sld [smem:[%s58]]
  %s60 = scalar_lea.smem %s0, 30
  %s61 = sld [smem:[%s60]]
  %62 = xla_tuple %s55, %s57, %s59, %s61
  %s63 = sld [smem:[#allocation0]]
  $region173: #{ogfreq_forward.1} parent=0
    _
  %s65 = ssub.s32 1, %s63
  %s66 = scalar_select 0, %s65, %s63
  $region1: #{ogfreq_forward.1} parent=0
    #allocation4 [shape = 'u8[1024]{0}', space=smem, size = 0x400, scoped, tag = 'input window, operand 0, single buffered']
    #allocation5 [shape = 's32[2]{0}', space=sflag, size = 0x8, scoped, tag = 'scoped memory for ogfreq_forward.1']
    %67 = vsyncpa [#allocation5], 0
    loop: start=0, step=1, limit=4
    $region2: #{ogfreq_forward.1} parent=1 // loop_pre_header
      _
    $region3: #{ogfreq_forward.1} parent=1 // loop_header
      %s69 = sphi 0, %s73
      %p70 = scmp.ge.s32.totalorder %s69, 4
      %s77 = sphi 0, %s77
      %s79 = sphi 0, %s77
      %s80 = sphi 0, %s79
      %s94 = sphi 0, %s80
      %s98 = sphi 0, %s98
      %s100 = sphi 0, %s98
      %s101 = sphi 0, %s100
      %s115 = sphi 0, %s101
      %s119 = sphi 0, %s119
      %s121 = sphi 0, %s119
      %s122 = sphi 0, %s121
      %s136 = sphi 0, %s122
      %s140 = sphi 0, %s140
      %s142 = sphi 0, %s140
      %s143 = sphi 0, %s142
      %s157 = sphi 0, %s143
      %s161 = sphi 0, %s161
      %s163 = sphi 0, %s161
      %s164 = sphi 0, %s163
      %s178 = sphi 0, %s164
      %s182 = sphi 0, %s182
      %s184 = sphi 0, %s182
      %s185 = sphi 0, %s184
      %s199 = sphi 0, %s185
      %s203 = sphi 0, %s203
      %s205 = sphi 0, %s203
      %s206 = sphi 0, %s205
      %s220 = sphi 0, %s206
      %s224 = sphi 0, %s224
      %s226 = sphi 0, %s224
      %s227 = sphi 0, %s226
      %s241 = sphi 0, %s227
      %s245 = sphi 0, %s245
      %s247 = sphi 0, %s245
      %s248 = sphi 0, %s247
      %s262 = sphi 0, %s248
      %s266 = sphi 0, %s266
      %s268 = sphi 0, %s266
      %s269 = sphi 0, %s268
      %s283 = sphi 0, %s269
      %s287 = sphi 0, %s287
      %s289 = sphi 0, %s287
      %s290 = sphi 0, %s289
      %s304 = sphi 0, %s290
      %s310 = sphi 0, %s312
      %s313 = sphi 0, %s310
      %s314 = sphi 0, %s313
      %s330 = sphi 0, %s314
      %s336 = sphi 0, %s338
      %s339 = sphi 0, %s336
      %s340 = sphi 0, %s339
      %s356 = sphi 0, %s340
      %s362 = sphi 0, %s364
      %s365 = sphi 0, %s362
      %s366 = sphi 0, %s365
      %s382 = sphi 0, %s366
      %s388 = sphi 0, %s390
      %s391 = sphi 0, %s388
      %s392 = sphi 0, %s391
      %s408 = sphi 0, %s392
      %s414 = sphi 0, %s416
      %s417 = sphi 0, %s414
      %s418 = sphi 0, %s417
      %s434 = sphi 0, %s418
      %s440 = sphi 0, %s442
      %s443 = sphi 0, %s440
      %s444 = sphi 0, %s443
      %s460 = sphi 0, %s444
      %s466 = sphi 0, %s468
      %s469 = sphi 0, %s466
      %s470 = sphi 0, %s469
      %s486 = sphi 0, %s470
      %s492 = sphi 0, %s494
      %s495 = sphi 0, %s492
      %s496 = sphi 0, %s495
      %s512 = sphi 0, %s496
      %s518 = sphi 0, %s520
      %s521 = sphi 0, %s518
      %s522 = sphi 0, %s521
      %s538 = sphi 0, %s522
      %s544 = sphi 0, %s546
      %s547 = sphi 0, %s544
      %s548 = sphi 0, %s547
      %s564 = sphi 0, %s548
      %s570 = sphi 0, %s572
      %s573 = sphi 0, %s570
      %s574 = sphi 0, %s573
      %s590 = sphi 0, %s574
      %s596 = sphi 0, %s598
      %s599 = sphi 0, %s596
      %s600 = sphi 0, %s599
      %s616 = sphi 0, %s600
      %s622 = sphi 0, %s624
      %s625 = sphi 0, %s622
      %s626 = sphi 0, %s625
      %s642 = sphi 0, %s626
      %s648 = sphi 0, %s650
      %s651 = sphi 0, %s648
      %s652 = sphi 0, %s651
      %s668 = sphi 0, %s652
      %s674 = sphi 0, %s676
      %s677 = sphi 0, %s674
      %s678 = sphi 0, %s677
      %s694 = sphi 0, %s678
      %s700 = sphi 0, %s702
      %s703 = sphi 0, %s700
      %s704 = sphi 0, %s703
      %s720 = sphi 0, %s704
      %s724 = sphi 0, %s724
      %s726 = sphi 0, %s724
      %s727 = sphi 0, %s726
      %s741 = sphi 0, %s727
      %s745 = sphi 0, %s745
      %s747 = sphi 0, %s745
      %s748 = sphi 0, %s747
      %s762 = sphi 0, %s748
      %s768 = sphi 0, %s770
      %s771 = sphi 0, %s768
      %s772 = sphi 0, %s771
      %s788 = sphi 0, %s772
      %s794 = sphi 0, %s796
      %s797 = sphi 0, %s794
      %s798 = sphi 0, %s797
      %s814 = sphi 0, %s798
    $region4: #{ogfreq_forward.1} parent=1 // loop_header_branch
      %72 = sbr.rel (%p70) target = $region8
    $region5: #{ogfreq_forward.1} parent=1 // loop_body
      %s74 = ssub.s32 %s69, 1
      %s75 = ssub.s32 %s69, 2
      %s76 = sadd.s32 %s69, 1
      %s78 = sadd.s32 %s77, 1
      %p81 = scmp.eq.s32.totalorder %s69, 1
      %p82 = scmp.ne.s32.totalorder %s77, %s79
      %p83 = scmp.eq.s32.totalorder %s69, 0
      %p84 = por %p82, %p83
      %p85 = scmp.ne.s32.totalorder %s77, %s79
      %p86 = scmp.eq.s32.totalorder %s74, 1
      %p87 = por %p85, %p86
      %p88 = scmp.ne.s32.totalorder %s79, %s80
      %p89 = scmp.eq.s32.totalorder %s74, 0
      %p90 = por %p88, %p89
      %p91 = scmp.ne.s32.totalorder %s79, %s80
      %p92 = scmp.eq.s32.totalorder %s75, 1
      %p93 = por %p91, %p92
      %p95 = scmp.ne.s32.totalorder %s80, %s94
      %p96 = scmp.eq.s32.totalorder %s75, 0
      %p97 = por %p95, %p96
      %s99 = sadd.s32 %s98, 1
      %p102 = scmp.eq.s32.totalorder %s69, 1
      %p103 = scmp.ne.s32.totalorder %s98, %s100
      %p104 = scmp.eq.s32.totalorder %s69, 0
      %p105 = por %p103, %p104
      %p106 = scmp.ne.s32.totalorder %s98, %s100
      %p107 = scmp.eq.s32.totalorder %s74, 1
      %p108 = por %p106, %p107
      %p109 = scmp.ne.s32.totalorder %s100, %s101
      %p110 = scmp.eq.s32.totalorder %s74, 0
      %p111 = por %p109, %p110
      %p112 = scmp.ne.s32.totalorder %s100, %s101
      %p113 = scmp.eq.s32.totalorder %s75, 1
      %p114 = por %p112, %p113
      %p116 = scmp.ne.s32.totalorder %s101, %s115
      %p117 = scmp.eq.s32.totalorder %s75, 0
      %p118 = por %p116, %p117
      %s120 = sadd.s32 %s119, 1
      %p123 = scmp.eq.s32.totalorder %s69, 1
      %p124 = scmp.ne.s32.totalorder %s119, %s121
      %p125 = scmp.eq.s32.totalorder %s69, 0
      %p126 = por %p124, %p125
      %p127 = scmp.ne.s32.totalorder %s119, %s121
      %p128 = scmp.eq.s32.totalorder %s74, 1
      %p129 = por %p127, %p128
      %p130 = scmp.ne.s32.totalorder %s121, %s122
      %p131 = scmp.eq.s32.totalorder %s74, 0
      %p132 = por %p130, %p131
      %p133 = scmp.ne.s32.totalorder %s121, %s122
      %p134 = scmp.eq.s32.totalorder %s75, 1
      %p135 = por %p133, %p134
      %p137 = scmp.ne.s32.totalorder %s122, %s136
      %p138 = scmp.eq.s32.totalorder %s75, 0
      %p139 = por %p137, %p138
      %s141 = sadd.s32 %s140, 1
      %p144 = scmp.eq.s32.totalorder %s69, 1
      %p145 = scmp.ne.s32.totalorder %s140, %s142
      %p146 = scmp.eq.s32.totalorder %s69, 0
      %p147 = por %p145, %p146
      %p148 = scmp.ne.s32.totalorder %s140, %s142
      %p149 = scmp.eq.s32.totalorder %s74, 1
      %p150 = por %p148, %p149
      %p151 = scmp.ne.s32.totalorder %s142, %s143
      %p152 = scmp.eq.s32.totalorder %s74, 0
      %p153 = por %p151, %p152
      %p154 = scmp.ne.s32.totalorder %s142, %s143
      %p155 = scmp.eq.s32.totalorder %s75, 1
      %p156 = por %p154, %p155
      %p158 = scmp.ne.s32.totalorder %s143, %s157
      %p159 = scmp.eq.s32.totalorder %s75, 0
      %p160 = por %p158, %p159
      %s162 = sadd.s32 %s161, 1
      %p165 = scmp.eq.s32.totalorder %s69, 1
      %p166 = scmp.ne.s32.totalorder %s161, %s163
      %p167 = scmp.eq.s32.totalorder %s69, 0
      %p168 = por %p166, %p167
      %p169 = scmp.ne.s32.totalorder %s161, %s163
      %p170 = scmp.eq.s32.totalorder %s74, 1
      %p171 = por %p169, %p170
      %p172 = scmp.ne.s32.totalorder %s163, %s164
      %p173 = scmp.eq.s32.totalorder %s74, 0
      %p174 = por %p172, %p173
      %p175 = scmp.ne.s32.totalorder %s163, %s164
      %p176 = scmp.eq.s32.totalorder %s75, 1
      %p177 = por %p175, %p176
      %p179 = scmp.ne.s32.totalorder %s164, %s178
      %p180 = scmp.eq.s32.totalorder %s75, 0
      %p181 = por %p179, %p180
      %s183 = sadd.s32 %s182, 1
      %p186 = scmp.eq.s32.totalorder %s69, 1
      %p187 = scmp.ne.s32.totalorder %s182, %s184
      %p188 = scmp.eq.s32.totalorder %s69, 0
      %p189 = por %p187, %p188
      %p190 = scmp.ne.s32.totalorder %s182, %s184
      %p191 = scmp.eq.s32.totalorder %s74, 1
      %p192 = por %p190, %p191
      %p193 = scmp.ne.s32.totalorder %s184, %s185
      %p194 = scmp.eq.s32.totalorder %s74, 0
      %p195 = por %p193, %p194
      %p196 = scmp.ne.s32.totalorder %s184, %s185
      %p197 = scmp.eq.s32.totalorder %s75, 1
      %p198 = por %p196, %p197
      %p200 = scmp.ne.s32.totalorder %s185, %s199
      %p201 = scmp.eq.s32.totalorder %s75, 0
      %p202 = por %p200, %p201
      %s204 = sadd.s32 %s203, 1
      %p207 = scmp.eq.s32.totalorder %s69, 1
      %p208 = scmp.ne.s32.totalorder %s203, %s205
      %p209 = scmp.eq.s32.totalorder %s69, 0
      %p210 = por %p208, %p209
      %p211 = scmp.ne.s32.totalorder %s203, %s205
      %p212 = scmp.eq.s32.totalorder %s74, 1
      %p213 = por %p211, %p212
      %p214 = scmp.ne.s32.totalorder %s205, %s206
      %p215 = scmp.eq.s32.totalorder %s74, 0
      %p216 = por %p214, %p215
      %p217 = scmp.ne.s32.totalorder %s205, %s206
      %p218 = scmp.eq.s32.totalorder %s75, 1
      %p219 = por %p217, %p218
      %p221 = scmp.ne.s32.totalorder %s206, %s220
      %p222 = scmp.eq.s32.totalorder %s75, 0
      %p223 = por %p221, %p222
      %s225 = sadd.s32 %s224, 1
      %p228 = scmp.eq.s32.totalorder %s69, 1
      %p229 = scmp.ne.s32.totalorder %s224, %s226
      %p230 = scmp.eq.s32.totalorder %s69, 0
      %p231 = por %p229, %p230
      %p232 = scmp.ne.s32.totalorder %s224, %s226
      %p233 = scmp.eq.s32.totalorder %s74, 1
      %p234 = por %p232, %p233
      %p235 = scmp.ne.s32.totalorder %s226, %s227
      %p236 = scmp.eq.s32.totalorder %s74, 0
      %p237 = por %p235, %p236
      %p238 = scmp.ne.s32.totalorder %s226, %s227
      %p239 = scmp.eq.s32.totalorder %s75, 1
      %p240 = por %p238, %p239
      %p242 = scmp.ne.s32.totalorder %s227, %s241
      %p243 = scmp.eq.s32.totalorder %s75, 0
      %p244 = por %p242, %p243
      %s246 = sadd.s32 %s245, 1
      %p249 = scmp.eq.s32.totalorder %s69, 1
      %p250 = scmp.ne.s32.totalorder %s245, %s247
      %p251 = scmp.eq.s32.totalorder %s69, 0
      %p252 = por %p250, %p251
      %p253 = scmp.ne.s32.totalorder %s245, %s247
      %p254 = scmp.eq.s32.totalorder %s74, 1
      %p255 = por %p253, %p254
      %p256 = scmp.ne.s32.totalorder %s247, %s248
      %p257 = scmp.eq.s32.totalorder %s74, 0
      %p258 = por %p256, %p257
      %p259 = scmp.ne.s32.totalorder %s247, %s248
      %p260 = scmp.eq.s32.totalorder %s75, 1
      %p261 = por %p259, %p260
      %p263 = scmp.ne.s32.totalorder %s248, %s262
      %p264 = scmp.eq.s32.totalorder %s75, 0
      %p265 = por %p263, %p264
      %s267 = sadd.s32 %s266, 1
      %p270 = scmp.eq.s32.totalorder %s69, 1
      %p271 = scmp.ne.s32.totalorder %s266, %s268
      %p272 = scmp.eq.s32.totalorder %s69, 0
      %p273 = por %p271, %p272
      %p274 = scmp.ne.s32.totalorder %s266, %s268
      %p275 = scmp.eq.s32.totalorder %s74, 1
      %p276 = por %p274, %p275
      %p277 = scmp.ne.s32.totalorder %s268, %s269
      %p278 = scmp.eq.s32.totalorder %s74, 0
      %p279 = por %p277, %p278
      %p280 = scmp.ne.s32.totalorder %s268, %s269
      %p281 = scmp.eq.s32.totalorder %s75, 1
      %p282 = por %p280, %p281
      %p284 = scmp.ne.s32.totalorder %s269, %s283
      %p285 = scmp.eq.s32.totalorder %s75, 0
      %p286 = por %p284, %p285
      %s288 = sadd.s32 %s287, 1
      %p291 = scmp.eq.s32.totalorder %s69, 1
      %p292 = scmp.ne.s32.totalorder %s287, %s289
      %p293 = scmp.eq.s32.totalorder %s69, 0
      %p294 = por %p292, %p293
      %p295 = scmp.ne.s32.totalorder %s287, %s289
      %p296 = scmp.eq.s32.totalorder %s74, 1
      %p297 = por %p295, %p296
      %p298 = scmp.ne.s32.totalorder %s289, %s290
      %p299 = scmp.eq.s32.totalorder %s74, 0
      %p300 = por %p298, %p299
      %p301 = scmp.ne.s32.totalorder %s289, %s290
      %p302 = scmp.eq.s32.totalorder %s75, 1
      %p303 = por %p301, %p302
      %p305 = scmp.ne.s32.totalorder %s290, %s304
      %p306 = scmp.eq.s32.totalorder %s75, 0
      %p307 = por %p305, %p306
      %s308 = ssub.s32 %s69, %s76
      %p309 = scmp.eq.s32.totalorder %s308, 0
      %s311 = sadd.s32 %s310, 1
      %s312 = scalar_select %p309, %s310, %s311
      %p315 = pneg %p309
      %p316 = scmp.eq.s32.totalorder %s69, 1
      %p317 = por %p315, %p316
      %p318 = scmp.ne.s32.totalorder %s310, %s313
      %p319 = scmp.eq.s32.totalorder %s69, 0
      %p320 = por %p318, %p319
      %p321 = scmp.ne.s32.totalorder %s310, %s313
      %p322 = scmp.eq.s32.totalorder %s74, 1
      %p323 = por %p321, %p322
      %p324 = scmp.ne.s32.totalorder %s313, %s314
      %p325 = scmp.eq.s32.totalorder %s74, 0
      %p326 = por %p324, %p325
      %p327 = scmp.ne.s32.totalorder %s313, %s314
      %p328 = scmp.eq.s32.totalorder %s75, 1
      %p329 = por %p327, %p328
      %p331 = scmp.ne.s32.totalorder %s314, %s330
      %p332 = scmp.eq.s32.totalorder %s75, 0
      %p333 = por %p331, %p332
      %s334 = ssub.s32 %s69, %s76
      %p335 = scmp.eq.s32.totalorder %s334, 0
      %s337 = sadd.s32 %s336, 1
      %s338 = scalar_select %p335, %s336, %s337
      %p341 = pneg %p335
      %p342 = scmp.eq.s32.totalorder %s69, 1
      %p343 = por %p341, %p342
      %p344 = scmp.ne.s32.totalorder %s336, %s339
      %p345 = scmp.eq.s32.totalorder %s69, 0
      %p346 = por %p344, %p345
      %p347 = scmp.ne.s32.totalorder %s336, %s339
      %p348 = scmp.eq.s32.totalorder %s74, 1
      %p349 = por %p347, %p348
      %p350 = scmp.ne.s32.totalorder %s339, %s340
      %p351 = scmp.eq.s32.totalorder %s74, 0
      %p352 = por %p350, %p351
      %p353 = scmp.ne.s32.totalorder %s339, %s340
      %p354 = scmp.eq.s32.totalorder %s75, 1
      %p355 = por %p353, %p354
      %p357 = scmp.ne.s32.totalorder %s340, %s356
      %p358 = scmp.eq.s32.totalorder %s75, 0
      %p359 = por %p357, %p358
      %s360 = ssub.s32 %s69, %s76
      %p361 = scmp.eq.s32.totalorder %s360, 0
      %s363 = sadd.s32 %s362, 1
      %s364 = scalar_select %p361, %s362, %s363
      %p367 = pneg %p361
      %p368 = scmp.eq.s32.totalorder %s69, 1
      %p369 = por %p367, %p368
      %p370 = scmp.ne.s32.totalorder %s362, %s365
      %p371 = scmp.eq.s32.totalorder %s69, 0
      %p372 = por %p370, %p371
      %p373 = scmp.ne.s32.totalorder %s362, %s365
      %p374 = scmp.eq.s32.totalorder %s74, 1
      %p375 = por %p373, %p374
      %p376 = scmp.ne.s32.totalorder %s365, %s366
      %p377 = scmp.eq.s32.totalorder %s74, 0
      %p378 = por %p376, %p377
      %p379 = scmp.ne.s32.totalorder %s365, %s366
      %p380 = scmp.eq.s32.totalorder %s75, 1
      %p381 = por %p379, %p380
      %p383 = scmp.ne.s32.totalorder %s366, %s382
      %p384 = scmp.eq.s32.totalorder %s75, 0
      %p385 = por %p383, %p384
      %s386 = ssub.s32 %s69, %s76
      %p387 = scmp.eq.s32.totalorder %s386, 0
      %s389 = sadd.s32 %s388, 1
      %s390 = scalar_select %p387, %s388, %s389
      %p393 = pneg %p387
      %p394 = scmp.eq.s32.totalorder %s69, 1
      %p395 = por %p393, %p394
      %p396 = scmp.ne.s32.totalorder %s388, %s391
      %p397 = scmp.eq.s32.totalorder %s69, 0
      %p398 = por %p396, %p397
      %p399 = scmp.ne.s32.totalorder %s388, %s391
      %p400 = scmp.eq.s32.totalorder %s74, 1
      %p401 = por %p399, %p400
      %p402 = scmp.ne.s32.totalorder %s391, %s392
      %p403 = scmp.eq.s32.totalorder %s74, 0
      %p404 = por %p402, %p403
      %p405 = scmp.ne.s32.totalorder %s391, %s392
      %p406 = scmp.eq.s32.totalorder %s75, 1
      %p407 = por %p405, %p406
      %p409 = scmp.ne.s32.totalorder %s392, %s408
      %p410 = scmp.eq.s32.totalorder %s75, 0
      %p411 = por %p409, %p410
      %s412 = ssub.s32 %s69, %s76
      %p413 = scmp.eq.s32.totalorder %s412, 0
      %s415 = sadd.s32 %s414, 1
      %s416 = scalar_select %p413, %s414, %s415
      %p419 = pneg %p413
      %p420 = scmp.eq.s32.totalorder %s69, 1
      %p421 = por %p419, %p420
      %p422 = scmp.ne.s32.totalorder %s414, %s417
      %p423 = scmp.eq.s32.totalorder %s69, 0
      %p424 = por %p422, %p423
      %p425 = scmp.ne.s32.totalorder %s414, %s417
      %p426 = scmp.eq.s32.totalorder %s74, 1
      %p427 = por %p425, %p426
      %p428 = scmp.ne.s32.totalorder %s417, %s418
      %p429 = scmp.eq.s32.totalorder %s74, 0
      %p430 = por %p428, %p429
      %p431 = scmp.ne.s32.totalorder %s417, %s418
      %p432 = scmp.eq.s32.totalorder %s75, 1
      %p433 = por %p431, %p432
      %p435 = scmp.ne.s32.totalorder %s418, %s434
      %p436 = scmp.eq.s32.totalorder %s75, 0
      %p437 = por %p435, %p436
      %s438 = ssub.s32 %s69, %s76
      %p439 = scmp.eq.s32.totalorder %s438, 0
      %s441 = sadd.s32 %s440, 1
      %s442 = scalar_select %p439, %s440, %s441
      %p445 = pneg %p439
      %p446 = scmp.eq.s32.totalorder %s69, 1
      %p447 = por %p445, %p446
      %p448 = scmp.ne.s32.totalorder %s440, %s443
      %p449 = scmp.eq.s32.totalorder %s69, 0
      %p450 = por %p448, %p449
      %p451 = scmp.ne.s32.totalorder %s440, %s443
      %p452 = scmp.eq.s32.totalorder %s74, 1
      %p453 = por %p451, %p452
      %p454 = scmp.ne.s32.totalorder %s443, %s444
      %p455 = scmp.eq.s32.totalorder %s74, 0
      %p456 = por %p454, %p455
      %p457 = scmp.ne.s32.totalorder %s443, %s444
      %p458 = scmp.eq.s32.totalorder %s75, 1
      %p459 = por %p457, %p458
      %p461 = scmp.ne.s32.totalorder %s444, %s460
      %p462 = scmp.eq.s32.totalorder %s75, 0
      %p463 = por %p461, %p462
      %s464 = ssub.s32 %s69, %s76
      %p465 = scmp.eq.s32.totalorder %s464, 0
      %s467 = sadd.s32 %s466, 1
      %s468 = scalar_select %p465, %s466, %s467
      %p471 = pneg %p465
      %p472 = scmp.eq.s32.totalorder %s69, 1
      %p473 = por %p471, %p472
      %p474 = scmp.ne.s32.totalorder %s466, %s469
      %p475 = scmp.eq.s32.totalorder %s69, 0
      %p476 = por %p474, %p475
      %p477 = scmp.ne.s32.totalorder %s466, %s469
      %p478 = scmp.eq.s32.totalorder %s74, 1
      %p479 = por %p477, %p478
      %p480 = scmp.ne.s32.totalorder %s469, %s470
      %p481 = scmp.eq.s32.totalorder %s74, 0
      %p482 = por %p480, %p481
      %p483 = scmp.ne.s32.totalorder %s469, %s470
      %p484 = scmp.eq.s32.totalorder %s75, 1
      %p485 = por %p483, %p484
      %p487 = scmp.ne.s32.totalorder %s470, %s486
      %p488 = scmp.eq.s32.totalorder %s75, 0
      %p489 = por %p487, %p488
      %s490 = ssub.s32 %s69, %s76
      %p491 = scmp.eq.s32.totalorder %s490, 0
      %s493 = sadd.s32 %s492, 1
      %s494 = scalar_select %p491, %s492, %s493
      %p497 = pneg %p491
      %p498 = scmp.eq.s32.totalorder %s69, 1
      %p499 = por %p497, %p498
      %p500 = scmp.ne.s32.totalorder %s492, %s495
      %p501 = scmp.eq.s32.totalorder %s69, 0
      %p502 = por %p500, %p501
      %p503 = scmp.ne.s32.totalorder %s492, %s495
      %p504 = scmp.eq.s32.totalorder %s74, 1
      %p505 = por %p503, %p504
      %p506 = scmp.ne.s32.totalorder %s495, %s496
      %p507 = scmp.eq.s32.totalorder %s74, 0
      %p508 = por %p506, %p507
      %p509 = scmp.ne.s32.totalorder %s495, %s496
      %p510 = scmp.eq.s32.totalorder %s75, 1
      %p511 = por %p509, %p510
      %p513 = scmp.ne.s32.totalorder %s496, %s512
      %p514 = scmp.eq.s32.totalorder %s75, 0
      %p515 = por %p513, %p514
      %s516 = ssub.s32 %s69, %s76
      %p517 = scmp.eq.s32.totalorder %s516, 0
      %s519 = sadd.s32 %s518, 1
      %s520 = scalar_select %p517, %s518, %s519
      %p523 = pneg %p517
      %p524 = scmp.eq.s32.totalorder %s69, 1
      %p525 = por %p523, %p524
      %p526 = scmp.ne.s32.totalorder %s518, %s521
      %p527 = scmp.eq.s32.totalorder %s69, 0
      %p528 = por %p526, %p527
      %p529 = scmp.ne.s32.totalorder %s518, %s521
      %p530 = scmp.eq.s32.totalorder %s74, 1
      %p531 = por %p529, %p530
      %p532 = scmp.ne.s32.totalorder %s521, %s522
      %p533 = scmp.eq.s32.totalorder %s74, 0
      %p534 = por %p532, %p533
      %p535 = scmp.ne.s32.totalorder %s521, %s522
      %p536 = scmp.eq.s32.totalorder %s75, 1
      %p537 = por %p535, %p536
      %p539 = scmp.ne.s32.totalorder %s522, %s538
      %p540 = scmp.eq.s32.totalorder %s75, 0
      %p541 = por %p539, %p540
      %s542 = ssub.s32 %s69, %s76
      %p543 = scmp.eq.s32.totalorder %s542, 0
      %s545 = sadd.s32 %s544, 1
      %s546 = scalar_select %p543, %s544, %s545
      %p549 = pneg %p543
      %p550 = scmp.eq.s32.totalorder %s69, 1
      %p551 = por %p549, %p550
      %p552 = scmp.ne.s32.totalorder %s544, %s547
      %p553 = scmp.eq.s32.totalorder %s69, 0
      %p554 = por %p552, %p553
      %p555 = scmp.ne.s32.totalorder %s544, %s547
      %p556 = scmp.eq.s32.totalorder %s74, 1
      %p557 = por %p555, %p556
      %p558 = scmp.ne.s32.totalorder %s547, %s548
      %p559 = scmp.eq.s32.totalorder %s74, 0
      %p560 = por %p558, %p559
      %p561 = scmp.ne.s32.totalorder %s547, %s548
      %p562 = scmp.eq.s32.totalorder %s75, 1
      %p563 = por %p561, %p562
      %p565 = scmp.ne.s32.totalorder %s548, %s564
      %p566 = scmp.eq.s32.totalorder %s75, 0
      %p567 = por %p565, %p566
      %s568 = ssub.s32 %s69, %s76
      %p569 = scmp.eq.s32.totalorder %s568, 0
      %s571 = sadd.s32 %s570, 1
      %s572 = scalar_select %p569, %s570, %s571
      %p575 = pneg %p569
      %p576 = scmp.eq.s32.totalorder %s69, 1
      %p577 = por %p575, %p576
      %p578 = scmp.ne.s32.totalorder %s570, %s573
      %p579 = scmp.eq.s32.totalorder %s69, 0
      %p580 = por %p578, %p579
      %p581 = scmp.ne.s32.totalorder %s570, %s573
      %p582 = scmp.eq.s32.totalorder %s74, 1
      %p583 = por %p581, %p582
      %p584 = scmp.ne.s32.totalorder %s573, %s574
      %p585 = scmp.eq.s32.totalorder %s74, 0
      %p586 = por %p584, %p585
      %p587 = scmp.ne.s32.totalorder %s573, %s574
      %p588 = scmp.eq.s32.totalorder %s75, 1
      %p589 = por %p587, %p588
      %p591 = scmp.ne.s32.totalorder %s574, %s590
      %p592 = scmp.eq.s32.totalorder %s75, 0
      %p593 = por %p591, %p592
      %s594 = ssub.s32 %s69, %s76
      %p595 = scmp.eq.s32.totalorder %s594, 0
      %s597 = sadd.s32 %s596, 1
      %s598 = scalar_select %p595, %s596, %s597
      %p601 = pneg %p595
      %p602 = scmp.eq.s32.totalorder %s69, 1
      %p603 = por %p601, %p602
      %p604 = scmp.ne.s32.totalorder %s596, %s599
      %p605 = scmp.eq.s32.totalorder %s69, 0
      %p606 = por %p604, %p605
      %p607 = scmp.ne.s32.totalorder %s596, %s599
      %p608 = scmp.eq.s32.totalorder %s74, 1
      %p609 = por %p607, %p608
      %p610 = scmp.ne.s32.totalorder %s599, %s600
      %p611 = scmp.eq.s32.totalorder %s74, 0
      %p612 = por %p610, %p611
      %p613 = scmp.ne.s32.totalorder %s599, %s600
      %p614 = scmp.eq.s32.totalorder %s75, 1
      %p615 = por %p613, %p614
      %p617 = scmp.ne.s32.totalorder %s600, %s616
      %p618 = scmp.eq.s32.totalorder %s75, 0
      %p619 = por %p617, %p618
      %s620 = ssub.s32 %s69, %s76
      %p621 = scmp.eq.s32.totalorder %s620, 0
      %s623 = sadd.s32 %s622, 1
      %s624 = scalar_select %p621, %s622, %s623
      %p627 = pneg %p621
      %p628 = scmp.eq.s32.totalorder %s69, 1
      %p629 = por %p627, %p628
      %p630 = scmp.ne.s32.totalorder %s622, %s625
      %p631 = scmp.eq.s32.totalorder %s69, 0
      %p632 = por %p630, %p631
      %p633 = scmp.ne.s32.totalorder %s622, %s625
      %p634 = scmp.eq.s32.totalorder %s74, 1
      %p635 = por %p633, %p634
      %p636 = scmp.ne.s32.totalorder %s625, %s626
      %p637 = scmp.eq.s32.totalorder %s74, 0
      %p638 = por %p636, %p637
      %p639 = scmp.ne.s32.totalorder %s625, %s626
      %p640 = scmp.eq.s32.totalorder %s75, 1
      %p641 = por %p639, %p640
      %p643 = scmp.ne.s32.totalorder %s626, %s642
      %p644 = scmp.eq.s32.totalorder %s75, 0
      %p645 = por %p643, %p644
      %s646 = ssub.s32 %s69, %s76
      %p647 = scmp.eq.s32.totalorder %s646, 0
      %s649 = sadd.s32 %s648, 1
      %s650 = scalar_select %p647, %s648, %s649
      %p653 = pneg %p647
      %p654 = scmp.eq.s32.totalorder %s69, 1
      %p655 = por %p653, %p654
      %p656 = scmp.ne.s32.totalorder %s648, %s651
      %p657 = scmp.eq.s32.totalorder %s69, 0
      %p658 = por %p656, %p657
      %p659 = scmp.ne.s32.totalorder %s648, %s651
      %p660 = scmp.eq.s32.totalorder %s74, 1
      %p661 = por %p659, %p660
      %p662 = scmp.ne.s32.totalorder %s651, %s652
      %p663 = scmp.eq.s32.totalorder %s74, 0
      %p664 = por %p662, %p663
      %p665 = scmp.ne.s32.totalorder %s651, %s652
      %p666 = scmp.eq.s32.totalorder %s75, 1
      %p667 = por %p665, %p666
      %p669 = scmp.ne.s32.totalorder %s652, %s668
      %p670 = scmp.eq.s32.totalorder %s75, 0
      %p671 = por %p669, %p670
      %s672 = ssub.s32 %s69, %s76
      %p673 = scmp.eq.s32.totalorder %s672, 0
      %s675 = sadd.s32 %s674, 1
      %s676 = scalar_select %p673, %s674, %s675
      %p679 = pneg %p673
      %p680 = scmp.eq.s32.totalorder %s69, 1
      %p681 = por %p679, %p680
      %p682 = scmp.ne.s32.totalorder %s674, %s677
      %p683 = scmp.eq.s32.totalorder %s69, 0
      %p684 = por %p682, %p683
      %p685 = scmp.ne.s32.totalorder %s674, %s677
      %p686 = scmp.eq.s32.totalorder %s74, 1
      %p687 = por %p685, %p686
      %p688 = scmp.ne.s32.totalorder %s677, %s678
      %p689 = scmp.eq.s32.totalorder %s74, 0
      %p690 = por %p688, %p689
      %p691 = scmp.ne.s32.totalorder %s677, %s678
      %p692 = scmp.eq.s32.totalorder %s75, 1
      %p693 = por %p691, %p692
      %p695 = scmp.ne.s32.totalorder %s678, %s694
      %p696 = scmp.eq.s32.totalorder %s75, 0
      %p697 = por %p695, %p696
      %s698 = ssub.s32 %s69, %s76
      %p699 = scmp.eq.s32.totalorder %s698, 0
      %s701 = sadd.s32 %s700, 1
      %s702 = scalar_select %p699, %s700, %s701
      %p705 = pneg %p699
      %p706 = scmp.eq.s32.totalorder %s69, 1
      %p707 = por %p705, %p706
      %p708 = scmp.ne.s32.totalorder %s700, %s703
      %p709 = scmp.eq.s32.totalorder %s69, 0
      %p710 = por %p708, %p709
      %p711 = scmp.ne.s32.totalorder %s700, %s703
      %p712 = scmp.eq.s32.totalorder %s74, 1
      %p713 = por %p711, %p712
      %p714 = scmp.ne.s32.totalorder %s703, %s704
      %p715 = scmp.eq.s32.totalorder %s74, 0
      %p716 = por %p714, %p715
      %p717 = scmp.ne.s32.totalorder %s703, %s704
      %p718 = scmp.eq.s32.totalorder %s75, 1
      %p719 = por %p717, %p718
      %p721 = scmp.ne.s32.totalorder %s704, %s720
      %p722 = scmp.eq.s32.totalorder %s75, 0
      %p723 = por %p721, %p722
      %s725 = sadd.s32 %s724, 1
      %p728 = scmp.eq.s32.totalorder %s69, 1
      %p729 = scmp.ne.s32.totalorder %s724, %s726
      %p730 = scmp.eq.s32.totalorder %s69, 0
      %p731 = por %p729, %p730
      %p732 = scmp.ne.s32.totalorder %s724, %s726
      %p733 = scmp.eq.s32.totalorder %s74, 1
      %p734 = por %p732, %p733
      %p735 = scmp.ne.s32.totalorder %s726, %s727
      %p736 = scmp.eq.s32.totalorder %s74, 0
      %p737 = por %p735, %p736
      %p738 = scmp.ne.s32.totalorder %s726, %s727
      %p739 = scmp.eq.s32.totalorder %s75, 1
      %p740 = por %p738, %p739
      %p742 = scmp.ne.s32.totalorder %s727, %s741
      %p743 = scmp.eq.s32.totalorder %s75, 0
      %p744 = por %p742, %p743
      %s746 = sadd.s32 %s745, 1
      %p749 = scmp.eq.s32.totalorder %s69, 1
      %p750 = scmp.ne.s32.totalorder %s745, %s747
      %p751 = scmp.eq.s32.totalorder %s69, 0
      %p752 = por %p750, %p751
      %p753 = scmp.ne.s32.totalorder %s745, %s747
      %p754 = scmp.eq.s32.totalorder %s74, 1
      %p755 = por %p753, %p754
      %p756 = scmp.ne.s32.totalorder %s747, %s748
      %p757 = scmp.eq.s32.totalorder %s74, 0
      %p758 = por %p756, %p757
      %p759 = scmp.ne.s32.totalorder %s747, %s748
      %p760 = scmp.eq.s32.totalorder %s75, 1
      %p761 = por %p759, %p760
      %p763 = scmp.ne.s32.totalorder %s748, %s762
      %p764 = scmp.eq.s32.totalorder %s75, 0
      %p765 = por %p763, %p764
      %s766 = ssub.s32 %s69, %s76
      %p767 = scmp.eq.s32.totalorder %s766, 0
      %s769 = sadd.s32 %s768, 1
      %s770 = scalar_select %p767, %s768, %s769
      %p773 = pneg %p767
      %p774 = scmp.eq.s32.totalorder %s69, 1
      %p775 = por %p773, %p774
      %p776 = scmp.ne.s32.totalorder %s768, %s771
      %p777 = scmp.eq.s32.totalorder %s69, 0
      %p778 = por %p776, %p777
      %p779 = scmp.ne.s32.totalorder %s768, %s771
      %p780 = scmp.eq.s32.totalorder %s74, 1
      %p781 = por %p779, %p780
      %p782 = scmp.ne.s32.totalorder %s771, %s772
      %p783 = scmp.eq.s32.totalorder %s74, 0
      %p784 = por %p782, %p783
      %p785 = scmp.ne.s32.totalorder %s771, %s772
      %p786 = scmp.eq.s32.totalorder %s75, 1
      %p787 = por %p785, %p786
      %p789 = scmp.ne.s32.totalorder %s772, %s788
      %p790 = scmp.eq.s32.totalorder %s75, 0
      %p791 = por %p789, %p790
      %s792 = ssub.s32 %s69, %s76
      %p793 = scmp.eq.s32.totalorder %s792, 0
      %s795 = sadd.s32 %s794, 1
      %s796 = scalar_select %p793, %s794, %s795
      %p799 = pneg %p793
      %p800 = scmp.eq.s32.totalorder %s69, 1
      %p801 = por %p799, %p800
      %p802 = scmp.ne.s32.totalorder %s794, %s797
      %p803 = scmp.eq.s32.totalorder %s69, 0
      %p804 = por %p802, %p803
      %p805 = scmp.ne.s32.totalorder %s794, %s797
      %p806 = scmp.eq.s32.totalorder %s74, 1
      %p807 = por %p805, %p806
      %p808 = scmp.ne.s32.totalorder %s797, %s798
      %p809 = scmp.eq.s32.totalorder %s74, 0
      %p810 = por %p808, %p809
      %p811 = scmp.ne.s32.totalorder %s797, %s798
      %p812 = scmp.eq.s32.totalorder %s75, 1
      %p813 = por %p811, %p812
      %p815 = scmp.ne.s32.totalorder %s798, %s814
      %p816 = scmp.eq.s32.totalorder %s75, 0
      %p817 = por %p815, %p816
      %p818 = scmp.le.s32.totalorder 1, %s69
      %p819 = scmp.lt.s32.totalorder %s69, 3
      %p820 = pnand %p818, %p819
      %p821 = pneg %p820
      // Predicated region
      $region9: #{ogfreq_forward.1} parent=5 // pred_check
        _
      $region10: #{ogfreq_forward.1} parent=5 // pred_check_branch
        %823 = sbr.rel (%p820) target = $region12
      $region11: #{ogfreq_forward.1} parent=5 // pred_region
        %s824 = ssub.s32 %s69, 1
        // Predicated region
        $region13: #{ogfreq_forward.1} parent=11 // pred_check
          %p825 = pneg %p90
        $region14: #{ogfreq_forward.1} parent=11 // pred_check_branch
          %827 = sbr.rel (%p825) target = $region16
        $region15: #{ogfreq_forward.1} parent=11 // pred_region
          %s829 = ssub.s32 32, 32
          %830 = vsyncadd [#allocation5], %s829
          %s832 = sshll.u32 %s1, 4
          %s833 = int_to_ptr.vmem [resolvable:$true] %s832
          %835 = dma.vmem_to_smem %s833, 32, [#allocation4], [#allocation5]
        $region16: #{ogfreq_forward.1} parent=11 // pred_fallthru
          _
        // Predicated region
        $region17: #{ogfreq_forward.1} parent=11 // pred_check
          %p836 = pneg %p111
        $region18: #{ogfreq_forward.1} parent=11 // pred_check_branch
          %838 = sbr.rel (%p836) target = $region20
        $region19: #{ogfreq_forward.1} parent=11 // pred_region
          _
        $region20: #{ogfreq_forward.1} parent=11 // pred_fallthru
          _
        // Predicated region
        $region21: #{ogfreq_forward.1} parent=11 // pred_check
          %p839 = pneg %p132
        $region22: #{ogfreq_forward.1} parent=11 // pred_check_branch
          %841 = sbr.rel (%p839) target = $region24
        $region23: #{ogfreq_forward.1} parent=11 // pred_region
          _
        $region24: #{ogfreq_forward.1} parent=11 // pred_fallthru
          _
        // Predicated region
        $region25: #{ogfreq_forward.1} parent=11 // pred_check
          %p842 = pneg %p153
        $region26: #{ogfreq_forward.1} parent=11 // pred_check_branch
          %844 = sbr.rel (%p842) target = $region28
        $region27: #{ogfreq_forward.1} parent=11 // pred_region
          _
        $region28: #{ogfreq_forward.1} parent=11 // pred_fallthru
          _
        // Predicated region
        $region29: #{ogfreq_forward.1} parent=11 // pred_check
          %p845 = pneg %p174
        $region30: #{ogfreq_forward.1} parent=11 // pred_check_branch
          %847 = sbr.rel (%p845) target = $region32
        $region31: #{ogfreq_forward.1} parent=11 // pred_region
          _
        $region32: #{ogfreq_forward.1} parent=11 // pred_fallthru
          _
        // Predicated region
        $region33: #{ogfreq_forward.1} parent=11 // pred_check
          %p848 = pneg %p195
        $region34: #{ogfreq_forward.1} parent=11 // pred_check_branch
          %850 = sbr.rel (%p848) target = $region36
        $region35: #{ogfreq_forward.1} parent=11 // pred_region
          _
        $region36: #{ogfreq_forward.1} parent=11 // pred_fallthru
          _
        // Predicated region
        $region37: #{ogfreq_forward.1} parent=11 // pred_check
          %p851 = pneg %p216
        $region38: #{ogfreq_forward.1} parent=11 // pred_check_branch
          %853 = sbr.rel (%p851) target = $region40
        $region39: #{ogfreq_forward.1} parent=11 // pred_region
          _
        $region40: #{ogfreq_forward.1} parent=11 // pred_fallthru
          _
        // Predicated region
        $region41: #{ogfreq_forward.1} parent=11 // pred_check
          %p854 = pneg %p237
        $region42: #{ogfreq_forward.1} parent=11 // pred_check_branch
          %856 = sbr.rel (%p854) target = $region44
        $region43: #{ogfreq_forward.1} parent=11 // pred_region
          _
        $region44: #{ogfreq_forward.1} parent=11 // pred_fallthru
          _
        // Predicated region
        $region45: #{ogfreq_forward.1} parent=11 // pred_check
          %p857 = pneg %p258
        $region46: #{ogfreq_forward.1} parent=11 // pred_check_branch
          %859 = sbr.rel (%p857) target = $region48
        $region47: #{ogfreq_forward.1} parent=11 // pred_region
          _
        $region48: #{ogfreq_forward.1} parent=11 // pred_fallthru
          _
        // Predicated region
        $region49: #{ogfreq_forward.1} parent=11 // pred_check
          %p860 = pneg %p279
        $region50: #{ogfreq_forward.1} parent=11 // pred_check_branch
          %862 = sbr.rel (%p860) target = $region52
        $region51: #{ogfreq_forward.1} parent=11 // pred_region
          _
        $region52: #{ogfreq_forward.1} parent=11 // pred_fallthru
          _
        // Predicated region
        $region53: #{ogfreq_forward.1} parent=11 // pred_check
          %p863 = pneg %p300
        $region54: #{ogfreq_forward.1} parent=11 // pred_check_branch
          %865 = sbr.rel (%p863) target = $region56
        $region55: #{ogfreq_forward.1} parent=11 // pred_region
          _
        $region56: #{ogfreq_forward.1} parent=11 // pred_fallthru
          _
      $region12: #{ogfreq_forward.1} parent=5 // pred_fallthru
        _
      %p866 = scmp.lt.s32.totalorder %s69, 2
      // Predicated region
      $region57: #{ogfreq_forward.1} parent=5 // pred_check
        %p867 = pneg %p866
      $region58: #{ogfreq_forward.1} parent=5 // pred_check_branch
        %869 = sbr.rel (%p867) target = $region60
      $region59: #{ogfreq_forward.1} parent=5 // pred_region
        // Predicated region
        $region61: #{ogfreq_forward.1} parent=59 // pred_check
          %p870 = pneg %p320
        $region62: #{ogfreq_forward.1} parent=59 // pred_check_branch
          %872 = sbr.rel (%p870) target = $region64
        $region63: #{ogfreq_forward.1} parent=59 // pred_region
          %p873 = scmp.lt.s32.totalorder %s69, 1
          %s874 = scalar_select %p873, %s69, 1
          %s875 = smul.addr %s874, 6
          %s876 = smul.addr %s875, 8
          %s877 = scalar_lea.vmem %s23, %s876
        $region64: #{ogfreq_forward.1} parent=59 // pred_fallthru
          _
        // Predicated region
        $region65: #{ogfreq_forward.1} parent=59 // pred_check
          %p878 = pneg %p346
        $region66: #{ogfreq_forward.1} parent=59 // pred_check_branch
          %880 = sbr.rel (%p878) target = $region68
        $region67: #{ogfreq_forward.1} parent=59 // pred_region
          %p881 = scmp.lt.s32.totalorder %s69, 1
          %s882 = scalar_select %p881, %s69, 1
          %s883 = smul.addr %s882, 2
          %s884 = smul.addr %s883, 8
          %s885 = scalar_lea.vmem %s25, %s884
        $region68: #{ogfreq_forward.1} parent=59 // pred_fallthru
          _
        // Predicated region
        $region69: #{ogfreq_forward.1} parent=59 // pred_check
          %p886 = pneg %p372
        $region70: #{ogfreq_forward.1} parent=59 // pred_check_branch
          %888 = sbr.rel (%p886) target = $region72
        $region71: #{ogfreq_forward.1} parent=59 // pred_region
          %p889 = scmp.lt.s32.totalorder %s69, 1
          %s890 = scalar_select %p889, %s69, 1
          %s891 = smul.addr %s890, 8
          %s892 = smul.addr %s891, 8
          %s893 = scalar_lea.vmem %s27, %s892
        $region72: #{ogfreq_forward.1} parent=59 // pred_fallthru
          _
        // Predicated region
        $region73: #{ogfreq_forward.1} parent=59 // pred_check
          %p894 = pneg %p398
        $region74: #{ogfreq_forward.1} parent=59 // pred_check_branch
          %896 = sbr.rel (%p894) target = $region76
        $region75: #{ogfreq_forward.1} parent=59 // pred_region
          %p897 = scmp.lt.s32.totalorder %s69, 1
          %s898 = scalar_select %p897, %s69, 1
          %s899 = smul.addr %s898, 8
          %s900 = smul.addr %s899, 8
          %s901 = scalar_lea.vmem %s29, %s900
        $region76: #{ogfreq_forward.1} parent=59 // pred_fallthru
          _
        // Predicated region
        $region77: #{ogfreq_forward.1} parent=59 // pred_check
          %p902 = pneg %p424
        $region78: #{ogfreq_forward.1} parent=59 // pred_check_branch
          %904 = sbr.rel (%p902) target = $region80
        $region79: #{ogfreq_forward.1} parent=59 // pred_region
          %p905 = scmp.lt.s32.totalorder %s69, 1
          %s906 = scalar_select %p905, %s69, 1
          %s907 = smul.addr %s906, 2
          %s908 = scalar_lea.vmem %s31, %s907
        $region80: #{ogfreq_forward.1} parent=59 // pred_fallthru
          _
        // Predicated region
        $region81: #{ogfreq_forward.1} parent=59 // pred_check
          %p909 = pneg %p450
        $region82: #{ogfreq_forward.1} parent=59 // pred_check_branch
          %911 = sbr.rel (%p909) target = $region84
        $region83: #{ogfreq_forward.1} parent=59 // pred_region
          %p912 = scmp.lt.s32.totalorder %s69, 1
          %s913 = scalar_select %p912, %s69, 1
          %s914 = smul.addr %s913, 2
          %s915 = scalar_lea.vmem %s33, %s914
        $region84: #{ogfreq_forward.1} parent=59 // pred_fallthru
          _
        // Predicated region
        $region85: #{ogfreq_forward.1} parent=59 // pred_check
          %p916 = pneg %p476
        $region86: #{ogfreq_forward.1} parent=59 // pred_check_branch
          %918 = sbr.rel (%p916) target = $region88
        $region87: #{ogfreq_forward.1} parent=59 // pred_region
          %p919 = scmp.lt.s32.totalorder %s69, 1
          %s920 = scalar_select %p919, %s69, 1
          %s921 = smul.addr %s920, 2
          %s922 = smul.addr %s921, 8
          %s923 = scalar_lea.vmem %s35, %s922
        $region88: #{ogfreq_forward.1} parent=59 // pred_fallthru
          _
        // Predicated region
        $region89: #{ogfreq_forward.1} parent=59 // pred_check
          %p924 = pneg %p502
        $region90: #{ogfreq_forward.1} parent=59 // pred_check_branch
          %926 = sbr.rel (%p924) target = $region92
        $region91: #{ogfreq_forward.1} parent=59 // pred_region
          %p927 = scmp.lt.s32.totalorder %s69, 1
          %s928 = scalar_select %p927, %s69, 1
          %s929 = smul.addr %s928, 4
          %s930 = smul.addr %s929, 8
          %s931 = scalar_lea.vmem %s37, %s930
        $region92: #{ogfreq_forward.1} parent=59 // pred_fallthru
          _
        // Predicated region
        $region93: #{ogfreq_forward.1} parent=59 // pred_check
          %p932 = pneg %p528
        $region94: #{ogfreq_forward.1} parent=59 // pred_check_branch
          %934 = sbr.rel (%p932) target = $region96
        $region95: #{ogfreq_forward.1} parent=59 // pred_region
          %p935 = scmp.lt.s32.totalorder %s69, 1
          %s936 = scalar_select %p935, %s69, 1
          %s937 = smul.addr %s936, 6
          %s938 = smul.addr %s937, 8
          %s939 = scalar_lea.vmem %s39, %s938
        $region96: #{ogfreq_forward.1} parent=59 // pred_fallthru
          _
        // Predicated region
        $region97: #{ogfreq_forward.1} parent=59 // pred_check
          %p940 = pneg %p554
        $region98: #{ogfreq_forward.1} parent=59 // pred_check_branch
          %942 = sbr.rel (%p940) target = $region100
        $region99: #{ogfreq_forward.1} parent=59 // pred_region
          %p943 = scmp.lt.s32.totalorder %s69, 1
          %s944 = scalar_select %p943, %s69, 1
          %s945 = smul.addr %s944, 2
          %s946 = smul.addr %s945, 8
          %s947 = scalar_lea.vmem %s41, %s946
        $region100: #{ogfreq_forward.1} parent=59 // pred_fallthru
          _
        // Predicated region
        $region101: #{ogfreq_forward.1} parent=59 // pred_check
          %p948 = pneg %p580
        $region102: #{ogfreq_forward.1} parent=59 // pred_check_branch
          %950 = sbr.rel (%p948) target = $region104
        $region103: #{ogfreq_forward.1} parent=59 // pred_region
          %p951 = scmp.lt.s32.totalorder %s69, 1
          %s952 = scalar_select %p951, %s69, 1
          %s953 = smul.addr %s952, 8
          %s954 = smul.addr %s953, 8
          %s955 = scalar_lea.vmem %s43, %s954
        $region104: #{ogfreq_forward.1} parent=59 // pred_fallthru
          _
        // Predicated region
        $region105: #{ogfreq_forward.1} parent=59 // pred_check
          %p956 = pneg %p606
        $region106: #{ogfreq_forward.1} parent=59 // pred_check_branch
          %958 = sbr.rel (%p956) target = $region108
        $region107: #{ogfreq_forward.1} parent=59 // pred_region
          %p959 = scmp.lt.s32.totalorder %s69, 1
          %s960 = scalar_select %p959, %s69, 1
          %s961 = smul.addr %s960, 8
          %s962 = smul.addr %s961, 8
          %s963 = scalar_lea.vmem %s45, %s962
        $region108: #{ogfreq_forward.1} parent=59 // pred_fallthru
          _
        // Predicated region
        $region109: #{ogfreq_forward.1} parent=59 // pred_check
          %p964 = pneg %p632
        $region110: #{ogfreq_forward.1} parent=59 // pred_check_branch
          %966 = sbr.rel (%p964) target = $region112
        $region111: #{ogfreq_forward.1} parent=59 // pred_region
          %p967 = scmp.lt.s32.totalorder %s69, 1
          %s968 = scalar_select %p967, %s69, 1
          %s969 = smul.addr %s968, 2
          %s970 = scalar_lea.vmem %s47, %s969
        $region112: #{ogfreq_forward.1} parent=59 // pred_fallthru
          _
        // Predicated region
        $region113: #{ogfreq_forward.1} parent=59 // pred_check
          %p971 = pneg %p658
        $region114: #{ogfreq_forward.1} parent=59 // pred_check_branch
          %973 = sbr.rel (%p971) target = $region116
        $region115: #{ogfreq_forward.1} parent=59 // pred_region
          %p974 = scmp.lt.s32.totalorder %s69, 1
          %s975 = scalar_select %p974, %s69, 1
          %s976 = smul.addr %s975, 2
          %s977 = scalar_lea.vmem %s49, %s976
        $region116: #{ogfreq_forward.1} parent=59 // pred_fallthru
          _
        // Predicated region
        $region117: #{ogfreq_forward.1} parent=59 // pred_check
          %p978 = pneg %p684
        $region118: #{ogfreq_forward.1} parent=59 // pred_check_branch
          %980 = sbr.rel (%p978) target = $region120
        $region119: #{ogfreq_forward.1} parent=59 // pred_region
          %p981 = scmp.lt.s32.totalorder %s69, 1
          %s982 = scalar_select %p981, %s69, 1
          %s983 = smul.addr %s982, 2
          %s984 = smul.addr %s983, 8
          %s985 = scalar_lea.vmem %s51, %s984
        $region120: #{ogfreq_forward.1} parent=59 // pred_fallthru
          _
        // Predicated region
        $region121: #{ogfreq_forward.1} parent=59 // pred_check
          %p986 = pneg %p710
        $region122: #{ogfreq_forward.1} parent=59 // pred_check_branch
          %988 = sbr.rel (%p986) target = $region124
        $region123: #{ogfreq_forward.1} parent=59 // pred_region
          %p989 = scmp.lt.s32.totalorder %s69, 1
          %s990 = scalar_select %p989, %s69, 1
          %s991 = smul.addr %s990, 4
          %s992 = smul.addr %s991, 8
          %s993 = scalar_lea.vmem %s53, %s992
        $region124: #{ogfreq_forward.1} parent=59 // pred_fallthru
          _
      $region60: #{ogfreq_forward.1} parent=5 // pred_fallthru
        _
      %p994 = scmp.le.s32.totalorder 1, %s69
      %p995 = scmp.lt.s32.totalorder %s69, 3
      %p996 = pnand %p994, %p995
      %p997 = pneg %p996
      // Predicated region
      $region125: #{ogfreq_forward.1} parent=5 // pred_check
        _
      $region126: #{ogfreq_forward.1} parent=5 // pred_check_branch
        %999 = sbr.rel (%p996) target = $region128
      $region127: #{ogfreq_forward.1} parent=5 // pred_region
        %s1000 = ssub.s32 %s69, 1
        // Predicated region
        $region129: #{ogfreq_forward.1} parent=127 // pred_check
          %p1001 = pneg %p90
        $region130: #{ogfreq_forward.1} parent=127 // pred_check_branch
          %1003 = sbr.rel (%p1001) target = $region132
        $region131: #{ogfreq_forward.1} parent=127 // pred_region
          %1004 = dma.done [#allocation5], 32
        $region132: #{ogfreq_forward.1} parent=127 // pred_fallthru
          _
        %1005 = sfence
        %p1006 = pneg %p90
        %p1007 = pneg %p87
        %p1008 = pneg %p111
        %p1009 = pneg %p108
        %p1010 = pneg %p132
        %p1011 = pneg %p129
        %p1012 = pneg %p153
        %p1013 = pneg %p150
        %p1014 = pneg %p174
        %p1015 = pneg %p171
        %p1016 = pneg %p195
        %p1017 = pneg %p192
        %p1018 = pneg %p216
        %p1019 = pneg %p213
        %p1020 = pneg %p237
        %p1021 = pneg %p234
        %p1022 = pneg %p258
        %p1023 = pneg %p255
        %p1024 = pneg %p279
        %p1025 = pneg %p276
        %p1026 = pneg %p300
        %p1027 = pneg %p297
        %p1028 = scmp.lt.s32.totalorder %s74, 1
        %s1029 = scalar_select %p1028, %s74, 1
        %s1030 = smul.addr %s1029, 6
        %s1031 = smul.addr %s1030, 8
        %s1032 = scalar_lea.vmem %s23, %s1031
        %p1033 = pneg %p326
        %p1034 = pneg %p323
        %p1035 = scmp.lt.s32.totalorder %s74, 1
        %s1036 = scalar_select %p1035, %s74, 1
        %s1037 = smul.addr %s1036, 2
        %s1038 = smul.addr %s1037, 8
        %s1039 = scalar_lea.vmem %s25, %s1038
        %p1040 = pneg %p352
        %p1041 = pneg %p349
        %p1042 = scmp.lt.s32.totalorder %s74, 1
        %s1043 = scalar_select %p1042, %s74, 1
        %s1044 = smul.addr %s1043, 8
        %s1045 = smul.addr %s1044, 8
        %s1046 = scalar_lea.vmem %s27, %s1045
        %p1047 = pneg %p378
        %p1048 = pneg %p375
        %p1049 = scmp.lt.s32.totalorder %s74, 1
        %s1050 = scalar_select %p1049, %s74, 1
        %s1051 = smul.addr %s1050, 8
        %s1052 = smul.addr %s1051, 8
        %s1053 = scalar_lea.vmem %s29, %s1052
        %p1054 = pneg %p404
        %p1055 = pneg %p401
        %p1056 = scmp.lt.s32.totalorder %s74, 1
        %s1057 = scalar_select %p1056, %s74, 1
        %s1058 = smul.addr %s1057, 2
        %s1059 = scalar_lea.vmem %s31, %s1058
        %p1060 = pneg %p430
        %p1061 = pneg %p427
        %p1062 = scmp.lt.s32.totalorder %s74, 1
        %s1063 = scalar_select %p1062, %s74, 1
        %s1064 = smul.addr %s1063, 2
        %s1065 = scalar_lea.vmem %s33, %s1064
        %p1066 = pneg %p456
        %p1067 = pneg %p453
        %p1068 = scmp.lt.s32.totalorder %s74, 1
        %s1069 = scalar_select %p1068, %s74, 1
        %s1070 = smul.addr %s1069, 2
        %s1071 = smul.addr %s1070, 8
        %s1072 = scalar_lea.vmem %s35, %s1071
        %p1073 = pneg %p482
        %p1074 = pneg %p479
        %p1075 = scmp.lt.s32.totalorder %s74, 1
        %s1076 = scalar_select %p1075, %s74, 1
        %s1077 = smul.addr %s1076, 4
        %s1078 = smul.addr %s1077, 8
        %s1079 = scalar_lea.vmem %s37, %s1078
        %p1080 = pneg %p508
        %p1081 = pneg %p505
        %p1082 = scmp.lt.s32.totalorder %s74, 1
        %s1083 = scalar_select %p1082, %s74, 1
        %s1084 = smul.addr %s1083, 6
        %s1085 = smul.addr %s1084, 8
        %s1086 = scalar_lea.vmem %s39, %s1085
        %p1087 = pneg %p534
        %p1088 = pneg %p531
        %p1089 = scmp.lt.s32.totalorder %s74, 1
        %s1090 = scalar_select %p1089, %s74, 1
        %s1091 = smul.addr %s1090, 2
        %s1092 = smul.addr %s1091, 8
        %s1093 = scalar_lea.vmem %s41, %s1092
        %p1094 = pneg %p560
        %p1095 = pneg %p557
        %p1096 = scmp.lt.s32.totalorder %s74, 1
        %s1097 = scalar_select %p1096, %s74, 1
        %s1098 = smul.addr %s1097, 8
        %s1099 = smul.addr %s1098, 8
        %s1100 = scalar_lea.vmem %s43, %s1099
        %p1101 = pneg %p586
        %p1102 = pneg %p583
        %p1103 = scmp.lt.s32.totalorder %s74, 1
        %s1104 = scalar_select %p1103, %s74, 1
        %s1105 = smul.addr %s1104, 8
        %s1106 = smul.addr %s1105, 8
        %s1107 = scalar_lea.vmem %s45, %s1106
        %p1108 = pneg %p612
        %p1109 = pneg %p609
        %p1110 = scmp.lt.s32.totalorder %s74, 1
        %s1111 = scalar_select %p1110, %s74, 1
        %s1112 = smul.addr %s1111, 2
        %s1113 = scalar_lea.vmem %s47, %s1112
        %p1114 = pneg %p638
        %p1115 = pneg %p635
        %p1116 = scmp.lt.s32.totalorder %s74, 1
        %s1117 = scalar_select %p1116, %s74, 1
        %s1118 = smul.addr %s1117, 2
        %s1119 = scalar_lea.vmem %s49, %s1118
        %p1120 = pneg %p664
        %p1121 = pneg %p661
        %p1122 = scmp.lt.s32.totalorder %s74, 1
        %s1123 = scalar_select %p1122, %s74, 1
        %s1124 = smul.addr %s1123, 2
        %s1125 = smul.addr %s1124, 8
        %s1126 = scalar_lea.vmem %s51, %s1125
        %p1127 = pneg %p690
        %p1128 = pneg %p687
        %p1129 = scmp.lt.s32.totalorder %s74, 1
        %s1130 = scalar_select %p1129, %s74, 1
        %s1131 = smul.addr %s1130, 4
        %s1132 = smul.addr %s1131, 8
        %s1133 = scalar_lea.vmem %s53, %s1132
        %p1134 = pneg %p716
        %p1135 = pneg %p713
        %p1136 = pneg %p737
        %p1137 = pneg %p734
        %p1138 = pneg %p758
        %p1139 = pneg %p755
        %p1140 = pneg %p784
        %p1141 = pneg %p781
        %p1142 = scmp.lt.s32.totalorder %s74, 1
        %s1143 = scalar_select %p1142, %s74, 1
        %s1144 = smul.addr %s1143, 2
        %s1145 = scalar_lea.vmem %s59, %s1144
        %p1146 = pneg %p810
        %p1147 = pneg %p807
        %p1148 = scmp.lt.s32.totalorder %s74, 1
        %s1149 = scalar_select %p1148, %s74, 1
        %s1150 = smul.addr %s1149, 2
        %s1151 = scalar_lea.vmem %s61, %s1150
        %p1152 = scmp.lt.s32.totalorder %s74, 1
        %s1153 = scalar_select %p1152, %s74, 1
        %s1154 = smul.addr %s1153, 6
        %s1155 = smul.addr %s1154, 8
        %s1156 = scalar_lea.vmem %s23, %s1155
        %p1157 = scmp.lt.s32.totalorder %s74, 1
        %s1158 = scalar_select %p1157, %s74, 1
        %s1159 = smul.addr %s1158, 2
        %s1160 = smul.addr %s1159, 8
        %s1161 = scalar_lea.vmem %s25, %s1160
        %p1162 = scmp.lt.s32.totalorder %s74, 1
        %s1163 = scalar_select %p1162, %s74, 1
        %s1164 = smul.addr %s1163, 8
        %s1165 = smul.addr %s1164, 8
        %s1166 = scalar_lea.vmem %s27, %s1165
        %p1167 = scmp.lt.s32.totalorder %s74, 1
        %s1168 = scalar_select %p1167, %s74, 1
        %s1169 = smul.addr %s1168, 8
        %s1170 = smul.addr %s1169, 8
        %s1171 = scalar_lea.vmem %s29, %s1170
        %p1172 = scmp.lt.s32.totalorder %s74, 1
        %s1173 = scalar_select %p1172, %s74, 1
        %s1174 = smul.addr %s1173, 2
        %s1175 = scalar_lea.vmem %s31, %s1174
        %p1176 = scmp.lt.s32.totalorder %s74, 1
        %s1177 = scalar_select %p1176, %s74, 1
        %s1178 = smul.addr %s1177, 2
        %s1179 = scalar_lea.vmem %s33, %s1178
        %p1180 = scmp.lt.s32.totalorder %s74, 1
        %s1181 = scalar_select %p1180, %s74, 1
        %s1182 = smul.addr %s1181, 2
        %s1183 = smul.addr %s1182, 8
        %s1184 = scalar_lea.vmem %s35, %s1183
        %p1185 = scmp.lt.s32.totalorder %s74, 1
        %s1186 = scalar_select %p1185, %s74, 1
        %s1187 = smul.addr %s1186, 4
        %s1188 = smul.addr %s1187, 8
        %s1189 = scalar_lea.vmem %s37, %s1188
        %p1190 = scmp.lt.s32.totalorder %s74, 1
        %s1191 = scalar_select %p1190, %s74, 1
        %s1192 = smul.addr %s1191, 6
        %s1193 = smul.addr %s1192, 8
        %s1194 = scalar_lea.vmem %s39, %s1193
        %p1195 = scmp.lt.s32.totalorder %s74, 1
        %s1196 = scalar_select %p1195, %s74, 1
        %s1197 = smul.addr %s1196, 2
        %s1198 = smul.addr %s1197, 8
        %s1199 = scalar_lea.vmem %s41, %s1198
        %p1200 = scmp.lt.s32.totalorder %s74, 1
        %s1201 = scalar_select %p1200, %s74, 1
        %s1202 = smul.addr %s1201, 8
        %s1203 = smul.addr %s1202, 8
        %s1204 = scalar_lea.vmem %s43, %s1203
        %p1205 = scmp.lt.s32.totalorder %s74, 1
        %s1206 = scalar_select %p1205, %s74, 1
        %s1207 = smul.addr %s1206, 8
        %s1208 = smul.addr %s1207, 8
        %s1209 = scalar_lea.vmem %s45, %s1208
        %p1210 = scmp.lt.s32.totalorder %s74, 1
        %s1211 = scalar_select %p1210, %s74, 1
        %s1212 = smul.addr %s1211, 2
        %s1213 = scalar_lea.vmem %s47, %s1212
        %p1214 = scmp.lt.s32.totalorder %s74, 1
        %s1215 = scalar_select %p1214, %s74, 1
        %s1216 = smul.addr %s1215, 2
        %s1217 = scalar_lea.vmem %s49, %s1216
        %p1218 = scmp.lt.s32.totalorder %s74, 1
        %s1219 = scalar_select %p1218, %s74, 1
        %s1220 = smul.addr %s1219, 2
        %s1221 = smul.addr %s1220, 8
        %s1222 = scalar_lea.vmem %s51, %s1221
        %p1223 = scmp.lt.s32.totalorder %s74, 1
        %s1224 = scalar_select %p1223, %s74, 1
        %s1225 = smul.addr %s1224, 4
        %s1226 = smul.addr %s1225, 8
        %s1227 = scalar_lea.vmem %s53, %s1226
        %p1228 = scmp.lt.s32.totalorder %s74, 1
        %s1229 = scalar_select %p1228, %s74, 1
        %s1230 = smul.addr %s1229, 2
        %s1231 = scalar_lea.vmem %s59, %s1230
        %p1232 = scmp.lt.s32.totalorder %s74, 1
        %s1233 = scalar_select %p1232, %s74, 1
        %s1234 = smul.addr %s1233, 2
        %s1235 = scalar_lea.vmem %s61, %s1234
        %p1236 = scmp.eq.s32.totalorder %s74, 0
        // Predicated region
        $region133: #{ogfreq_forward.1} parent=127 // pred_check
          %p1237 = pneg %p1236
        $region134: #{ogfreq_forward.1} parent=127 // pred_check_branch
          %1239 = sbr.rel (%p1237) target = $region136
        $region135: #{ogfreq_forward.1} parent=127 // pred_region
          %vm1240 = vcmask 517120
          %1241 = vst.msk [vmem:[#allocation2] sm:$0x3] %vm1240, 0.0
          %vm1242 = vcmask 123904
          %1243 = vst.msk [vmem:[#allocation3] sm:$0x3] %vm1242, 0.0
        $region136: #{ogfreq_forward.1} parent=127 // pred_fallthru
          _
        %v1244 = vld [vmem:[%s3] sm:$0x3]
        %v1245 = vld [vmem:[#allocation2] sm:$0x3]
        %v1246 = vld [vmem:[#allocation3] sm:$0x3]
        %v1247 = vld [vmem:[%s17] sm:$0x3]
        %v1248 = vld [vmem:[%s19] sm:$0xff]
        %v1249 = vld [vmem:[%s19 + $0x8] sm:$0xff]
        %v1250 = vld [vmem:[%s19 + $0x10] sm:$0xff]
        %v1251 = vld [vmem:[%s19 + $0x18] sm:$0xff]
        %v1252 = vld [vmem:[%s19 + $0x20] sm:$0xff]
        %v1253 = vld [vmem:[%s19 + $0x28] sm:$0xff]
        %v1254 = vld [vmem:[%s19 + $0x30] sm:$0xff]
        %v1255 = vld [vmem:[%s19 + $0x38] sm:$0xff]
        %v1256 = vld [vmem:[%s21] sm:$0x3]
        %v1257 = vadd.f32 %v1246, %v1244
        %v1258 = vld [vmem:[%s5] sm:$0xff]
        %v1259 = vld [vmem:[%s5 + $0x8] sm:$0xff]
        %vm1260 = vcmask 130048
        %v1262 = vsel %vm1260, %v1257, 0
        %1264 = vmatprep.subr.mxu0 0.0
        %1265 = vmatpush1.msra.mxu0 %v1258
        %1266 = vmatprep.subr.mxu0 0.0
        %1267 = vmatpush1.msra.mxu0 %v1259
        %1268 = vmatprep.subr.mxu0 0.0
        %1269 = vmatpush1.msra.mxu0 0.0
        %1270 = vmatprep.subr.mxu0 0.0
        %1271 = vmatpush1.msra.mxu0 0.0
        %1272 = vmatprep.subr.mxu0 0.0
        %1273 = vmatpush1.msra.mxu0 0.0
        %1274 = vmatprep.subr.mxu0 0.0
        %1275 = vmatpush1.msra.mxu0 0.0
        %1276 = vmatprep.subr.mxu0 0.0
        %1277 = vmatpush1.msra.mxu0 0.0
        %1278 = vmatprep.subr.mxu0 0.0
        %1279 = vmatpush1.msra.mxu0 0.0
        %1280 = vmatprep.subr.mxu0 0.0
        %1281 = vmatpush1.msra.mxu0 0.0
        %1282 = vmatprep.subr.mxu0 0.0
        %1283 = vmatpush1.msra.mxu0 0.0
        %1284 = vmatprep.subr.mxu0 0.0
        %1285 = vmatpush1.msra.mxu0 0.0
        %1286 = vmatprep.subr.mxu0 0.0
        %1287 = vmatpush1.msra.mxu0 0.0
        %1288 = vmatprep.subr.mxu0 0.0
        %1289 = vmatpush1.msra.mxu0 0.0
        %1290 = vmatprep.subr.mxu0 0.0
        %1291 = vmatpush1.msra.mxu0 0.0
        %1292 = vmatprep.subr.mxu0 0.0
        %1293 = vmatpush1.msra.mxu0 0.0
        %1294 = vmatprep.subr.mxu0 0.0
        %1295 = vmatpush1.msra.mxu0 0.0
        %1296 = vmatprep.subr.mxu0 0.0
        %1297 = vmatpush1.msra.mxu0 0.0
        %1298 = vmatprep.subr.mxu0 0.0
        %1299 = vmatpush1.msra.mxu0 0.0
        %1300 = vmatprep.subr.mxu0 0.0
        %1301 = vmatpush1.msra.mxu0 0.0
        %1302 = vmatprep.subr.mxu0 0.0
        %1303 = vmatpush1.msra.mxu0 0.0
        %1304 = vmatprep.subr.mxu0 0.0
        %1305 = vmatpush1.msra.mxu0 0.0
        %1306 = vmatprep.subr.mxu0 0.0
        %1307 = vmatpush1.msra.mxu0 0.0
        %1308 = vmatprep.subr.mxu0 0.0
        %1309 = vmatpush1.msra.mxu0 0.0
        %1310 = vmatprep.subr.mxu0 0.0
        %1311 = vmatpush1.msra.mxu0 0.0
        %1312 = vmatprep.subr.mxu0 0.0
        %1313 = vmatpush1.msra.mxu0 0.0
        %1314 = vmatprep.subr.mxu0 0.0
        %1315 = vmatpush1.msra.mxu0 0.0
        %1316 = vmatprep.subr.mxu0 0.0
        %1317 = vmatpush1.msra.mxu0 0.0
        %1318 = vmatprep.subr.mxu0 0.0
        %1319 = vmatpush1.msra.mxu0 0.0
        %1320 = vmatprep.subr.mxu0 0.0
        %1321 = vmatpush1.msra.mxu0 0.0
        %1322 = vmatprep.subr.mxu0 0.0
        %1323 = vmatpush1.msra.mxu0 0.0
        %1324 = vmatprep.subr.mxu0 0.0
        %1325 = vmatpush1.msra.mxu0 0.0
        %1326 = vmatprep.subr.mxu0 0.0
        %1327 = vmatpush1.msra.mxu0 0.0
        %1328 = vmatprep.mubr.f32.mxu0 0.0
        %1329 = vmatmul.mubr.f32.gmra.mrb[0].mxu0 %v1262
        %v1330 = vpop.f32.mrb[0].mxu0
        %v1331 = vadd.f32 0.0, %v1330
        %v1332 = vpop.f32.mrb[0].mxu0
        %1333 = vdwg.mxu0
        %v1334 = vmul.f32 %v1257, 2.0
        %v1335 = vld [vmem:[%s7] sm:$0xff]
        %v1336 = vld [vmem:[%s7 + $0x8] sm:$0xff]
        %v1337 = vld [vmem:[%s7 + $0x10] sm:$0xff]
        %v1338 = vld [vmem:[%s7 + $0x18] sm:$0xff]
        %v1339 = vld [vmem:[%s7 + $0x20] sm:$0xff]
        %v1340 = vld [vmem:[%s7 + $0x28] sm:$0xff]
        %v1341 = vld [vmem:[%s7 + $0x30] sm:$0xff]
        %v1342 = vld [vmem:[%s7 + $0x38] sm:$0xff]
        %v1343 = vld [vmem:[%s7 + $0x40] sm:$0xff]
        %v1344 = vld [vmem:[%s7 + $0x48] sm:$0xff]
        %v1345 = vld [vmem:[%s7 + $0x50] sm:$0xff]
        %v1346 = vld [vmem:[%s7 + $0x58] sm:$0xff]
        %v1347 = vld [vmem:[%s7 + $0x60] sm:$0xff]
        %v1348 = vld [vmem:[%s7 + $0x68] sm:$0xff]
        %v1349 = vld [vmem:[%s7 + $0x70] sm:$0xff]
        %v1350 = vld [vmem:[%s7 + $0x78] sm:$0xff]
        %1351 = vmatprep.subr.mxu0 0.0
        %1352 = vmatpush1.msra.mxu0 %v1335
        %1353 = vmatprep.subr.mxu0 0.0
        %1354 = vmatpush1.msra.mxu0 %v1336
        %1355 = vmatprep.subr.mxu0 0.0
        %1356 = vmatpush1.msra.mxu0 %v1337
        %1357 = vmatprep.subr.mxu0 0.0
        %1358 = vmatpush1.msra.mxu0 %v1338
        %1359 = vmatprep.subr.mxu0 0.0
        %1360 = vmatpush1.msra.mxu0 %v1339
        %1361 = vmatprep.subr.mxu0 0.0
        %1362 = vmatpush1.msra.mxu0 %v1340
        %1363 = vmatprep.subr.mxu0 0.0
        %1364 = vmatpush1.msra.mxu0 %v1341
        %1365 = vmatprep.subr.mxu0 0.0
        %1366 = vmatpush1.msra.mxu0 %v1342
        %1367 = vmatprep.subr.mxu0 0.0
        %1368 = vmatpush1.msra.mxu0 %v1343
        %1369 = vmatprep.subr.mxu0 0.0
        %1370 = vmatpush1.msra.mxu0 %v1344
        %1371 = vmatprep.subr.mxu0 0.0
        %1372 = vmatpush1.msra.mxu0 %v1345
        %1373 = vmatprep.subr.mxu0 0.0
        %1374 = vmatpush1.msra.mxu0 %v1346
        %1375 = vmatprep.subr.mxu0 0.0
        %1376 = vmatpush1.msra.mxu0 %v1347
        %1377 = vmatprep.subr.mxu0 0.0
        %1378 = vmatpush1.msra.mxu0 %v1348
        %1379 = vmatprep.subr.mxu0 0.0
        %1380 = vmatpush1.msra.mxu0 %v1349
        %1381 = vmatprep.subr.mxu0 0.0
        %1382 = vmatpush1.msra.mxu0 %v1350
        %1383 = vmatprep.subr.mxu0 0.0
        %1384 = vmatpush1.msra.mxu0 0.0
        %1385 = vmatprep.subr.mxu0 0.0
        %1386 = vmatpush1.msra.mxu0 0.0
        %1387 = vmatprep.subr.mxu0 0.0
        %1388 = vmatpush1.msra.mxu0 0.0
        %1389 = vmatprep.subr.mxu0 0.0
        %1390 = vmatpush1.msra.mxu0 0.0
        %1391 = vmatprep.subr.mxu0 0.0
        %1392 = vmatpush1.msra.mxu0 0.0
        %1393 = vmatprep.subr.mxu0 0.0
        %1394 = vmatpush1.msra.mxu0 0.0
        %1395 = vmatprep.subr.mxu0 0.0
        %1396 = vmatpush1.msra.mxu0 0.0
        %1397 = vmatprep.subr.mxu0 0.0
        %1398 = vmatpush1.msra.mxu0 0.0
        %1399 = vmatprep.subr.mxu0 0.0
        %1400 = vmatpush1.msra.mxu0 0.0
        %1401 = vmatprep.subr.mxu0 0.0
        %1402 = vmatpush1.msra.mxu0 0.0
        %1403 = vmatprep.subr.mxu0 0.0
        %1404 = vmatpush1.msra.mxu0 0.0
        %1405 = vmatprep.subr.mxu0 0.0
        %1406 = vmatpush1.msra.mxu0 0.0
        %1407 = vmatprep.subr.mxu0 0.0
        %1408 = vmatpush1.msra.mxu0 0.0
        %1409 = vmatprep.subr.mxu0 0.0
        %1410 = vmatpush1.msra.mxu0 0.0
        %1411 = vmatprep.subr.mxu0 0.0
        %1412 = vmatpush1.msra.mxu0 0.0
        %1413 = vmatprep.subr.mxu0 0.0
        %1414 = vmatpush1.msra.mxu0 0.0
        %1415 = vmatprep.mubr.f32.mxu0 0.0
        %1416 = vmatmul.mubr.f32.gmra.mrb[0].mxu0 %v1331
        %v1417 = vpop.f32.mrb[0].mxu0
        %v1418 = vadd.f32 0.0, %v1417
        %v1419 = vpop.f32.mrb[0].mxu0
        %1420 = vdwg.mxu0
        %v1421 = vsub.f32 %v1334, %v1418
        %1423 = vrot.lane.b32.xlu0 %v1331, 64
        %v1424 = vpop.permute.xlu0 %1423
        %v1426 = vmul.f32 %v1245, %v1424
        %1428 = vrot.lane.b32.xlu0 %v1426, 96
        %v1429 = vpop.permute.xlu0 %1428
        %v1431 = vadd.f32 %v1426, %v1429
        %1432 = vrot.lane.b32.xlu0 %v1331, 32
        %v1433 = vpop.permute.xlu0 %1432
        %v1435 = vmul.f32 %v1245, %v1433
        %1436 = vrot.lane.b32.xlu0 %v1331, 96
        %v1437 = vpop.permute.xlu0 %1436
        %v1439 = vmul.f32 %v1245, %v1437
        %1441 = vrot.lane.b32.xlu0 %v1439, 96
        %v1442 = vpop.permute.xlu0 %1441
        %v1444 = vsub.f32 %v1435, %v1442
        %1446 = vrot.lane.b32.xlu0 %v1444, 32
        %v1447 = vpop.permute.xlu0 %1446
        %vm1449 = vcmask 261120
        %v1450 = vsel %vm1449, %v1431, %v1447
        %v1451 = vmul.f32 %v1450, 0.032258064
        %v1452 = vadd.f32 %v1331, %v1451
        %v1453 = vmul.f32 %v1245, %v1452
        %1455 = vrot.lane.b32.xlu0 %v1453, 96
        %v1456 = vpop.permute.xlu0 %1455
        %v1458 = vsub.f32 %v1453, %v1456
        %1460 = vrot.lane.b32.xlu0 %v1452, 96
        %v1461 = vpop.permute.xlu0 %1460
        %v1463 = vmul.f32 %v1245, %v1461
        %1464 = vrot.lane.b32.xlu0 %v1452, 32
        %v1465 = vpop.permute.xlu0 %1464
        %v1467 = vmul.f32 %v1245, %v1465
        %1469 = vrot.lane.b32.xlu0 %v1467, 96
        %v1470 = vpop.permute.xlu0 %1469
        %v1472 = vadd.f32 %v1463, %v1470
        %1474 = vrot.lane.b32.xlu0 %v1472, 32
        %v1475 = vpop.permute.xlu0 %1474
        %v1477 = vsel %vm1449, %v1458, %v1475
        %v1478 = vmul.f32 %v1477, 0.032258064
        %1480 = vrot.lane.b32.xlu0 %v1478, 64
        %v1481 = vpop.permute.xlu0 %1480
        %vm1483 = vcmask 523264
        %v1484 = vsel %vm1483, %v1452, %v1481
        %1485 = vmatprep.subr.mxu0 0.0
        %1486 = vmatpush1.msra.mxu0 %v1335
        %1487 = vmatprep.subr.mxu0 0.0
        %1488 = vmatpush1.msra.mxu0 %v1336
        %1489 = vmatprep.subr.mxu0 0.0
        %1490 = vmatpush1.msra.mxu0 %v1337
        %1491 = vmatprep.subr.mxu0 0.0
        %1492 = vmatpush1.msra.mxu0 %v1338
        %1493 = vmatprep.subr.mxu0 0.0
        %1494 = vmatpush1.msra.mxu0 %v1339
        %1495 = vmatprep.subr.mxu0 0.0
        %1496 = vmatpush1.msra.mxu0 %v1340
        %1497 = vmatprep.subr.mxu0 0.0
        %1498 = vmatpush1.msra.mxu0 %v1341
        %1499 = vmatprep.subr.mxu0 0.0
        %1500 = vmatpush1.msra.mxu0 %v1342
        %1501 = vmatprep.subr.mxu0 0.0
        %1502 = vmatpush1.msra.mxu0 %v1343
        %1503 = vmatprep.subr.mxu0 0.0
        %1504 = vmatpush1.msra.mxu0 %v1344
        %1505 = vmatprep.subr.mxu0 0.0
        %1506 = vmatpush1.msra.mxu0 %v1345
        %1507 = vmatprep.subr.mxu0 0.0
        %1508 = vmatpush1.msra.mxu0 %v1346
        %1509 = vmatprep.subr.mxu0 0.0
        %1510 = vmatpush1.msra.mxu0 %v1347
        %1511 = vmatprep.subr.mxu0 0.0
        %1512 = vmatpush1.msra.mxu0 %v1348
        %1513 = vmatprep.subr.mxu0 0.0
        %1514 = vmatpush1.msra.mxu0 %v1349
        %1515 = vmatprep.subr.mxu0 0.0
        %1516 = vmatpush1.msra.mxu0 %v1350
        %1517 = vmatprep.subr.mxu0 0.0
        %1518 = vmatpush1.msra.mxu0 0.0
        %1519 = vmatprep.subr.mxu0 0.0
        %1520 = vmatpush1.msra.mxu0 0.0
        %1521 = vmatprep.subr.mxu0 0.0
        %1522 = vmatpush1.msra.mxu0 0.0
        %1523 = vmatprep.subr.mxu0 0.0
        %1524 = vmatpush1.msra.mxu0 0.0
        %1525 = vmatprep.subr.mxu0 0.0
        %1526 = vmatpush1.msra.mxu0 0.0
        %1527 = vmatprep.subr.mxu0 0.0
        %1528 = vmatpush1.msra.mxu0 0.0
        %1529 = vmatprep.subr.mxu0 0.0
        %1530 = vmatpush1.msra.mxu0 0.0
        %1531 = vmatprep.subr.mxu0 0.0
        %1532 = vmatpush1.msra.mxu0 0.0
        %1533 = vmatprep.subr.mxu0 0.0
        %1534 = vmatpush1.msra.mxu0 0.0
        %1535 = vmatprep.subr.mxu0 0.0
        %1536 = vmatpush1.msra.mxu0 0.0
        %1537 = vmatprep.subr.mxu0 0.0
        %1538 = vmatpush1.msra.mxu0 0.0
        %1539 = vmatprep.subr.mxu0 0.0
        %1540 = vmatpush1.msra.mxu0 0.0
        %1541 = vmatprep.subr.mxu0 0.0
        %1542 = vmatpush1.msra.mxu0 0.0
        %1543 = vmatprep.subr.mxu0 0.0
        %1544 = vmatpush1.msra.mxu0 0.0
        %1545 = vmatprep.subr.mxu0 0.0
        %1546 = vmatpush1.msra.mxu0 0.0
        %1547 = vmatprep.subr.mxu0 0.0
        %1548 = vmatpush1.msra.mxu0 0.0
        %1549 = vmatprep.mubr.f32.mxu0 0.0
        %1550 = vmatmul.mubr.f32.gmra.mrb[0].mxu0 %v1484
        %v1551 = vpop.f32.mrb[0].mxu0
        %v1552 = vadd.f32 0.0, %v1551
        %v1553 = vpop.f32.mrb[0].mxu0
        %1554 = vdwg.mxu0
        %v1555 = vsub.f32 %v1552, %v1257
        %v1556 = vadd.f32 %v1421, %v1555
        %s1557 = smul.u32 %s74, 128
        %s1558 = sld [smem:[#allocation4 + %s1557]]
        %v1559 = vrot.slane %v1452, 1
        %1560 = vrot.lane.b32.xlu0 %v1559, 32
        %v1561 = vpop.permute.xlu0 %1560
        %v1563 = vsel %vm1449, %v1452, %v1561
        %v1565 = vsel %vm1449, %v1461, %v1559
        %v1566 = vlaneseq
        %v1567 = vshrl.u32 %v1566, 7
        %vm1568 = vcmp.eq.s32.totalorder %v1567, 0
        %v1569 = vsel %vm1568, 1, 0
        %vm1570 = vcmp.eq.s32.totalorder %v1569, 1
        %v1571 = vlaneseq
        %v1572 = vshrl.u32 %v1571, 7
        %v1573 = vsub.s32 0, %v1572
        %v1574 = vrot.slane %v1563, %v1573
        %v1575 = vlaneseq
        %v1576 = vshrl.u32 %v1575, 7
        %v1577 = vsub.s32 0, %v1576
        %v1578 = vrot.slane %v1565, %v1577
        %v1579 = vsel %vm1570, %v1574, %v1578
        %v1580 = vld [vmem:[%s1156] sm:$0xff]
        %v1581 = vld [vmem:[%s1156 + $0x8] sm:$0xff]
        %v1582 = vld [vmem:[%s1156 + $0x10] sm:$0xff]
        %v1583 = vld [vmem:[%s1156 + $0x18] sm:$0xff]
        %v1584 = vld [vmem:[%s1156 + $0x20] sm:$0xff]
        %v1585 = vld [vmem:[%s1156 + $0x28] sm:$0xff]
        %v1586 = vld [vmem:[%s1161] sm:$0xff]
        %v1587 = vld [vmem:[%s1161 + $0x8] sm:$0xff]
        %1589 = vrot.lane.b32.xlu0 %v1579, 65
        %v1590 = vpop.permute.xlu0 %1589
        %1592 = vrot.lane.b32.xlu0 %v1579, 1
        %v1593 = vpop.permute.xlu0 %1592
        %vm1595 = vcmask 7168
        %v1596 = vsel %vm1595, %v1590, %v1593
        %v1597 = vlaneseq
        %v1598 = vshrl.u32 %v1597, 7
        %v1599 = vsub.s32 0, %v1598
        %v1600 = vrot.slane %v1247, %v1599
        %v1601 = vmul.f32 %v1596, %v1600
        %vm1602 = vcmask 15360
        %v1604 = vsel %vm1602, %v1580, 0
        %v1607 = vsel %vm1602, %v1581, 0
        %vm1609 = vcmask 1041408
        %v1611 = vsel %vm1609, %v1601, 0
        %1613 = vmatprep.subr.mxu0 0.0
        %1614 = vmatpush1.msra.mxu0 %v1611
        %1615 = vmatprep.subr.mxu0 0.0
        %1616 = vmatpush1.msra.mxu0 0.0
        %1617 = vmatprep.subr.mxu0 0.0
        %1618 = vmatpush1.msra.mxu0 0.0
        %1619 = vmatprep.subr.mxu0 0.0
        %1620 = vmatpush1.msra.mxu0 0.0
        %1621 = vmatprep.subr.mxu0 0.0
        %1622 = vmatpush1.msra.mxu0 0.0
        %1623 = vmatprep.subr.mxu0 0.0
        %1624 = vmatpush1.msra.mxu0 0.0
        %1625 = vmatprep.subr.mxu0 0.0
        %1626 = vmatpush1.msra.mxu0 0.0
        %1627 = vmatprep.subr.mxu0 0.0
        %1628 = vmatpush1.msra.mxu0 0.0
        %1629 = vmatprep.subr.mxu0 0.0
        %1630 = vmatpush1.msra.mxu0 0.0
        %1631 = vmatprep.subr.mxu0 0.0
        %1632 = vmatpush1.msra.mxu0 0.0
        %1633 = vmatprep.subr.mxu0 0.0
        %1634 = vmatpush1.msra.mxu0 0.0
        %1635 = vmatprep.subr.mxu0 0.0
        %1636 = vmatpush1.msra.mxu0 0.0
        %1637 = vmatprep.subr.mxu0 0.0
        %1638 = vmatpush1.msra.mxu0 0.0
        %1639 = vmatprep.subr.mxu0 0.0
        %1640 = vmatpush1.msra.mxu0 0.0
        %1641 = vmatprep.subr.mxu0 0.0
        %1642 = vmatpush1.msra.mxu0 0.0
        %1643 = vmatprep.subr.mxu0 0.0
        %1644 = vmatpush1.msra.mxu0 0.0
        %1645 = vmatprep.subr.mxu0 0.0
        %1646 = vmatpush1.msra.mxu0 0.0
        %1647 = vmatprep.subr.mxu0 0.0
        %1648 = vmatpush1.msra.mxu0 0.0
        %1649 = vmatprep.subr.mxu0 0.0
        %1650 = vmatpush1.msra.mxu0 0.0
        %1651 = vmatprep.subr.mxu0 0.0
        %1652 = vmatpush1.msra.mxu0 0.0
        %1653 = vmatprep.subr.mxu0 0.0
        %1654 = vmatpush1.msra.mxu0 0.0
        %1655 = vmatprep.subr.mxu0 0.0
        %1656 = vmatpush1.msra.mxu0 0.0
        %1657 = vmatprep.subr.mxu0 0.0
        %1658 = vmatpush1.msra.mxu0 0.0
        %1659 = vmatprep.subr.mxu0 0.0
        %1660 = vmatpush1.msra.mxu0 0.0
        %1661 = vmatprep.subr.mxu0 0.0
        %1662 = vmatpush1.msra.mxu0 0.0
        %1663 = vmatprep.subr.mxu0 0.0
        %1664 = vmatpush1.msra.mxu0 0.0
        %1665 = vmatprep.subr.mxu0 0.0
        %1666 = vmatpush1.msra.mxu0 0.0
        %1667 = vmatprep.subr.mxu0 0.0
        %1668 = vmatpush1.msra.mxu0 0.0
        %1669 = vmatprep.subr.mxu0 0.0
        %1670 = vmatpush1.msra.mxu0 0.0
        %1671 = vmatprep.subr.mxu0 0.0
        %1672 = vmatpush1.msra.mxu0 0.0
        %1673 = vmatprep.subr.mxu0 0.0
        %1674 = vmatpush1.msra.mxu0 0.0
        %1675 = vmatprep.subr.mxu0 0.0
        %1676 = vmatpush1.msra.mxu0 0.0
        %1677 = vmatprep.mubr.f32.mxu0 0.0
        %1678 = vmatmul.mubr.f32.gmra.mrb[0].mxu0 %v1604
        %v1679 = vpop.f32.mrb[0].mxu0
        %v1680 = vadd.f32 0.0, %v1679
        %v1681 = vpop.f32.mrb[0].mxu0
        %1682 = vmatprep.mubr.f32.mxu0 0.0
        %1683 = vmatmul.mubr.f32.gmra.mrb[0].mxu0 %v1607
        %v1684 = vpop.f32.mrb[0].mxu0
        %v1685 = vadd.f32 0.0, %v1684
        %v1686 = vpop.f32.mrb[0].mxu0
        %1687 = vdwg.mxu0
        %1689 = vset.pattern.permute.xlu0 0
        %1690 = vperm.xlu0 %1689, %v1586
        %v1691 = vpop.permute.xlu0 %1690
        %1694 = vset.pattern.permute.xlu0 0
        %1695 = vperm.xlu0 %1694, %v1587
        %v1696 = vpop.permute.xlu0 %1695
        %v1698 = vadd.f32 %v1691, %v1680
        %v1699 = vadd.f32 %v1696, %v1685
        %v1701 = vsel %vm1602, %v1582, 0
        %v1704 = vsel %vm1602, %v1583, 0
        %v1706 = vsel %vm1609, %v1579, 0
        %1708 = vmatprep.subr.mxu0 0.0
        %1709 = vmatpush1.msra.mxu0 %v1706
        %1710 = vmatprep.subr.mxu0 0.0
        %1711 = vmatpush1.msra.mxu0 0.0
        %1712 = vmatprep.subr.mxu0 0.0
        %1713 = vmatpush1.msra.mxu0 0.0
        %1714 = vmatprep.subr.mxu0 0.0
        %1715 = vmatpush1.msra.mxu0 0.0
        %1716 = vmatprep.subr.mxu0 0.0
        %1717 = vmatpush1.msra.mxu0 0.0
        %1718 = vmatprep.subr.mxu0 0.0
        %1719 = vmatpush1.msra.mxu0 0.0
        %1720 = vmatprep.subr.mxu0 0.0
        %1721 = vmatpush1.msra.mxu0 0.0
        %1722 = vmatprep.subr.mxu0 0.0
        %1723 = vmatpush1.msra.mxu0 0.0
        %1724 = vmatprep.subr.mxu0 0.0
        %1725 = vmatpush1.msra.mxu0 0.0
        %1726 = vmatprep.subr.mxu0 0.0
        %1727 = vmatpush1.msra.mxu0 0.0
        %1728 = vmatprep.subr.mxu0 0.0
        %1729 = vmatpush1.msra.mxu0 0.0
        %1730 = vmatprep.subr.mxu0 0.0
        %1731 = vmatpush1.msra.mxu0 0.0
        %1732 = vmatprep.subr.mxu0 0.0
        %1733 = vmatpush1.msra.mxu0 0.0
        %1734 = vmatprep.subr.mxu0 0.0
        %1735 = vmatpush1.msra.mxu0 0.0
        %1736 = vmatprep.subr.mxu0 0.0
        %1737 = vmatpush1.msra.mxu0 0.0
        %1738 = vmatprep.subr.mxu0 0.0
        %1739 = vmatpush1.msra.mxu0 0.0
        %1740 = vmatprep.subr.mxu0 0.0
        %1741 = vmatpush1.msra.mxu0 0.0
        %1742 = vmatprep.subr.mxu0 0.0
        %1743 = vmatpush1.msra.mxu0 0.0
        %1744 = vmatprep.subr.mxu0 0.0
        %1745 = vmatpush1.msra.mxu0 0.0
        %1746 = vmatprep.subr.mxu0 0.0
        %1747 = vmatpush1.msra.mxu0 0.0
        %1748 = vmatprep.subr.mxu0 0.0
        %1749 = vmatpush1.msra.mxu0 0.0
        %1750 = vmatprep.subr.mxu0 0.0
        %1751 = vmatpush1.msra.mxu0 0.0
        %1752 = vmatprep.subr.mxu0 0.0
        %1753 = vmatpush1.msra.mxu0 0.0
        %1754 = vmatprep.subr.mxu0 0.0
        %1755 = vmatpush1.msra.mxu0 0.0
        %1756 = vmatprep.subr.mxu0 0.0
        %1757 = vmatpush1.msra.mxu0 0.0
        %1758 = vmatprep.subr.mxu0 0.0
        %1759 = vmatpush1.msra.mxu0 0.0
        %1760 = vmatprep.subr.mxu0 0.0
        %1761 = vmatpush1.msra.mxu0 0.0
        %1762 = vmatprep.subr.mxu0 0.0
        %1763 = vmatpush1.msra.mxu0 0.0
        %1764 = vmatprep.subr.mxu0 0.0
        %1765 = vmatpush1.msra.mxu0 0.0
        %1766 = vmatprep.subr.mxu0 0.0
        %1767 = vmatpush1.msra.mxu0 0.0
        %1768 = vmatprep.subr.mxu0 0.0
        %1769 = vmatpush1.msra.mxu0 0.0
        %1770 = vmatprep.subr.mxu0 0.0
        %1771 = vmatpush1.msra.mxu0 0.0
        %1772 = vmatprep.mubr.f32.mxu0 0.0
        %1773 = vmatmul.mubr.f32.gmra.mrb[0].mxu0 %v1701
        %v1774 = vpop.f32.mrb[0].mxu0
        %v1775 = vadd.f32 0.0, %v1774
        %v1776 = vpop.f32.mrb[0].mxu0
        %1777 = vmatprep.mubr.f32.mxu0 0.0
        %1778 = vmatmul.mubr.f32.gmra.mrb[0].mxu0 %v1704
        %v1779 = vpop.f32.mrb[0].mxu0
        %v1780 = vadd.f32 0.0, %v1779
        %v1781 = vpop.f32.mrb[0].mxu0
        %1782 = vdwg.mxu0
        %v1783 = vadd.f32 %v1698, %v1775
        %v1784 = vadd.f32 %v1699, %v1780
        %1785 = vrot.lane.b32.xlu0 %v1579, 127
        %v1786 = vpop.permute.xlu0 %1785
        %1788 = vrot.lane.b32.xlu0 %v1579, 63
        %v1789 = vpop.permute.xlu0 %1788
        %vm1791 = vcmask 515072
        %v1792 = vsel %vm1791, %v1786, %v1789
        %v1793 = vlaneseq
        %v1794 = vshrl.u32 %v1793, 7
        %v1795 = vsub.s32 1, %v1794
        %v1796 = vrot.slane %v1247, %v1795
        %v1797 = vmul.f32 %v1792, %v1796
        %v1799 = vsel %vm1602, %v1584, 0
        %v1802 = vsel %vm1602, %v1585, 0
        %v1805 = vsel %vm1609, %v1797, 0
        %1807 = vmatprep.subr.mxu0 0.0
        %1808 = vmatpush1.msra.mxu0 %v1805
        %1809 = vmatprep.subr.mxu0 0.0
        %1810 = vmatpush1.msra.mxu0 0.0
        %1811 = vmatprep.subr.mxu0 0.0
        %1812 = vmatpush1.msra.mxu0 0.0
        %1813 = vmatprep.subr.mxu0 0.0
        %1814 = vmatpush1.msra.mxu0 0.0
        %1815 = vmatprep.subr.mxu0 0.0
        %1816 = vmatpush1.msra.mxu0 0.0
        %1817 = vmatprep.subr.mxu0 0.0
        %1818 = vmatpush1.msra.mxu0 0.0
        %1819 = vmatprep.subr.mxu0 0.0
        %1820 = vmatpush1.msra.mxu0 0.0
        %1821 = vmatprep.subr.mxu0 0.0
        %1822 = vmatpush1.msra.mxu0 0.0
        %1823 = vmatprep.subr.mxu0 0.0
        %1824 = vmatpush1.msra.mxu0 0.0
        %1825 = vmatprep.subr.mxu0 0.0
        %1826 = vmatpush1.msra.mxu0 0.0
        %1827 = vmatprep.subr.mxu0 0.0
        %1828 = vmatpush1.msra.mxu0 0.0
        %1829 = vmatprep.subr.mxu0 0.0
        %1830 = vmatpush1.msra.mxu0 0.0
        %1831 = vmatprep.subr.mxu0 0.0
        %1832 = vmatpush1.msra.mxu0 0.0
        %1833 = vmatprep.subr.mxu0 0.0
        %1834 = vmatpush1.msra.mxu0 0.0
        %1835 = vmatprep.subr.mxu0 0.0
        %1836 = vmatpush1.msra.mxu0 0.0
        %1837 = vmatprep.subr.mxu0 0.0
        %1838 = vmatpush1.msra.mxu0 0.0
        %1839 = vmatprep.subr.mxu0 0.0
        %1840 = vmatpush1.msra.mxu0 0.0
        %1841 = vmatprep.subr.mxu0 0.0
        %1842 = vmatpush1.msra.mxu0 0.0
        %1843 = vmatprep.subr.mxu0 0.0
        %1844 = vmatpush1.msra.mxu0 0.0
        %1845 = vmatprep.subr.mxu0 0.0
        %1846 = vmatpush1.msra.mxu0 0.0
        %1847 = vmatprep.subr.mxu0 0.0
        %1848 = vmatpush1.msra.mxu0 0.0
        %1849 = vmatprep.subr.mxu0 0.0
        %1850 = vmatpush1.msra.mxu0 0.0
        %1851 = vmatprep.subr.mxu0 0.0
        %1852 = vmatpush1.msra.mxu0 0.0
        %1853 = vmatprep.subr.mxu0 0.0
        %1854 = vmatpush1.msra.mxu0 0.0
        %1855 = vmatprep.subr.mxu0 0.0
        %1856 = vmatpush1.msra.mxu0 0.0
        %1857 = vmatprep.subr.mxu0 0.0
        %1858 = vmatpush1.msra.mxu0 0.0
        %1859 = vmatprep.subr.mxu0 0.0
        %1860 = vmatpush1.msra.mxu0 0.0
        %1861 = vmatprep.subr.mxu0 0.0
        %1862 = vmatpush1.msra.mxu0 0.0
        %1863 = vmatprep.subr.mxu0 0.0
        %1864 = vmatpush1.msra.mxu0 0.0
        %1865 = vmatprep.subr.mxu0 0.0
        %1866 = vmatpush1.msra.mxu0 0.0
        %1867 = vmatprep.subr.mxu0 0.0
        %1868 = vmatpush1.msra.mxu0 0.0
        %1869 = vmatprep.subr.mxu0 0.0
        %1870 = vmatpush1.msra.mxu0 0.0
        %1871 = vmatprep.mubr.f32.mxu0 0.0
        %1872 = vmatmul.mubr.f32.gmra.mrb[0].mxu0 %v1799
        %v1873 = vpop.f32.mrb[0].mxu0
        %v1874 = vadd.f32 0.0, %v1873
        %v1875 = vpop.f32.mrb[0].mxu0
        %1876 = vmatprep.mubr.f32.mxu0 0.0
        %1877 = vmatmul.mubr.f32.gmra.mrb[0].mxu0 %v1802
        %v1878 = vpop.f32.mrb[0].mxu0
        %v1879 = vadd.f32 0.0, %v1878
        %v1880 = vpop.f32.mrb[0].mxu0
        %1881 = vdwg.mxu0
        %v1882 = vadd.f32 %v1783, %v1874
        %v1883 = vadd.f32 %v1784, %v1879
        %v1884 = vld [vmem:[%s1166] sm:$0xff]
        %v1885 = vld [vmem:[%s1166 + $0x8] sm:$0xff]
        %v1886 = vld [vmem:[%s1166 + $0x10] sm:$0xff]
        %v1887 = vld [vmem:[%s1166 + $0x18] sm:$0xff]
        %v1888 = vld [vmem:[%s1166 + $0x20] sm:$0xff]
        %v1889 = vld [vmem:[%s1166 + $0x28] sm:$0xff]
        %v1890 = vld [vmem:[%s1166 + $0x30] sm:$0xff]
        %v1891 = vld [vmem:[%s1166 + $0x38] sm:$0xff]
        %v1892 = vld [vmem:[%s1171] sm:$0xff]
        %v1893 = vld [vmem:[%s1171 + $0x8] sm:$0xff]
        %v1894 = vld [vmem:[%s1171 + $0x10] sm:$0xff]
        %v1895 = vld [vmem:[%s1171 + $0x18] sm:$0xff]
        %v1896 = vld [vmem:[%s1171 + $0x20] sm:$0xff]
        %v1897 = vld [vmem:[%s1171 + $0x28] sm:$0xff]
        %v1898 = vld [vmem:[%s1171 + $0x30] sm:$0xff]
        %v1899 = vld [vmem:[%s1171 + $0x38] sm:$0xff]
        %1902 = vrot.lane.b32.xlu0 %v1882, 65
        %v1903 = vpop.permute.xlu0 %1902
        %1904 = vrot.lane.b32.xlu0 %v1883, 65
        %v1905 = vpop.permute.xlu0 %1904
        %1908 = vrot.lane.b32.xlu0 %v1882, 1
        %v1909 = vpop.permute.xlu0 %1908
        %1910 = vrot.lane.b32.xlu0 %v1883, 1
        %v1911 = vpop.permute.xlu0 %1910
        %v1914 = vsel %vm1595, %v1903, %v1909
        %v1915 = vsel %vm1595, %v1905, %v1911
        %v1916 = vmul.f32 %v1914, %v1600
        %v1917 = vmul.f32 %v1915, %v1600
        %1918 = vrot.lane.b32.xlu0 %v1882, 127
        %v1919 = vpop.permute.xlu0 %1918
        %1920 = vrot.lane.b32.xlu0 %v1883, 127
        %v1921 = vpop.permute.xlu0 %1920
        %1924 = vrot.lane.b32.xlu0 %v1882, 63
        %v1925 = vpop.permute.xlu0 %1924
        %1926 = vrot.lane.b32.xlu0 %v1883, 63
        %v1927 = vpop.permute.xlu0 %1926
        %v1930 = vsel %vm1791, %v1919, %v1925
        %v1931 = vsel %vm1791, %v1921, %v1927
        %v1932 = vmul.f32 %v1930, %v1796
        %v1933 = vmul.f32 %v1931, %v1796
        %1935 = vset.pattern.permute.xlu0 0
        %1936 = vperm.xlu0 %1935, %v1892
        %v1937 = vpop.permute.xlu0 %1936
        %1940 = vset.pattern.permute.xlu0 0
        %1941 = vperm.xlu0 %1940, %v1893
        %v1942 = vpop.permute.xlu0 %1941
        %vm1944 = vcmask 392192
        %v1946 = vsel %vm1944, %v1884, 0
        %v1949 = vsel %vm1944, %v1885, 0
        %1951 = vmatprep.subr.mxu0 0.0
        %1952 = vmatpush1.msra.mxu0 %v1916
        %1953 = vmatprep.subr.mxu0 0.0
        %1954 = vmatpush1.msra.mxu0 %v1917
        %1955 = vmatprep.subr.mxu0 0.0
        %1956 = vmatpush1.msra.mxu0 %v1882
        %1957 = vmatprep.subr.mxu0 0.0
        %1958 = vmatpush1.msra.mxu0 %v1883
        %1959 = vmatprep.subr.mxu0 0.0
        %1960 = vmatpush1.msra.mxu0 %v1932
        %1961 = vmatprep.subr.mxu0 0.0
        %1962 = vmatpush1.msra.mxu0 %v1933
        %1963 = vmatprep.subr.mxu0 0.0
        %1964 = vmatpush1.msra.mxu0 0.0
        %1965 = vmatprep.subr.mxu0 0.0
        %1966 = vmatpush1.msra.mxu0 0.0
        %1967 = vmatprep.subr.mxu0 0.0
        %1968 = vmatpush1.msra.mxu0 0.0
        %1969 = vmatprep.subr.mxu0 0.0
        %1970 = vmatpush1.msra.mxu0 0.0
        %1971 = vmatprep.subr.mxu0 0.0
        %1972 = vmatpush1.msra.mxu0 0.0
        %1973 = vmatprep.subr.mxu0 0.0
        %1974 = vmatpush1.msra.mxu0 0.0
        %1975 = vmatprep.subr.mxu0 0.0
        %1976 = vmatpush1.msra.mxu0 0.0
        %1977 = vmatprep.subr.mxu0 0.0
        %1978 = vmatpush1.msra.mxu0 0.0
        %1979 = vmatprep.subr.mxu0 0.0
        %1980 = vmatpush1.msra.mxu0 0.0
        %1981 = vmatprep.subr.mxu0 0.0
        %1982 = vmatpush1.msra.mxu0 0.0
        %1983 = vmatprep.subr.mxu0 0.0
        %1984 = vmatpush1.msra.mxu0 0.0
        %1985 = vmatprep.subr.mxu0 0.0
        %1986 = vmatpush1.msra.mxu0 0.0
        %1987 = vmatprep.subr.mxu0 0.0
        %1988 = vmatpush1.msra.mxu0 0.0
        %1989 = vmatprep.subr.mxu0 0.0
        %1990 = vmatpush1.msra.mxu0 0.0
        %1991 = vmatprep.subr.mxu0 0.0
        %1992 = vmatpush1.msra.mxu0 0.0
        %1993 = vmatprep.subr.mxu0 0.0
        %1994 = vmatpush1.msra.mxu0 0.0
        %1995 = vmatprep.subr.mxu0 0.0
        %1996 = vmatpush1.msra.mxu0 0.0
        %1997 = vmatprep.subr.mxu0 0.0
        %1998 = vmatpush1.msra.mxu0 0.0
        %1999 = vmatprep.subr.mxu0 0.0
        %2000 = vmatpush1.msra.mxu0 0.0
        %2001 = vmatprep.subr.mxu0 0.0
        %2002 = vmatpush1.msra.mxu0 0.0
        %2003 = vmatprep.subr.mxu0 0.0
        %2004 = vmatpush1.msra.mxu0 0.0
        %2005 = vmatprep.subr.mxu0 0.0
        %2006 = vmatpush1.msra.mxu0 0.0
        %2007 = vmatprep.subr.mxu0 0.0
        %2008 = vmatpush1.msra.mxu0 0.0
        %2009 = vmatprep.subr.mxu0 0.0
        %2010 = vmatpush1.msra.mxu0 0.0
        %2011 = vmatprep.subr.mxu0 0.0
        %2012 = vmatpush1.msra.mxu0 0.0
        %2013 = vmatprep.subr.mxu0 0.0
        %2014 = vmatpush1.msra.mxu0 0.0
        %2015 = vmatprep.mubr.f32.mxu0 0.0
        %2016 = vmatmul.mubr.f32.gmra.mrb[0].mxu0 %v1946
        %v2017 = vpop.f32.mrb[0].mxu0
        %v2018 = vadd.f32 %v1937, %v2017
        %v2019 = vpop.f32.mrb[0].mxu0
        %2020 = vmatprep.mubr.f32.mxu0 0.0
        %2021 = vmatmul.mubr.f32.gmra.mrb[0].mxu0 %v1949
        %v2022 = vpop.f32.mrb[0].mxu0
        %v2023 = vadd.f32 %v1942, %v2022
        %v2024 = vpop.f32.mrb[0].mxu0
        %2025 = vdwg.mxu0
        %v2026 = vmax.f32 %v2018, 0.0
        %v2027 = vmax.f32 %v2023, 0.0
        %2030 = vrot.lane.b32.xlu0 %v2026, 65
        %v2031 = vpop.permute.xlu0 %2030
        %2032 = vrot.lane.b32.xlu0 %v2027, 65
        %v2033 = vpop.permute.xlu0 %2032
        %2036 = vrot.lane.b32.xlu0 %v2026, 1
        %v2037 = vpop.permute.xlu0 %2036
        %2038 = vrot.lane.b32.xlu0 %v2027, 1
        %v2039 = vpop.permute.xlu0 %2038
        %v2042 = vsel %vm1595, %v2031, %v2037
        %v2043 = vsel %vm1595, %v2033, %v2039
        %v2044 = vmul.f32 %v2042, %v1600
        %v2045 = vmul.f32 %v2043, %v1600
        %2046 = vrot.lane.b32.xlu0 %v2026, 127
        %v2047 = vpop.permute.xlu0 %2046
        %2048 = vrot.lane.b32.xlu0 %v2027, 127
        %v2049 = vpop.permute.xlu0 %2048
        %2052 = vrot.lane.b32.xlu0 %v2026, 63
        %v2053 = vpop.permute.xlu0 %2052
        %2054 = vrot.lane.b32.xlu0 %v2027, 63
        %v2055 = vpop.permute.xlu0 %2054
        %v2058 = vsel %vm1791, %v2047, %v2053
        %v2059 = vsel %vm1791, %v2049, %v2055
        %v2060 = vmul.f32 %v2058, %v1796
        %v2061 = vmul.f32 %v2059, %v1796
        %2063 = vset.pattern.permute.xlu0 0
        %2064 = vperm.xlu0 %2063, %v1894
        %v2065 = vpop.permute.xlu0 %2064
        %2068 = vset.pattern.permute.xlu0 0
        %2069 = vperm.xlu0 %2068, %v1895
        %v2070 = vpop.permute.xlu0 %2069
        %v2073 = vsel %vm1944, %v1886, 0
        %v2076 = vsel %vm1944, %v1887, 0
        %2078 = vmatprep.subr.mxu0 0.0
        %2079 = vmatpush1.msra.mxu0 %v2044
        %2080 = vmatprep.subr.mxu0 0.0
        %2081 = vmatpush1.msra.mxu0 %v2045
        %2082 = vmatprep.subr.mxu0 0.0
        %2083 = vmatpush1.msra.mxu0 %v2026
        %2084 = vmatprep.subr.mxu0 0.0
        %2085 = vmatpush1.msra.mxu0 %v2027
        %2086 = vmatprep.subr.mxu0 0.0
        %2087 = vmatpush1.msra.mxu0 %v2060
        %2088 = vmatprep.subr.mxu0 0.0
        %2089 = vmatpush1.msra.mxu0 %v2061
        %2090 = vmatprep.subr.mxu0 0.0
        %2091 = vmatpush1.msra.mxu0 0.0
        %2092 = vmatprep.subr.mxu0 0.0
        %2093 = vmatpush1.msra.mxu0 0.0
        %2094 = vmatprep.subr.mxu0 0.0
        %2095 = vmatpush1.msra.mxu0 0.0
        %2096 = vmatprep.subr.mxu0 0.0
        %2097 = vmatpush1.msra.mxu0 0.0
        %2098 = vmatprep.subr.mxu0 0.0
        %2099 = vmatpush1.msra.mxu0 0.0
        %2100 = vmatprep.subr.mxu0 0.0
        %2101 = vmatpush1.msra.mxu0 0.0
        %2102 = vmatprep.subr.mxu0 0.0
        %2103 = vmatpush1.msra.mxu0 0.0
        %2104 = vmatprep.subr.mxu0 0.0
        %2105 = vmatpush1.msra.mxu0 0.0
        %2106 = vmatprep.subr.mxu0 0.0
        %2107 = vmatpush1.msra.mxu0 0.0
        %2108 = vmatprep.subr.mxu0 0.0
        %2109 = vmatpush1.msra.mxu0 0.0
        %2110 = vmatprep.subr.mxu0 0.0
        %2111 = vmatpush1.msra.mxu0 0.0
        %2112 = vmatprep.subr.mxu0 0.0
        %2113 = vmatpush1.msra.mxu0 0.0
        %2114 = vmatprep.subr.mxu0 0.0
        %2115 = vmatpush1.msra.mxu0 0.0
        %2116 = vmatprep.subr.mxu0 0.0
        %2117 = vmatpush1.msra.mxu0 0.0
        %2118 = vmatprep.subr.mxu0 0.0
        %2119 = vmatpush1.msra.mxu0 0.0
        %2120 = vmatprep.subr.mxu0 0.0
        %2121 = vmatpush1.msra.mxu0 0.0
        %2122 = vmatprep.subr.mxu0 0.0
        %2123 = vmatpush1.msra.mxu0 0.0
        %2124 = vmatprep.subr.mxu0 0.0
        %2125 = vmatpush1.msra.mxu0 0.0
        %2126 = vmatprep.subr.mxu0 0.0
        %2127 = vmatpush1.msra.mxu0 0.0
        %2128 = vmatprep.subr.mxu0 0.0
        %2129 = vmatpush1.msra.mxu0 0.0
        %2130 = vmatprep.subr.mxu0 0.0
        %2131 = vmatpush1.msra.mxu0 0.0
        %2132 = vmatprep.subr.mxu0 0.0
        %2133 = vmatpush1.msra.mxu0 0.0
        %2134 = vmatprep.subr.mxu0 0.0
        %2135 = vmatpush1.msra.mxu0 0.0
        %2136 = vmatprep.subr.mxu0 0.0
        %2137 = vmatpush1.msra.mxu0 0.0
        %2138 = vmatprep.subr.mxu0 0.0
        %2139 = vmatpush1.msra.mxu0 0.0
        %2140 = vmatprep.subr.mxu0 0.0
        %2141 = vmatpush1.msra.mxu0 0.0
        %2142 = vmatprep.mubr.f32.mxu0 0.0
        %2143 = vmatmul.mubr.f32.gmra.mrb[0].mxu0 %v2073
        %v2144 = vpop.f32.mrb[0].mxu0
        %v2145 = vadd.f32 %v2065, %v2144
        %v2146 = vpop.f32.mrb[0].mxu0
        %2147 = vmatprep.mubr.f32.mxu0 0.0
        %2148 = vmatmul.mubr.f32.gmra.mrb[0].mxu0 %v2076
        %v2149 = vpop.f32.mrb[0].mxu0
        %v2150 = vadd.f32 %v2070, %v2149
        %v2151 = vpop.f32.mrb[0].mxu0
        %2152 = vdwg.mxu0
        %v2153 = vmul.f32 %v2145, %v2145
        %v2154 = vmul.f32 %v2150, %v2150
        %v2155 = vadd.f32 %v2153, %v2154
        %v2156 = vrsqrt.pop %v2155
        %v2157 = vmul.f32 %v2155, %v2156
        %vm2158 = vcmp.eq.f32.partialorder %v2155, inf
        %v2159 = vsel %vm2158, %v2155, %v2157
        %vm2160 = vcmp.eq.f32.partialorder %v2155, 0.0
        %v2161 = vand.u32 %v2155, 2147483648
        %v2162 = vsel %vm2160, %v2161, %v2159
        %v2164 = vsel %vm1483, %v2162, 0
        %2166 = vmatprep.subr.mxu0 0.0
        %2167 = vmatpush1.msra.mxu0 %v1248
        %2168 = vmatprep.subr.mxu0 0.0
        %2169 = vmatpush1.msra.mxu0 %v1249
        %2170 = vmatprep.subr.mxu0 0.0
        %2171 = vmatpush1.msra.mxu0 %v1250
        %2172 = vmatprep.subr.mxu0 0.0
        %2173 = vmatpush1.msra.mxu0 %v1251
        %2174 = vmatprep.subr.mxu0 0.0
        %2175 = vmatpush1.msra.mxu0 %v1252
        %2176 = vmatprep.subr.mxu0 0.0
        %2177 = vmatpush1.msra.mxu0 %v1253
        %2178 = vmatprep.subr.mxu0 0.0
        %2179 = vmatpush1.msra.mxu0 %v1254
        %2180 = vmatprep.subr.mxu0 0.0
        %2181 = vmatpush1.msra.mxu0 %v1255
        %2182 = vmatprep.subr.mxu0 0.0
        %2183 = vmatpush1.msra.mxu0 0.0
        %2184 = vmatprep.subr.mxu0 0.0
        %2185 = vmatpush1.msra.mxu0 0.0
        %2186 = vmatprep.subr.mxu0 0.0
        %2187 = vmatpush1.msra.mxu0 0.0
        %2188 = vmatprep.subr.mxu0 0.0
        %2189 = vmatpush1.msra.mxu0 0.0
        %2190 = vmatprep.subr.mxu0 0.0
        %2191 = vmatpush1.msra.mxu0 0.0
        %2192 = vmatprep.subr.mxu0 0.0
        %2193 = vmatpush1.msra.mxu0 0.0
        %2194 = vmatprep.subr.mxu0 0.0
        %2195 = vmatpush1.msra.mxu0 0.0
        %2196 = vmatprep.subr.mxu0 0.0
        %2197 = vmatpush1.msra.mxu0 0.0
        %2198 = vmatprep.subr.mxu0 0.0
        %2199 = vmatpush1.msra.mxu0 0.0
        %2200 = vmatprep.subr.mxu0 0.0
        %2201 = vmatpush1.msra.mxu0 0.0
        %2202 = vmatprep.subr.mxu0 0.0
        %2203 = vmatpush1.msra.mxu0 0.0
        %2204 = vmatprep.subr.mxu0 0.0
        %2205 = vmatpush1.msra.mxu0 0.0
        %2206 = vmatprep.subr.mxu0 0.0
        %2207 = vmatpush1.msra.mxu0 0.0
        %2208 = vmatprep.subr.mxu0 0.0
        %2209 = vmatpush1.msra.mxu0 0.0
        %2210 = vmatprep.subr.mxu0 0.0
        %2211 = vmatpush1.msra.mxu0 0.0
        %2212 = vmatprep.subr.mxu0 0.0
        %2213 = vmatpush1.msra.mxu0 0.0
        %2214 = vmatprep.subr.mxu0 0.0
        %2215 = vmatpush1.msra.mxu0 0.0
        %2216 = vmatprep.subr.mxu0 0.0
        %2217 = vmatpush1.msra.mxu0 0.0
        %2218 = vmatprep.subr.mxu0 0.0
        %2219 = vmatpush1.msra.mxu0 0.0
        %2220 = vmatprep.subr.mxu0 0.0
        %2221 = vmatpush1.msra.mxu0 0.0
        %2222 = vmatprep.subr.mxu0 0.0
        %2223 = vmatpush1.msra.mxu0 0.0
        %2224 = vmatprep.subr.mxu0 0.0
        %2225 = vmatpush1.msra.mxu0 0.0
        %2226 = vmatprep.subr.mxu0 0.0
        %2227 = vmatpush1.msra.mxu0 0.0
        %2228 = vmatprep.subr.mxu0 0.0
        %2229 = vmatpush1.msra.mxu0 0.0
        %2230 = vmatprep.mubr.f32.mxu0 0.0
        %2231 = vmatmul.mubr.f32.gmra.mrb[0].mxu0 %v2164
        %v2232 = vpop.f32.mrb[0].mxu0
        %v2233 = vadd.f32 0.0, %v2232
        %v2234 = vpop.f32.mrb[0].mxu0
        %2235 = vdwg.mxu0
        %v2236 = vld [vmem:[%s1184] sm:$0xff]
        %v2237 = vld [vmem:[%s1184 + $0x8] sm:$0xff]
        %v2238 = vld [vmem:[%s1189] sm:$0xff]
        %v2239 = vld [vmem:[%s1189 + $0x8] sm:$0xff]
        %v2240 = vld [vmem:[%s1189 + $0x10] sm:$0xff]
        %v2241 = vld [vmem:[%s1189 + $0x18] sm:$0xff]
        %2243 = vset.pattern.permute.xlu0 0
        %2244 = vperm.xlu0 %2243, %v2238
        %v2245 = vpop.permute.xlu0 %2244
        %vm2247 = vcmask 64512
        %v2249 = vsel %vm2247, %v2236, 0
        %2251 = vmatprep.subr.mxu0 0.0
        %2252 = vmatpush1.msra.mxu0 %v2233
        %2253 = vmatprep.subr.mxu0 0.0
        %2254 = vmatpush1.msra.mxu0 0.0
        %2255 = vmatprep.subr.mxu0 0.0
        %2256 = vmatpush1.msra.mxu0 0.0
        %2257 = vmatprep.subr.mxu0 0.0
        %2258 = vmatpush1.msra.mxu0 0.0
        %2259 = vmatprep.subr.mxu0 0.0
        %2260 = vmatpush1.msra.mxu0 0.0
        %2261 = vmatprep.subr.mxu0 0.0
        %2262 = vmatpush1.msra.mxu0 0.0
        %2263 = vmatprep.subr.mxu0 0.0
        %2264 = vmatpush1.msra.mxu0 0.0
        %2265 = vmatprep.subr.mxu0 0.0
        %2266 = vmatpush1.msra.mxu0 0.0
        %2267 = vmatprep.subr.mxu0 0.0
        %2268 = vmatpush1.msra.mxu0 0.0
        %2269 = vmatprep.subr.mxu0 0.0
        %2270 = vmatpush1.msra.mxu0 0.0
        %2271 = vmatprep.subr.mxu0 0.0
        %2272 = vmatpush1.msra.mxu0 0.0
        %2273 = vmatprep.subr.mxu0 0.0
        %2274 = vmatpush1.msra.mxu0 0.0
        %2275 = vmatprep.subr.mxu0 0.0
        %2276 = vmatpush1.msra.mxu0 0.0
        %2277 = vmatprep.subr.mxu0 0.0
        %2278 = vmatpush1.msra.mxu0 0.0
        %2279 = vmatprep.subr.mxu0 0.0
        %2280 = vmatpush1.msra.mxu0 0.0
        %2281 = vmatprep.subr.mxu0 0.0
        %2282 = vmatpush1.msra.mxu0 0.0
        %2283 = vmatprep.subr.mxu0 0.0
        %2284 = vmatpush1.msra.mxu0 0.0
        %2285 = vmatprep.subr.mxu0 0.0
        %2286 = vmatpush1.msra.mxu0 0.0
        %2287 = vmatprep.subr.mxu0 0.0
        %2288 = vmatpush1.msra.mxu0 0.0
        %2289 = vmatprep.subr.mxu0 0.0
        %2290 = vmatpush1.msra.mxu0 0.0
        %2291 = vmatprep.subr.mxu0 0.0
        %2292 = vmatpush1.msra.mxu0 0.0
        %2293 = vmatprep.subr.mxu0 0.0
        %2294 = vmatpush1.msra.mxu0 0.0
        %2295 = vmatprep.subr.mxu0 0.0
        %2296 = vmatpush1.msra.mxu0 0.0
        %2297 = vmatprep.subr.mxu0 0.0
        %2298 = vmatpush1.msra.mxu0 0.0
        %2299 = vmatprep.subr.mxu0 0.0
        %2300 = vmatpush1.msra.mxu0 0.0
        %2301 = vmatprep.subr.mxu0 0.0
        %2302 = vmatpush1.msra.mxu0 0.0
        %2303 = vmatprep.subr.mxu0 0.0
        %2304 = vmatpush1.msra.mxu0 0.0
        %2305 = vmatprep.subr.mxu0 0.0
        %2306 = vmatpush1.msra.mxu0 0.0
        %2307 = vmatprep.subr.mxu0 0.0
        %2308 = vmatpush1.msra.mxu0 0.0
        %2309 = vmatprep.subr.mxu0 0.0
        %2310 = vmatpush1.msra.mxu0 0.0
        %2311 = vmatprep.subr.mxu0 0.0
        %2312 = vmatpush1.msra.mxu0 0.0
        %2313 = vmatprep.subr.mxu0 0.0
        %2314 = vmatpush1.msra.mxu0 0.0
        %2315 = vmatprep.mubr.f32.mxu0 0.0
        %2316 = vmatmul.mubr.f32.gmra.mrb[0].mxu0 %v2249
        %v2317 = vpop.f32.mrb[0].mxu0
        %v2318 = vadd.f32 %v2245, %v2317
        %v2319 = vpop.f32.mrb[0].mxu0
        %2320 = vdwg.mxu0
        %2322 = vset.pattern.permute.xlu0 0
        %2323 = vperm.xlu0 %2322, %v2239
        %v2324 = vpop.permute.xlu0 %2323
        %v2326 = vmul.f32 %v2318, %v2324
        %2328 = vset.pattern.permute.xlu0 0
        %2329 = vperm.xlu0 %2328, %v2240
        %v2330 = vpop.permute.xlu0 %2329
        %v2332 = vadd.f32 %v2326, %v2330
        %v2333 = vmax.f32 %v2332, 0.0
        %2335 = vset.pattern.permute.xlu0 0
        %2336 = vperm.xlu0 %2335, %v2241
        %v2337 = vpop.permute.xlu0 %2336
        %v2340 = vsel %vm2247, %v2237, 0
        %2342 = vmatprep.subr.mxu0 0.0
        %2343 = vmatpush1.msra.mxu0 %v2333
        %2344 = vmatprep.subr.mxu0 0.0
        %2345 = vmatpush1.msra.mxu0 0.0
        %2346 = vmatprep.subr.mxu0 0.0
        %2347 = vmatpush1.msra.mxu0 0.0
        %2348 = vmatprep.subr.mxu0 0.0
        %2349 = vmatpush1.msra.mxu0 0.0
        %2350 = vmatprep.subr.mxu0 0.0
        %2351 = vmatpush1.msra.mxu0 0.0
        %2352 = vmatprep.subr.mxu0 0.0
        %2353 = vmatpush1.msra.mxu0 0.0
        %2354 = vmatprep.subr.mxu0 0.0
        %2355 = vmatpush1.msra.mxu0 0.0
        %2356 = vmatprep.subr.mxu0 0.0
        %2357 = vmatpush1.msra.mxu0 0.0
        %2358 = vmatprep.subr.mxu0 0.0
        %2359 = vmatpush1.msra.mxu0 0.0
        %2360 = vmatprep.subr.mxu0 0.0
        %2361 = vmatpush1.msra.mxu0 0.0
        %2362 = vmatprep.subr.mxu0 0.0
        %2363 = vmatpush1.msra.mxu0 0.0
        %2364 = vmatprep.subr.mxu0 0.0
        %2365 = vmatpush1.msra.mxu0 0.0
        %2366 = vmatprep.subr.mxu0 0.0
        %2367 = vmatpush1.msra.mxu0 0.0
        %2368 = vmatprep.subr.mxu0 0.0
        %2369 = vmatpush1.msra.mxu0 0.0
        %2370 = vmatprep.subr.mxu0 0.0
        %2371 = vmatpush1.msra.mxu0 0.0
        %2372 = vmatprep.subr.mxu0 0.0
        %2373 = vmatpush1.msra.mxu0 0.0
        %2374 = vmatprep.subr.mxu0 0.0
        %2375 = vmatpush1.msra.mxu0 0.0
        %2376 = vmatprep.subr.mxu0 0.0
        %2377 = vmatpush1.msra.mxu0 0.0
        %2378 = vmatprep.subr.mxu0 0.0
        %2379 = vmatpush1.msra.mxu0 0.0
        %2380 = vmatprep.subr.mxu0 0.0
        %2381 = vmatpush1.msra.mxu0 0.0
        %2382 = vmatprep.subr.mxu0 0.0
        %2383 = vmatpush1.msra.mxu0 0.0
        %2384 = vmatprep.subr.mxu0 0.0
        %2385 = vmatpush1.msra.mxu0 0.0
        %2386 = vmatprep.subr.mxu0 0.0
        %2387 = vmatpush1.msra.mxu0 0.0
        %2388 = vmatprep.subr.mxu0 0.0
        %2389 = vmatpush1.msra.mxu0 0.0
        %2390 = vmatprep.subr.mxu0 0.0
        %2391 = vmatpush1.msra.mxu0 0.0
        %2392 = vmatprep.subr.mxu0 0.0
        %2393 = vmatpush1.msra.mxu0 0.0
        %2394 = vmatprep.subr.mxu0 0.0
        %2395 = vmatpush1.msra.mxu0 0.0
        %2396 = vmatprep.subr.mxu0 0.0
        %2397 = vmatpush1.msra.mxu0 0.0
        %2398 = vmatprep.subr.mxu0 0.0
        %2399 = vmatpush1.msra.mxu0 0.0
        %2400 = vmatprep.subr.mxu0 0.0
        %2401 = vmatpush1.msra.mxu0 0.0
        %2402 = vmatprep.subr.mxu0 0.0
        %2403 = vmatpush1.msra.mxu0 0.0
        %2404 = vmatprep.subr.mxu0 0.0
        %2405 = vmatpush1.msra.mxu0 0.0
        %2406 = vmatprep.mubr.f32.mxu0 0.0
        %2407 = vmatmul.mubr.f32.gmra.mrb[0].mxu0 %v2340
        %v2408 = vpop.f32.mrb[0].mxu0
        %v2409 = vadd.f32 %v2337, %v2408
        %v2410 = vpop.f32.mrb[0].mxu0
        %2411 = vdwg.mxu0
        %v2412 = vxor.u32 %v2409, 2147483648
        %v2413 = vmul.f32 %v2412, 1.442695
        %v2414 = vpow.pop %v2413
        %v2415 = vadd.f32 %v2414, 1.0
        %v2416 = vrcp.pop %v2415
        %v2417 = vmul.f32 1.0, %v2416
        %v2418 = vmul.f32 %v2417, %v2233
        %v2420 = vsel %vm1602, %v2418, 0
        %v2423 = vsel %vm1609, %v1256, 0
        %2425 = vmatprep.subr.mxu0 0.0
        %2426 = vmatpush1.msra.mxu0 %v2423
        %2427 = vmatprep.subr.mxu0 0.0
        %2428 = vmatpush1.msra.mxu0 0.0
        %2429 = vmatprep.subr.mxu0 0.0
        %2430 = vmatpush1.msra.mxu0 0.0
        %2431 = vmatprep.subr.mxu0 0.0
        %2432 = vmatpush1.msra.mxu0 0.0
        %2433 = vmatprep.subr.mxu0 0.0
        %2434 = vmatpush1.msra.mxu0 0.0
        %2435 = vmatprep.subr.mxu0 0.0
        %2436 = vmatpush1.msra.mxu0 0.0
        %2437 = vmatprep.subr.mxu0 0.0
        %2438 = vmatpush1.msra.mxu0 0.0
        %2439 = vmatprep.subr.mxu0 0.0
        %2440 = vmatpush1.msra.mxu0 0.0
        %2441 = vmatprep.subr.mxu0 0.0
        %2442 = vmatpush1.msra.mxu0 0.0
        %2443 = vmatprep.subr.mxu0 0.0
        %2444 = vmatpush1.msra.mxu0 0.0
        %2445 = vmatprep.subr.mxu0 0.0
        %2446 = vmatpush1.msra.mxu0 0.0
        %2447 = vmatprep.subr.mxu0 0.0
        %2448 = vmatpush1.msra.mxu0 0.0
        %2449 = vmatprep.subr.mxu0 0.0
        %2450 = vmatpush1.msra.mxu0 0.0
        %2451 = vmatprep.subr.mxu0 0.0
        %2452 = vmatpush1.msra.mxu0 0.0
        %2453 = vmatprep.subr.mxu0 0.0
        %2454 = vmatpush1.msra.mxu0 0.0
        %2455 = vmatprep.subr.mxu0 0.0
        %2456 = vmatpush1.msra.mxu0 0.0
        %2457 = vmatprep.subr.mxu0 0.0
        %2458 = vmatpush1.msra.mxu0 0.0
        %2459 = vmatprep.subr.mxu0 0.0
        %2460 = vmatpush1.msra.mxu0 0.0
        %2461 = vmatprep.subr.mxu0 0.0
        %2462 = vmatpush1.msra.mxu0 0.0
        %2463 = vmatprep.subr.mxu0 0.0
        %2464 = vmatpush1.msra.mxu0 0.0
        %2465 = vmatprep.subr.mxu0 0.0
        %2466 = vmatpush1.msra.mxu0 0.0
        %2467 = vmatprep.subr.mxu0 0.0
        %2468 = vmatpush1.msra.mxu0 0.0
        %2469 = vmatprep.subr.mxu0 0.0
        %2470 = vmatpush1.msra.mxu0 0.0
        %2471 = vmatprep.subr.mxu0 0.0
        %2472 = vmatpush1.msra.mxu0 0.0
        %2473 = vmatprep.subr.mxu0 0.0
        %2474 = vmatpush1.msra.mxu0 0.0
        %2475 = vmatprep.subr.mxu0 0.0
        %2476 = vmatpush1.msra.mxu0 0.0
        %2477 = vmatprep.subr.mxu0 0.0
        %2478 = vmatpush1.msra.mxu0 0.0
        %2479 = vmatprep.subr.mxu0 0.0
        %2480 = vmatpush1.msra.mxu0 0.0
        %2481 = vmatprep.subr.mxu0 0.0
        %2482 = vmatpush1.msra.mxu0 0.0
        %2483 = vmatprep.subr.mxu0 0.0
        %2484 = vmatpush1.msra.mxu0 0.0
        %2485 = vmatprep.subr.mxu0 0.0
        %2486 = vmatpush1.msra.mxu0 0.0
        %2487 = vmatprep.subr.mxu0 0.0
        %2488 = vmatpush1.msra.mxu0 0.0
        %2489 = vmatprep.mubr.f32.mxu0 0.0
        %2490 = vmatmul.mubr.f32.gmra.mrb[0].mxu0 %v2420
        %v2491 = vpop.f32.mrb[0].mxu0
        %v2492 = vadd.f32 0.0, %v2491
        %v2493 = vpop.f32.mrb[0].mxu0
        %2494 = vdwg.mxu0
        %v2495 = vsub.f32 %v2145, %v2492
        %v2496 = vmul.f32 %v2495, %v2495
        %v2497 = vadd.f32 %v2496, %v2154
        %v2498 = vrsqrt.pop %v2497
        %v2499 = vmul.f32 %v2497, %v2498
        %vm2500 = vcmp.eq.f32.partialorder %v2497, inf
        %v2501 = vsel %vm2500, %v2497, %v2499
        %vm2502 = vcmp.eq.f32.partialorder %v2497, 0.0
        %v2503 = vand.u32 %v2497, 2147483648
        %v2504 = vsel %vm2502, %v2503, %v2501
        %vm2505 = vcmp.gt.f32.partialorder %v2504, 0.0
        %v2506 = vstv %s1558
        %v2507 = vsub.f32 %v2504, %v2506
        %v2508 = vmax.f32 %v2507, 0.0
        %v2509 = vsel %vm2505, %v2504, 1.0
        %v2510 = vrcp.pop %v2509
        %v2511 = vmul.f32 %v2508, %v2510
        %v2512 = vsel %vm2505, %v2511, 0.0
        %v2513 = vmul.f32 %v2495, %v2512
        %v2514 = vmul.f32 %v2150, %v2512
        %2517 = vrot.lane.b32.xlu0 %v2513, 65
        %v2518 = vpop.permute.xlu0 %2517
        %2519 = vrot.lane.b32.xlu0 %v2514, 65
        %v2520 = vpop.permute.xlu0 %2519
        %2523 = vrot.lane.b32.xlu0 %v2513, 1
        %v2524 = vpop.permute.xlu0 %2523
        %2525 = vrot.lane.b32.xlu0 %v2514, 1
        %v2526 = vpop.permute.xlu0 %2525
        %v2529 = vsel %vm1595, %v2518, %v2524
        %v2530 = vsel %vm1595, %v2520, %v2526
        %v2531 = vmul.f32 %v2529, %v1600
        %v2532 = vmul.f32 %v2530, %v1600
        %2533 = vrot.lane.b32.xlu0 %v2513, 127
        %v2534 = vpop.permute.xlu0 %2533
        %2535 = vrot.lane.b32.xlu0 %v2514, 127
        %v2536 = vpop.permute.xlu0 %2535
        %2539 = vrot.lane.b32.xlu0 %v2513, 63
        %v2540 = vpop.permute.xlu0 %2539
        %2541 = vrot.lane.b32.xlu0 %v2514, 63
        %v2542 = vpop.permute.xlu0 %2541
        %v2545 = vsel %vm1791, %v2534, %v2540
        %v2546 = vsel %vm1791, %v2536, %v2542
        %v2547 = vmul.f32 %v2545, %v1796
        %v2548 = vmul.f32 %v2546, %v1796
        %2550 = vset.pattern.permute.xlu0 0
        %2551 = vperm.xlu0 %2550, %v1896
        %v2552 = vpop.permute.xlu0 %2551
        %2555 = vset.pattern.permute.xlu0 0
        %2556 = vperm.xlu0 %2555, %v1897
        %v2557 = vpop.permute.xlu0 %2556
        %v2560 = vsel %vm1944, %v1888, 0
        %v2563 = vsel %vm1944, %v1889, 0
        %2565 = vmatprep.subr.mxu0 0.0
        %2566 = vmatpush1.msra.mxu0 %v2531
        %2567 = vmatprep.subr.mxu0 0.0
        %2568 = vmatpush1.msra.mxu0 %v2532
        %2569 = vmatprep.subr.mxu0 0.0
        %2570 = vmatpush1.msra.mxu0 %v2513
        %2571 = vmatprep.subr.mxu0 0.0
        %2572 = vmatpush1.msra.mxu0 %v2514
        %2573 = vmatprep.subr.mxu0 0.0
        %2574 = vmatpush1.msra.mxu0 %v2547
        %2575 = vmatprep.subr.mxu0 0.0
        %2576 = vmatpush1.msra.mxu0 %v2548
        %2577 = vmatprep.subr.mxu0 0.0
        %2578 = vmatpush1.msra.mxu0 0.0
        %2579 = vmatprep.subr.mxu0 0.0
        %2580 = vmatpush1.msra.mxu0 0.0
        %2581 = vmatprep.subr.mxu0 0.0
        %2582 = vmatpush1.msra.mxu0 0.0
        %2583 = vmatprep.subr.mxu0 0.0
        %2584 = vmatpush1.msra.mxu0 0.0
        %2585 = vmatprep.subr.mxu0 0.0
        %2586 = vmatpush1.msra.mxu0 0.0
        %2587 = vmatprep.subr.mxu0 0.0
        %2588 = vmatpush1.msra.mxu0 0.0
        %2589 = vmatprep.subr.mxu0 0.0
        %2590 = vmatpush1.msra.mxu0 0.0
        %2591 = vmatprep.subr.mxu0 0.0
        %2592 = vmatpush1.msra.mxu0 0.0
        %2593 = vmatprep.subr.mxu0 0.0
        %2594 = vmatpush1.msra.mxu0 0.0
        %2595 = vmatprep.subr.mxu0 0.0
        %2596 = vmatpush1.msra.mxu0 0.0
        %2597 = vmatprep.subr.mxu0 0.0
        %2598 = vmatpush1.msra.mxu0 0.0
        %2599 = vmatprep.subr.mxu0 0.0
        %2600 = vmatpush1.msra.mxu0 0.0
        %2601 = vmatprep.subr.mxu0 0.0
        %2602 = vmatpush1.msra.mxu0 0.0
        %2603 = vmatprep.subr.mxu0 0.0
        %2604 = vmatpush1.msra.mxu0 0.0
        %2605 = vmatprep.subr.mxu0 0.0
        %2606 = vmatpush1.msra.mxu0 0.0
        %2607 = vmatprep.subr.mxu0 0.0
        %2608 = vmatpush1.msra.mxu0 0.0
        %2609 = vmatprep.subr.mxu0 0.0
        %2610 = vmatpush1.msra.mxu0 0.0
        %2611 = vmatprep.subr.mxu0 0.0
        %2612 = vmatpush1.msra.mxu0 0.0
        %2613 = vmatprep.subr.mxu0 0.0
        %2614 = vmatpush1.msra.mxu0 0.0
        %2615 = vmatprep.subr.mxu0 0.0
        %2616 = vmatpush1.msra.mxu0 0.0
        %2617 = vmatprep.subr.mxu0 0.0
        %2618 = vmatpush1.msra.mxu0 0.0
        %2619 = vmatprep.subr.mxu0 0.0
        %2620 = vmatpush1.msra.mxu0 0.0
        %2621 = vmatprep.subr.mxu0 0.0
        %2622 = vmatpush1.msra.mxu0 0.0
        %2623 = vmatprep.subr.mxu0 0.0
        %2624 = vmatpush1.msra.mxu0 0.0
        %2625 = vmatprep.subr.mxu0 0.0
        %2626 = vmatpush1.msra.mxu0 0.0
        %2627 = vmatprep.subr.mxu0 0.0
        %2628 = vmatpush1.msra.mxu0 0.0
        %2629 = vmatprep.mubr.f32.mxu0 0.0
        %2630 = vmatmul.mubr.f32.gmra.mrb[0].mxu0 %v2560
        %v2631 = vpop.f32.mrb[0].mxu0
        %v2632 = vadd.f32 %v2552, %v2631
        %v2633 = vpop.f32.mrb[0].mxu0
        %2634 = vmatprep.mubr.f32.mxu0 0.0
        %2635 = vmatmul.mubr.f32.gmra.mrb[0].mxu0 %v2563
        %v2636 = vpop.f32.mrb[0].mxu0
        %v2637 = vadd.f32 %v2557, %v2636
        %v2638 = vpop.f32.mrb[0].mxu0
        %2639 = vdwg.mxu0
        %v2640 = vmax.f32 %v2632, 0.0
        %v2641 = vmax.f32 %v2637, 0.0
        %2644 = vrot.lane.b32.xlu0 %v2640, 65
        %v2645 = vpop.permute.xlu0 %2644
        %2646 = vrot.lane.b32.xlu0 %v2641, 65
        %v2647 = vpop.permute.xlu0 %2646
        %2650 = vrot.lane.b32.xlu0 %v2640, 1
        %v2651 = vpop.permute.xlu0 %2650
        %2652 = vrot.lane.b32.xlu0 %v2641, 1
        %v2653 = vpop.permute.xlu0 %2652
        %v2656 = vsel %vm1595, %v2645, %v2651
        %v2657 = vsel %vm1595, %v2647, %v2653
        %v2658 = vmul.f32 %v2656, %v1600
        %v2659 = vmul.f32 %v2657, %v1600
        %2660 = vrot.lane.b32.xlu0 %v2640, 127
        %v2661 = vpop.permute.xlu0 %2660
        %2662 = vrot.lane.b32.xlu0 %v2641, 127
        %v2663 = vpop.permute.xlu0 %2662
        %2666 = vrot.lane.b32.xlu0 %v2640, 63
        %v2667 = vpop.permute.xlu0 %2666
        %2668 = vrot.lane.b32.xlu0 %v2641, 63
        %v2669 = vpop.permute.xlu0 %2668
        %v2672 = vsel %vm1791, %v2661, %v2667
        %v2673 = vsel %vm1791, %v2663, %v2669
        %v2674 = vmul.f32 %v2672, %v1796
        %v2675 = vmul.f32 %v2673, %v1796
        %2677 = vset.pattern.permute.xlu0 0
        %2678 = vperm.xlu0 %2677, %v1898
        %v2679 = vpop.permute.xlu0 %2678
        %2682 = vset.pattern.permute.xlu0 0
        %2683 = vperm.xlu0 %2682, %v1899
        %v2684 = vpop.permute.xlu0 %2683
        %v2687 = vsel %vm1944, %v1890, 0
        %v2690 = vsel %vm1944, %v1891, 0
        %2692 = vmatprep.subr.mxu0 0.0
        %2693 = vmatpush1.msra.mxu0 %v2658
        %2694 = vmatprep.subr.mxu0 0.0
        %2695 = vmatpush1.msra.mxu0 %v2659
        %2696 = vmatprep.subr.mxu0 0.0
        %2697 = vmatpush1.msra.mxu0 %v2640
        %2698 = vmatprep.subr.mxu0 0.0
        %2699 = vmatpush1.msra.mxu0 %v2641
        %2700 = vmatprep.subr.mxu0 0.0
        %2701 = vmatpush1.msra.mxu0 %v2674
        %2702 = vmatprep.subr.mxu0 0.0
        %2703 = vmatpush1.msra.mxu0 %v2675
        %2704 = vmatprep.subr.mxu0 0.0
        %2705 = vmatpush1.msra.mxu0 0.0
        %2706 = vmatprep.subr.mxu0 0.0
        %2707 = vmatpush1.msra.mxu0 0.0
        %2708 = vmatprep.subr.mxu0 0.0
        %2709 = vmatpush1.msra.mxu0 0.0
        %2710 = vmatprep.subr.mxu0 0.0
        %2711 = vmatpush1.msra.mxu0 0.0
        %2712 = vmatprep.subr.mxu0 0.0
        %2713 = vmatpush1.msra.mxu0 0.0
        %2714 = vmatprep.subr.mxu0 0.0
        %2715 = vmatpush1.msra.mxu0 0.0
        %2716 = vmatprep.subr.mxu0 0.0
        %2717 = vmatpush1.msra.mxu0 0.0
        %2718 = vmatprep.subr.mxu0 0.0
        %2719 = vmatpush1.msra.mxu0 0.0
        %2720 = vmatprep.subr.mxu0 0.0
        %2721 = vmatpush1.msra.mxu0 0.0
        %2722 = vmatprep.subr.mxu0 0.0
        %2723 = vmatpush1.msra.mxu0 0.0
        %2724 = vmatprep.subr.mxu0 0.0
        %2725 = vmatpush1.msra.mxu0 0.0
        %2726 = vmatprep.subr.mxu0 0.0
        %2727 = vmatpush1.msra.mxu0 0.0
        %2728 = vmatprep.subr.mxu0 0.0
        %2729 = vmatpush1.msra.mxu0 0.0
        %2730 = vmatprep.subr.mxu0 0.0
        %2731 = vmatpush1.msra.mxu0 0.0
        %2732 = vmatprep.subr.mxu0 0.0
        %2733 = vmatpush1.msra.mxu0 0.0
        %2734 = vmatprep.subr.mxu0 0.0
        %2735 = vmatpush1.msra.mxu0 0.0
        %2736 = vmatprep.subr.mxu0 0.0
        %2737 = vmatpush1.msra.mxu0 0.0
        %2738 = vmatprep.subr.mxu0 0.0
        %2739 = vmatpush1.msra.mxu0 0.0
        %2740 = vmatprep.subr.mxu0 0.0
        %2741 = vmatpush1.msra.mxu0 0.0
        %2742 = vmatprep.subr.mxu0 0.0
        %2743 = vmatpush1.msra.mxu0 0.0
        %2744 = vmatprep.subr.mxu0 0.0
        %2745 = vmatpush1.msra.mxu0 0.0
        %2746 = vmatprep.subr.mxu0 0.0
        %2747 = vmatpush1.msra.mxu0 0.0
        %2748 = vmatprep.subr.mxu0 0.0
        %2749 = vmatpush1.msra.mxu0 0.0
        %2750 = vmatprep.subr.mxu0 0.0
        %2751 = vmatpush1.msra.mxu0 0.0
        %2752 = vmatprep.subr.mxu0 0.0
        %2753 = vmatpush1.msra.mxu0 0.0
        %2754 = vmatprep.subr.mxu0 0.0
        %2755 = vmatpush1.msra.mxu0 0.0
        %2756 = vmatprep.mubr.f32.mxu0 0.0
        %2757 = vmatmul.mubr.f32.gmra.mrb[0].mxu0 %v2687
        %v2758 = vpop.f32.mrb[0].mxu0
        %v2759 = vadd.f32 %v2679, %v2758
        %v2760 = vpop.f32.mrb[0].mxu0
        %2761 = vmatprep.mubr.f32.mxu0 0.0
        %2762 = vmatmul.mubr.f32.gmra.mrb[0].mxu0 %v2690
        %v2763 = vpop.f32.mrb[0].mxu0
        %v2764 = vadd.f32 %v2684, %v2763
        %v2765 = vpop.f32.mrb[0].mxu0
        %2766 = vdwg.mxu0
        %v2767 = vld [vmem:[%s1179] sm:$0x3]
        %v2768 = vld [vmem:[%s1175] sm:$0x3]
        %2771 = vrot.lane.b32.xlu0 %v2759, 65
        %v2772 = vpop.permute.xlu0 %2771
        %2773 = vrot.lane.b32.xlu0 %v2764, 65
        %v2774 = vpop.permute.xlu0 %2773
        %2777 = vrot.lane.b32.xlu0 %v2759, 1
        %v2778 = vpop.permute.xlu0 %2777
        %2779 = vrot.lane.b32.xlu0 %v2764, 1
        %v2780 = vpop.permute.xlu0 %2779
        %v2783 = vsel %vm1595, %v2772, %v2778
        %v2784 = vsel %vm1595, %v2774, %v2780
        %v2785 = vmul.f32 %v2783, %v1600
        %v2786 = vmul.f32 %v2784, %v1600
        %2787 = vrot.lane.b32.xlu0 %v2759, 127
        %v2788 = vpop.permute.xlu0 %2787
        %2789 = vrot.lane.b32.xlu0 %v2764, 127
        %v2790 = vpop.permute.xlu0 %2789
        %2793 = vrot.lane.b32.xlu0 %v2759, 63
        %v2794 = vpop.permute.xlu0 %2793
        %2795 = vrot.lane.b32.xlu0 %v2764, 63
        %v2796 = vpop.permute.xlu0 %2795
        %v2799 = vsel %vm1791, %v2788, %v2794
        %v2800 = vsel %vm1791, %v2790, %v2796
        %v2801 = vmul.f32 %v2799, %v1796
        %v2802 = vmul.f32 %v2800, %v1796
        %v2804 = vsel %vm1944, %v2768, 0
        %2806 = vmatprep.subr.mxu0 0.0
        %2807 = vmatpush1.msra.mxu0 %v2785
        %2808 = vmatprep.subr.mxu0 0.0
        %2809 = vmatpush1.msra.mxu0 %v2786
        %2810 = vmatprep.subr.mxu0 0.0
        %2811 = vmatpush1.msra.mxu0 %v2759
        %2812 = vmatprep.subr.mxu0 0.0
        %2813 = vmatpush1.msra.mxu0 %v2764
        %2814 = vmatprep.subr.mxu0 0.0
        %2815 = vmatpush1.msra.mxu0 %v2801
        %2816 = vmatprep.subr.mxu0 0.0
        %2817 = vmatpush1.msra.mxu0 %v2802
        %2818 = vmatprep.subr.mxu0 0.0
        %2819 = vmatpush1.msra.mxu0 0.0
        %2820 = vmatprep.subr.mxu0 0.0
        %2821 = vmatpush1.msra.mxu0 0.0
        %2822 = vmatprep.subr.mxu0 0.0
        %2823 = vmatpush1.msra.mxu0 0.0
        %2824 = vmatprep.subr.mxu0 0.0
        %2825 = vmatpush1.msra.mxu0 0.0
        %2826 = vmatprep.subr.mxu0 0.0
        %2827 = vmatpush1.msra.mxu0 0.0
        %2828 = vmatprep.subr.mxu0 0.0
        %2829 = vmatpush1.msra.mxu0 0.0
        %2830 = vmatprep.subr.mxu0 0.0
        %2831 = vmatpush1.msra.mxu0 0.0
        %2832 = vmatprep.subr.mxu0 0.0
        %2833 = vmatpush1.msra.mxu0 0.0
        %2834 = vmatprep.subr.mxu0 0.0
        %2835 = vmatpush1.msra.mxu0 0.0
        %2836 = vmatprep.subr.mxu0 0.0
        %2837 = vmatpush1.msra.mxu0 0.0
        %2838 = vmatprep.subr.mxu0 0.0
        %2839 = vmatpush1.msra.mxu0 0.0
        %2840 = vmatprep.subr.mxu0 0.0
        %2841 = vmatpush1.msra.mxu0 0.0
        %2842 = vmatprep.subr.mxu0 0.0
        %2843 = vmatpush1.msra.mxu0 0.0
        %2844 = vmatprep.subr.mxu0 0.0
        %2845 = vmatpush1.msra.mxu0 0.0
        %2846 = vmatprep.subr.mxu0 0.0
        %2847 = vmatpush1.msra.mxu0 0.0
        %2848 = vmatprep.subr.mxu0 0.0
        %2849 = vmatpush1.msra.mxu0 0.0
        %2850 = vmatprep.subr.mxu0 0.0
        %2851 = vmatpush1.msra.mxu0 0.0
        %2852 = vmatprep.subr.mxu0 0.0
        %2853 = vmatpush1.msra.mxu0 0.0
        %2854 = vmatprep.subr.mxu0 0.0
        %2855 = vmatpush1.msra.mxu0 0.0
        %2856 = vmatprep.subr.mxu0 0.0
        %2857 = vmatpush1.msra.mxu0 0.0
        %2858 = vmatprep.subr.mxu0 0.0
        %2859 = vmatpush1.msra.mxu0 0.0
        %2860 = vmatprep.subr.mxu0 0.0
        %2861 = vmatpush1.msra.mxu0 0.0
        %2862 = vmatprep.subr.mxu0 0.0
        %2863 = vmatpush1.msra.mxu0 0.0
        %2864 = vmatprep.subr.mxu0 0.0
        %2865 = vmatpush1.msra.mxu0 0.0
        %2866 = vmatprep.subr.mxu0 0.0
        %2867 = vmatpush1.msra.mxu0 0.0
        %2868 = vmatprep.subr.mxu0 0.0
        %2869 = vmatpush1.msra.mxu0 0.0
        %2870 = vmatprep.mubr.f32.mxu0 0.0
        %2871 = vmatmul.mubr.f32.gmra.mrb[0].mxu0 %v2804
        %v2872 = vpop.f32.mrb[0].mxu0
        %v2873 = vadd.f32 0.0, %v2872
        %v2874 = vpop.f32.mrb[0].mxu0
        %2875 = vdwg.mxu0
        %2877 = vset.pattern.permute.xlu0 0
        %2878 = vperm.xlu0 %2877, %v2767
        %v2879 = vpop.permute.xlu0 %2878
        %v2881 = vadd.f32 %v2879, %v2873
        %v2883 = vrot.slane %v2881, 1
        %2884 = vrot.lane.b32.xlu0 %v2883, 32
        %v2885 = vpop.permute.xlu0 %2884
        %v2887 = vsel %vm1449, %v2881, %v2885
        %v2888 = vlaneseq
        %v2889 = vshrl.u32 %v2888, 7
        %v2890 = vsub.s32 0, %v2889
        %v2891 = vrot.slane %v2887, %v2890
        %v2892 = vsel %vm1570, %v2891, 0.0
        %v2893 = vadd.f32 %v2892, 0.0
        %2894 = vrot.lane.b32.xlu0 %v2881, 96
        %v2895 = vpop.permute.xlu0 %2894
        %v2898 = vsel %vm1449, %v2895, %v2883
        %vm2899 = vcmp.eq.s32.totalorder %v1567, 1
        %v2900 = vsel %vm2899, 1, 0
        %vm2901 = vcmp.eq.s32.totalorder %v2900, 1
        %v2902 = vlaneseq
        %v2903 = vshrl.u32 %v2902, 7
        %v2904 = vsub.s32 0, %v2903
        %v2905 = vrot.slane %v2898, %v2904
        %v2906 = vsel %vm2901, %v2905, 0.0
        %v2907 = vadd.f32 %v2893, %v2906
        %v2908 = vadd.f32 %v1452, %v2907
        %v2909 = vld [vmem:[%s9] sm:$0xff]
        %v2910 = vld [vmem:[%s9 + $0x8] sm:$0xff]
        %v2911 = vld [vmem:[%s9 + $0x10] sm:$0xff]
        %v2912 = vld [vmem:[%s9 + $0x18] sm:$0xff]
        %v2913 = vld [vmem:[%s9 + $0x20] sm:$0xff]
        %v2914 = vld [vmem:[%s9 + $0x28] sm:$0xff]
        %v2915 = vld [vmem:[%s9 + $0x30] sm:$0xff]
        %v2916 = vld [vmem:[%s9 + $0x38] sm:$0xff]
        %v2918 = vsel %vm1483, %v2908, 0
        %2920 = vmatprep.subr.mxu0 0.0
        %2921 = vmatpush1.msra.mxu0 %v2909
        %2922 = vmatprep.subr.mxu0 0.0
        %2923 = vmatpush1.msra.mxu0 %v2910
        %2924 = vmatprep.subr.mxu0 0.0
        %2925 = vmatpush1.msra.mxu0 %v2911
        %2926 = vmatprep.subr.mxu0 0.0
        %2927 = vmatpush1.msra.mxu0 %v2912
        %2928 = vmatprep.subr.mxu0 0.0
        %2929 = vmatpush1.msra.mxu0 %v2913
        %2930 = vmatprep.subr.mxu0 0.0
        %2931 = vmatpush1.msra.mxu0 %v2914
        %2932 = vmatprep.subr.mxu0 0.0
        %2933 = vmatpush1.msra.mxu0 %v2915
        %2934 = vmatprep.subr.mxu0 0.0
        %2935 = vmatpush1.msra.mxu0 %v2916
        %2936 = vmatprep.subr.mxu0 0.0
        %2937 = vmatpush1.msra.mxu0 0.0
        %2938 = vmatprep.subr.mxu0 0.0
        %2939 = vmatpush1.msra.mxu0 0.0
        %2940 = vmatprep.subr.mxu0 0.0
        %2941 = vmatpush1.msra.mxu0 0.0
        %2942 = vmatprep.subr.mxu0 0.0
        %2943 = vmatpush1.msra.mxu0 0.0
        %2944 = vmatprep.subr.mxu0 0.0
        %2945 = vmatpush1.msra.mxu0 0.0
        %2946 = vmatprep.subr.mxu0 0.0
        %2947 = vmatpush1.msra.mxu0 0.0
        %2948 = vmatprep.subr.mxu0 0.0
        %2949 = vmatpush1.msra.mxu0 0.0
        %2950 = vmatprep.subr.mxu0 0.0
        %2951 = vmatpush1.msra.mxu0 0.0
        %2952 = vmatprep.subr.mxu0 0.0
        %2953 = vmatpush1.msra.mxu0 0.0
        %2954 = vmatprep.subr.mxu0 0.0
        %2955 = vmatpush1.msra.mxu0 0.0
        %2956 = vmatprep.subr.mxu0 0.0
        %2957 = vmatpush1.msra.mxu0 0.0
        %2958 = vmatprep.subr.mxu0 0.0
        %2959 = vmatpush1.msra.mxu0 0.0
        %2960 = vmatprep.subr.mxu0 0.0
        %2961 = vmatpush1.msra.mxu0 0.0
        %2962 = vmatprep.subr.mxu0 0.0
        %2963 = vmatpush1.msra.mxu0 0.0
        %2964 = vmatprep.subr.mxu0 0.0
        %2965 = vmatpush1.msra.mxu0 0.0
        %2966 = vmatprep.subr.mxu0 0.0
        %2967 = vmatpush1.msra.mxu0 0.0
        %2968 = vmatprep.subr.mxu0 0.0
        %2969 = vmatpush1.msra.mxu0 0.0
        %2970 = vmatprep.subr.mxu0 0.0
        %2971 = vmatpush1.msra.mxu0 0.0
        %2972 = vmatprep.subr.mxu0 0.0
        %2973 = vmatpush1.msra.mxu0 0.0
        %2974 = vmatprep.subr.mxu0 0.0
        %2975 = vmatpush1.msra.mxu0 0.0
        %2976 = vmatprep.subr.mxu0 0.0
        %2977 = vmatpush1.msra.mxu0 0.0
        %2978 = vmatprep.subr.mxu0 0.0
        %2979 = vmatpush1.msra.mxu0 0.0
        %2980 = vmatprep.subr.mxu0 0.0
        %2981 = vmatpush1.msra.mxu0 0.0
        %2982 = vmatprep.subr.mxu0 0.0
        %2983 = vmatpush1.msra.mxu0 0.0
        %2984 = vmatprep.mubr.f32.mxu0 0.0
        %2985 = vmatmul.mubr.f32.gmra.mrb[0].mxu0 %v2918
        %v2986 = vpop.f32.mrb[0].mxu0
        %v2987 = vadd.f32 0.0, %v2986
        %v2988 = vpop.f32.mrb[0].mxu0
        %2989 = vdwg.mxu0
        %v2990 = vsub.f32 %v1257, %v2987
        %v2991 = vld [vmem:[%s13] sm:$0xff]
        %v2992 = vld [vmem:[%s13 + $0x8] sm:$0xff]
        %v2994 = vsel %vm1260, %v2990, 0
        %2996 = vmatprep.subr.mxu0 0.0
        %2997 = vmatpush1.msra.mxu0 %v2991
        %2998 = vmatprep.subr.mxu0 0.0
        %2999 = vmatpush1.msra.mxu0 %v2992
        %3000 = vmatprep.subr.mxu0 0.0
        %3001 = vmatpush1.msra.mxu0 0.0
        %3002 = vmatprep.subr.mxu0 0.0
        %3003 = vmatpush1.msra.mxu0 0.0
        %3004 = vmatprep.subr.mxu0 0.0
        %3005 = vmatpush1.msra.mxu0 0.0
        %3006 = vmatprep.subr.mxu0 0.0
        %3007 = vmatpush1.msra.mxu0 0.0
        %3008 = vmatprep.subr.mxu0 0.0
        %3009 = vmatpush1.msra.mxu0 0.0
        %3010 = vmatprep.subr.mxu0 0.0
        %3011 = vmatpush1.msra.mxu0 0.0
        %3012 = vmatprep.subr.mxu0 0.0
        %3013 = vmatpush1.msra.mxu0 0.0
        %3014 = vmatprep.subr.mxu0 0.0
        %3015 = vmatpush1.msra.mxu0 0.0
        %3016 = vmatprep.subr.mxu0 0.0
        %3017 = vmatpush1.msra.mxu0 0.0
        %3018 = vmatprep.subr.mxu0 0.0
        %3019 = vmatpush1.msra.mxu0 0.0
        %3020 = vmatprep.subr.mxu0 0.0
        %3021 = vmatpush1.msra.mxu0 0.0
        %3022 = vmatprep.subr.mxu0 0.0
        %3023 = vmatpush1.msra.mxu0 0.0
        %3024 = vmatprep.subr.mxu0 0.0
        %3025 = vmatpush1.msra.mxu0 0.0
        %3026 = vmatprep.subr.mxu0 0.0
        %3027 = vmatpush1.msra.mxu0 0.0
        %3028 = vmatprep.subr.mxu0 0.0
        %3029 = vmatpush1.msra.mxu0 0.0
        %3030 = vmatprep.subr.mxu0 0.0
        %3031 = vmatpush1.msra.mxu0 0.0
        %3032 = vmatprep.subr.mxu0 0.0
        %3033 = vmatpush1.msra.mxu0 0.0
        %3034 = vmatprep.subr.mxu0 0.0
        %3035 = vmatpush1.msra.mxu0 0.0
        %3036 = vmatprep.subr.mxu0 0.0
        %3037 = vmatpush1.msra.mxu0 0.0
        %3038 = vmatprep.subr.mxu0 0.0
        %3039 = vmatpush1.msra.mxu0 0.0
        %3040 = vmatprep.subr.mxu0 0.0
        %3041 = vmatpush1.msra.mxu0 0.0
        %3042 = vmatprep.subr.mxu0 0.0
        %3043 = vmatpush1.msra.mxu0 0.0
        %3044 = vmatprep.subr.mxu0 0.0
        %3045 = vmatpush1.msra.mxu0 0.0
        %3046 = vmatprep.subr.mxu0 0.0
        %3047 = vmatpush1.msra.mxu0 0.0
        %3048 = vmatprep.subr.mxu0 0.0
        %3049 = vmatpush1.msra.mxu0 0.0
        %3050 = vmatprep.subr.mxu0 0.0
        %3051 = vmatpush1.msra.mxu0 0.0
        %3052 = vmatprep.subr.mxu0 0.0
        %3053 = vmatpush1.msra.mxu0 0.0
        %3054 = vmatprep.subr.mxu0 0.0
        %3055 = vmatpush1.msra.mxu0 0.0
        %3056 = vmatprep.subr.mxu0 0.0
        %3057 = vmatpush1.msra.mxu0 0.0
        %3058 = vmatprep.subr.mxu0 0.0
        %3059 = vmatpush1.msra.mxu0 0.0
        %3060 = vmatprep.mubr.f32.mxu0 0.0
        %3061 = vmatmul.mubr.f32.gmra.mrb[0].mxu0 %v2994
        %v3062 = vpop.f32.mrb[0].mxu0
        %v3063 = vadd.f32 0.0, %v3062
        %v3064 = vpop.f32.mrb[0].mxu0
        %3065 = vdwg.mxu0
        %v3066 = vmul.f32 %v2908, %v3063
        %3068 = vrot.lane.b32.xlu0 %v3066, 96
        %v3069 = vpop.permute.xlu0 %3068
        %v3071 = vadd.f32 %v3066, %v3069
        %3073 = vrot.lane.b32.xlu0 %v3063, 96
        %v3074 = vpop.permute.xlu0 %3073
        %v3076 = vmul.f32 %v2908, %v3074
        %3077 = vrot.lane.b32.xlu0 %v3063, 32
        %v3078 = vpop.permute.xlu0 %3077
        %v3080 = vmul.f32 %v2908, %v3078
        %3082 = vrot.lane.b32.xlu0 %v3080, 96
        %v3083 = vpop.permute.xlu0 %3082
        %v3085 = vsub.f32 %v3076, %v3083
        %3087 = vrot.lane.b32.xlu0 %v3085, 32
        %v3088 = vpop.permute.xlu0 %3087
        %v3090 = vsel %vm1449, %v3071, %v3088
        %v3091 = vmul.f32 %v3090, 0.032258064
        %s3092 = sadd.s32 %s1557, 1
        %s3093 = sld [smem:[#allocation4 + %s3092]]
        %v3095 = vrot.slane %v3091, 1
        %3096 = vrot.lane.b32.xlu0 %v3095, 32
        %v3097 = vpop.permute.xlu0 %3096
        %v3099 = vsel %vm1449, %v3091, %v3097
        %3100 = vrot.lane.b32.xlu0 %v3091, 96
        %v3101 = vpop.permute.xlu0 %3100
        %v3104 = vsel %vm1449, %v3101, %v3095
        %v3105 = vlaneseq
        %v3106 = vshrl.u32 %v3105, 7
        %v3107 = vsub.s32 0, %v3106
        %v3108 = vrot.slane %v3099, %v3107
        %v3109 = vlaneseq
        %v3110 = vshrl.u32 %v3109, 7
        %v3111 = vsub.s32 0, %v3110
        %v3112 = vrot.slane %v3104, %v3111
        %v3113 = vsel %vm1570, %v3108, %v3112
        %v3114 = vld [vmem:[%s1194] sm:$0xff]
        %v3115 = vld [vmem:[%s1194 + $0x8] sm:$0xff]
        %v3116 = vld [vmem:[%s1194 + $0x10] sm:$0xff]
        %v3117 = vld [vmem:[%s1194 + $0x18] sm:$0xff]
        %v3118 = vld [vmem:[%s1194 + $0x20] sm:$0xff]
        %v3119 = vld [vmem:[%s1194 + $0x28] sm:$0xff]
        %v3120 = vld [vmem:[%s1199] sm:$0xff]
        %v3121 = vld [vmem:[%s1199 + $0x8] sm:$0xff]
        %3123 = vrot.lane.b32.xlu0 %v3113, 65
        %v3124 = vpop.permute.xlu0 %3123
        %3126 = vrot.lane.b32.xlu0 %v3113, 1
        %v3127 = vpop.permute.xlu0 %3126
        %v3129 = vsel %vm1595, %v3124, %v3127
        %v3130 = vmul.f32 %v3129, %v1600
        %v3132 = vsel %vm1602, %v3114, 0
        %v3135 = vsel %vm1602, %v3115, 0
        %v3138 = vsel %vm1609, %v3130, 0
        %3140 = vmatprep.subr.mxu0 0.0
        %3141 = vmatpush1.msra.mxu0 %v3138
        %3142 = vmatprep.subr.mxu0 0.0
        %3143 = vmatpush1.msra.mxu0 0.0
        %3144 = vmatprep.subr.mxu0 0.0
        %3145 = vmatpush1.msra.mxu0 0.0
        %3146 = vmatprep.subr.mxu0 0.0
        %3147 = vmatpush1.msra.mxu0 0.0
        %3148 = vmatprep.subr.mxu0 0.0
        %3149 = vmatpush1.msra.mxu0 0.0
        %3150 = vmatprep.subr.mxu0 0.0
        %3151 = vmatpush1.msra.mxu0 0.0
        %3152 = vmatprep.subr.mxu0 0.0
        %3153 = vmatpush1.msra.mxu0 0.0
        %3154 = vmatprep.subr.mxu0 0.0
        %3155 = vmatpush1.msra.mxu0 0.0
        %3156 = vmatprep.subr.mxu0 0.0
        %3157 = vmatpush1.msra.mxu0 0.0
        %3158 = vmatprep.subr.mxu0 0.0
        %3159 = vmatpush1.msra.mxu0 0.0
        %3160 = vmatprep.subr.mxu0 0.0
        %3161 = vmatpush1.msra.mxu0 0.0
        %3162 = vmatprep.subr.mxu0 0.0
        %3163 = vmatpush1.msra.mxu0 0.0
        %3164 = vmatprep.subr.mxu0 0.0
        %3165 = vmatpush1.msra.mxu0 0.0
        %3166 = vmatprep.subr.mxu0 0.0
        %3167 = vmatpush1.msra.mxu0 0.0
        %3168 = vmatprep.subr.mxu0 0.0
        %3169 = vmatpush1.msra.mxu0 0.0
        %3170 = vmatprep.subr.mxu0 0.0
        %3171 = vmatpush1.msra.mxu0 0.0
        %3172 = vmatprep.subr.mxu0 0.0
        %3173 = vmatpush1.msra.mxu0 0.0
        %3174 = vmatprep.subr.mxu0 0.0
        %3175 = vmatpush1.msra.mxu0 0.0
        %3176 = vmatprep.subr.mxu0 0.0
        %3177 = vmatpush1.msra.mxu0 0.0
        %3178 = vmatprep.subr.mxu0 0.0
        %3179 = vmatpush1.msra.mxu0 0.0
        %3180 = vmatprep.subr.mxu0 0.0
        %3181 = vmatpush1.msra.mxu0 0.0
        %3182 = vmatprep.subr.mxu0 0.0
        %3183 = vmatpush1.msra.mxu0 0.0
        %3184 = vmatprep.subr.mxu0 0.0
        %3185 = vmatpush1.msra.mxu0 0.0
        %3186 = vmatprep.subr.mxu0 0.0
        %3187 = vmatpush1.msra.mxu0 0.0
        %3188 = vmatprep.subr.mxu0 0.0
        %3189 = vmatpush1.msra.mxu0 0.0
        %3190 = vmatprep.subr.mxu0 0.0
        %3191 = vmatpush1.msra.mxu0 0.0
        %3192 = vmatprep.subr.mxu0 0.0
        %3193 = vmatpush1.msra.mxu0 0.0
        %3194 = vmatprep.subr.mxu0 0.0
        %3195 = vmatpush1.msra.mxu0 0.0
        %3196 = vmatprep.subr.mxu0 0.0
        %3197 = vmatpush1.msra.mxu0 0.0
        %3198 = vmatprep.subr.mxu0 0.0
        %3199 = vmatpush1.msra.mxu0 0.0
        %3200 = vmatprep.subr.mxu0 0.0
        %3201 = vmatpush1.msra.mxu0 0.0
        %3202 = vmatprep.subr.mxu0 0.0
        %3203 = vmatpush1.msra.mxu0 0.0
        %3204 = vmatprep.mubr.f32.mxu0 0.0
        %3205 = vmatmul.mubr.f32.gmra.mrb[0].mxu0 %v3132
        %v3206 = vpop.f32.mrb[0].mxu0
        %v3207 = vadd.f32 0.0, %v3206
        %v3208 = vpop.f32.mrb[0].mxu0
        %3209 = vmatprep.mubr.f32.mxu0 0.0
        %3210 = vmatmul.mubr.f32.gmra.mrb[0].mxu0 %v3135
        %v3211 = vpop.f32.mrb[0].mxu0
        %v3212 = vadd.f32 0.0, %v3211
        %v3213 = vpop.f32.mrb[0].mxu0
        %3214 = vdwg.mxu0
        %3216 = vset.pattern.permute.xlu0 0
        %3217 = vperm.xlu0 %3216, %v3120
        %v3218 = vpop.permute.xlu0 %3217
        %3221 = vset.pattern.permute.xlu0 0
        %3222 = vperm.xlu0 %3221, %v3121
        %v3223 = vpop.permute.xlu0 %3222
        %v3225 = vadd.f32 %v3218, %v3207
        %v3226 = vadd.f32 %v3223, %v3212
        %v3228 = vsel %vm1602, %v3116, 0
        %v3231 = vsel %vm1602, %v3117, 0
        %v3233 = vsel %vm1609, %v3113, 0
        %3235 = vmatprep.subr.mxu0 0.0
        %3236 = vmatpush1.msra.mxu0 %v3233
        %3237 = vmatprep.subr.mxu0 0.0
        %3238 = vmatpush1.msra.mxu0 0.0
        %3239 = vmatprep.subr.mxu0 0.0
        %3240 = vmatpush1.msra.mxu0 0.0
        %3241 = vmatprep.subr.mxu0 0.0
        %3242 = vmatpush1.msra.mxu0 0.0
        %3243 = vmatprep.subr.mxu0 0.0
        %3244 = vmatpush1.msra.mxu0 0.0
        %3245 = vmatprep.subr.mxu0 0.0
        %3246 = vmatpush1.msra.mxu0 0.0
        %3247 = vmatprep.subr.mxu0 0.0
        %3248 = vmatpush1.msra.mxu0 0.0
        %3249 = vmatprep.subr.mxu0 0.0
        %3250 = vmatpush1.msra.mxu0 0.0
        %3251 = vmatprep.subr.mxu0 0.0
        %3252 = vmatpush1.msra.mxu0 0.0
        %3253 = vmatprep.subr.mxu0 0.0
        %3254 = vmatpush1.msra.mxu0 0.0
        %3255 = vmatprep.subr.mxu0 0.0
        %3256 = vmatpush1.msra.mxu0 0.0
        %3257 = vmatprep.subr.mxu0 0.0
        %3258 = vmatpush1.msra.mxu0 0.0
        %3259 = vmatprep.subr.mxu0 0.0
        %3260 = vmatpush1.msra.mxu0 0.0
        %3261 = vmatprep.subr.mxu0 0.0
        %3262 = vmatpush1.msra.mxu0 0.0
        %3263 = vmatprep.subr.mxu0 0.0
        %3264 = vmatpush1.msra.mxu0 0.0
        %3265 = vmatprep.subr.mxu0 0.0
        %3266 = vmatpush1.msra.mxu0 0.0
        %3267 = vmatprep.subr.mxu0 0.0
        %3268 = vmatpush1.msra.mxu0 0.0
        %3269 = vmatprep.subr.mxu0 0.0
        %3270 = vmatpush1.msra.mxu0 0.0
        %3271 = vmatprep.subr.mxu0 0.0
        %3272 = vmatpush1.msra.mxu0 0.0
        %3273 = vmatprep.subr.mxu0 0.0
        %3274 = vmatpush1.msra.mxu0 0.0
        %3275 = vmatprep.subr.mxu0 0.0
        %3276 = vmatpush1.msra.mxu0 0.0
        %3277 = vmatprep.subr.mxu0 0.0
        %3278 = vmatpush1.msra.mxu0 0.0
        %3279 = vmatprep.subr.mxu0 0.0
        %3280 = vmatpush1.msra.mxu0 0.0
        %3281 = vmatprep.subr.mxu0 0.0
        %3282 = vmatpush1.msra.mxu0 0.0
        %3283 = vmatprep.subr.mxu0 0.0
        %3284 = vmatpush1.msra.mxu0 0.0
        %3285 = vmatprep.subr.mxu0 0.0
        %3286 = vmatpush1.msra.mxu0 0.0
        %3287 = vmatprep.subr.mxu0 0.0
        %3288 = vmatpush1.msra.mxu0 0.0
        %3289 = vmatprep.subr.mxu0 0.0
        %3290 = vmatpush1.msra.mxu0 0.0
        %3291 = vmatprep.subr.mxu0 0.0
        %3292 = vmatpush1.msra.mxu0 0.0
        %3293 = vmatprep.subr.mxu0 0.0
        %3294 = vmatpush1.msra.mxu0 0.0
        %3295 = vmatprep.subr.mxu0 0.0
        %3296 = vmatpush1.msra.mxu0 0.0
        %3297 = vmatprep.subr.mxu0 0.0
        %3298 = vmatpush1.msra.mxu0 0.0
        %3299 = vmatprep.mubr.f32.mxu0 0.0
        %3300 = vmatmul.mubr.f32.gmra.mrb[0].mxu0 %v3228
        %v3301 = vpop.f32.mrb[0].mxu0
        %v3302 = vadd.f32 0.0, %v3301
        %v3303 = vpop.f32.mrb[0].mxu0
        %3304 = vmatprep.mubr.f32.mxu0 0.0
        %3305 = vmatmul.mubr.f32.gmra.mrb[0].mxu0 %v3231
        %v3306 = vpop.f32.mrb[0].mxu0
        %v3307 = vadd.f32 0.0, %v3306
        %v3308 = vpop.f32.mrb[0].mxu0
        %3309 = vdwg.mxu0
        %v3310 = vadd.f32 %v3225, %v3302
        %v3311 = vadd.f32 %v3226, %v3307
        %3312 = vrot.lane.b32.xlu0 %v3113, 127
        %v3313 = vpop.permute.xlu0 %3312
        %3315 = vrot.lane.b32.xlu0 %v3113, 63
        %v3316 = vpop.permute.xlu0 %3315
        %v3318 = vsel %vm1791, %v3313, %v3316
        %v3319 = vmul.f32 %v3318, %v1796
        %v3321 = vsel %vm1602, %v3118, 0
        %v3324 = vsel %vm1602, %v3119, 0
        %v3327 = vsel %vm1609, %v3319, 0
        %3329 = vmatprep.subr.mxu0 0.0
        %3330 = vmatpush1.msra.mxu0 %v3327
        %3331 = vmatprep.subr.mxu0 0.0
        %3332 = vmatpush1.msra.mxu0 0.0
        %3333 = vmatprep.subr.mxu0 0.0
        %3334 = vmatpush1.msra.mxu0 0.0
        %3335 = vmatprep.subr.mxu0 0.0
        %3336 = vmatpush1.msra.mxu0 0.0
        %3337 = vmatprep.subr.mxu0 0.0
        %3338 = vmatpush1.msra.mxu0 0.0
        %3339 = vmatprep.subr.mxu0 0.0
        %3340 = vmatpush1.msra.mxu0 0.0
        %3341 = vmatprep.subr.mxu0 0.0
        %3342 = vmatpush1.msra.mxu0 0.0
        %3343 = vmatprep.subr.mxu0 0.0
        %3344 = vmatpush1.msra.mxu0 0.0
        %3345 = vmatprep.subr.mxu0 0.0
        %3346 = vmatpush1.msra.mxu0 0.0
        %3347 = vmatprep.subr.mxu0 0.0
        %3348 = vmatpush1.msra.mxu0 0.0
        %3349 = vmatprep.subr.mxu0 0.0
        %3350 = vmatpush1.msra.mxu0 0.0
        %3351 = vmatprep.subr.mxu0 0.0
        %3352 = vmatpush1.msra.mxu0 0.0
        %3353 = vmatprep.subr.mxu0 0.0
        %3354 = vmatpush1.msra.mxu0 0.0
        %3355 = vmatprep.subr.mxu0 0.0
        %3356 = vmatpush1.msra.mxu0 0.0
        %3357 = vmatprep.subr.mxu0 0.0
        %3358 = vmatpush1.msra.mxu0 0.0
        %3359 = vmatprep.subr.mxu0 0.0
        %3360 = vmatpush1.msra.mxu0 0.0
        %3361 = vmatprep.subr.mxu0 0.0
        %3362 = vmatpush1.msra.mxu0 0.0
        %3363 = vmatprep.subr.mxu0 0.0
        %3364 = vmatpush1.msra.mxu0 0.0
        %3365 = vmatprep.subr.mxu0 0.0
        %3366 = vmatpush1.msra.mxu0 0.0
        %3367 = vmatprep.subr.mxu0 0.0
        %3368 = vmatpush1.msra.mxu0 0.0
        %3369 = vmatprep.subr.mxu0 0.0
        %3370 = vmatpush1.msra.mxu0 0.0
        %3371 = vmatprep.subr.mxu0 0.0
        %3372 = vmatpush1.msra.mxu0 0.0
        %3373 = vmatprep.subr.mxu0 0.0
        %3374 = vmatpush1.msra.mxu0 0.0
        %3375 = vmatprep.subr.mxu0 0.0
        %3376 = vmatpush1.msra.mxu0 0.0
        %3377 = vmatprep.subr.mxu0 0.0
        %3378 = vmatpush1.msra.mxu0 0.0
        %3379 = vmatprep.subr.mxu0 0.0
        %3380 = vmatpush1.msra.mxu0 0.0
        %3381 = vmatprep.subr.mxu0 0.0
        %3382 = vmatpush1.msra.mxu0 0.0
        %3383 = vmatprep.subr.mxu0 0.0
        %3384 = vmatpush1.msra.mxu0 0.0
        %3385 = vmatprep.subr.mxu0 0.0
        %3386 = vmatpush1.msra.mxu0 0.0
        %3387 = vmatprep.subr.mxu0 0.0
        %3388 = vmatpush1.msra.mxu0 0.0
        %3389 = vmatprep.subr.mxu0 0.0
        %3390 = vmatpush1.msra.mxu0 0.0
        %3391 = vmatprep.subr.mxu0 0.0
        %3392 = vmatpush1.msra.mxu0 0.0
        %3393 = vmatprep.mubr.f32.mxu0 0.0
        %3394 = vmatmul.mubr.f32.gmra.mrb[0].mxu0 %v3321
        %v3395 = vpop.f32.mrb[0].mxu0
        %v3396 = vadd.f32 0.0, %v3395
        %v3397 = vpop.f32.mrb[0].mxu0
        %3398 = vmatprep.mubr.f32.mxu0 0.0
        %3399 = vmatmul.mubr.f32.gmra.mrb[0].mxu0 %v3324
        %v3400 = vpop.f32.mrb[0].mxu0
        %v3401 = vadd.f32 0.0, %v3400
        %v3402 = vpop.f32.mrb[0].mxu0
        %3403 = vdwg.mxu0
        %v3404 = vadd.f32 %v3310, %v3396
        %v3405 = vadd.f32 %v3311, %v3401
        %v3406 = vld [vmem:[%s1204] sm:$0xff]
        %v3407 = vld [vmem:[%s1204 + $0x8] sm:$0xff]
        %v3408 = vld [vmem:[%s1204 + $0x10] sm:$0xff]
        %v3409 = vld [vmem:[%s1204 + $0x18] sm:$0xff]
        %v3410 = vld [vmem:[%s1204 + $0x20] sm:$0xff]
        %v3411 = vld [vmem:[%s1204 + $0x28] sm:$0xff]
        %v3412 = vld [vmem:[%s1204 + $0x30] sm:$0xff]
        %v3413 = vld [vmem:[%s1204 + $0x38] sm:$0xff]
        %v3414 = vld [vmem:[%s1209] sm:$0xff]
        %v3415 = vld [vmem:[%s1209 + $0x8] sm:$0xff]
        %v3416 = vld [vmem:[%s1209 + $0x10] sm:$0xff]
        %v3417 = vld [vmem:[%s1209 + $0x18] sm:$0xff]
        %v3418 = vld [vmem:[%s1209 + $0x20] sm:$0xff]
        %v3419 = vld [vmem:[%s1209 + $0x28] sm:$0xff]
        %v3420 = vld [vmem:[%s1209 + $0x30] sm:$0xff]
        %v3421 = vld [vmem:[%s1209 + $0x38] sm:$0xff]
        %3424 = vrot.lane.b32.xlu0 %v3404, 65
        %v3425 = vpop.permute.xlu0 %3424
        %3426 = vrot.lane.b32.xlu0 %v3405, 65
        %v3427 = vpop.permute.xlu0 %3426
        %3430 = vrot.lane.b32.xlu0 %v3404, 1
        %v3431 = vpop.permute.xlu0 %3430
        %3432 = vrot.lane.b32.xlu0 %v3405, 1
        %v3433 = vpop.permute.xlu0 %3432
        %v3436 = vsel %vm1595, %v3425, %v3431
        %v3437 = vsel %vm1595, %v3427, %v3433
        %v3438 = vmul.f32 %v3436, %v1600
        %v3439 = vmul.f32 %v3437, %v1600
        %3440 = vrot.lane.b32.xlu0 %v3404, 127
        %v3441 = vpop.permute.xlu0 %3440
        %3442 = vrot.lane.b32.xlu0 %v3405, 127
        %v3443 = vpop.permute.xlu0 %3442
        %3446 = vrot.lane.b32.xlu0 %v3404, 63
        %v3447 = vpop.permute.xlu0 %3446
        %3448 = vrot.lane.b32.xlu0 %v3405, 63
        %v3449 = vpop.permute.xlu0 %3448
        %v3452 = vsel %vm1791, %v3441, %v3447
        %v3453 = vsel %vm1791, %v3443, %v3449
        %v3454 = vmul.f32 %v3452, %v1796
        %v3455 = vmul.f32 %v3453, %v1796
        %3457 = vset.pattern.permute.xlu0 0
        %3458 = vperm.xlu0 %3457, %v3414
        %v3459 = vpop.permute.xlu0 %3458
        %3462 = vset.pattern.permute.xlu0 0
        %3463 = vperm.xlu0 %3462, %v3415
        %v3464 = vpop.permute.xlu0 %3463
        %v3467 = vsel %vm1944, %v3406, 0
        %v3470 = vsel %vm1944, %v3407, 0
        %3472 = vmatprep.subr.mxu0 0.0
        %3473 = vmatpush1.msra.mxu0 %v3438
        %3474 = vmatprep.subr.mxu0 0.0
        %3475 = vmatpush1.msra.mxu0 %v3439
        %3476 = vmatprep.subr.mxu0 0.0
        %3477 = vmatpush1.msra.mxu0 %v3404
        %3478 = vmatprep.subr.mxu0 0.0
        %3479 = vmatpush1.msra.mxu0 %v3405
        %3480 = vmatprep.subr.mxu0 0.0
        %3481 = vmatpush1.msra.mxu0 %v3454
        %3482 = vmatprep.subr.mxu0 0.0
        %3483 = vmatpush1.msra.mxu0 %v3455
        %3484 = vmatprep.subr.mxu0 0.0
        %3485 = vmatpush1.msra.mxu0 0.0
        %3486 = vmatprep.subr.mxu0 0.0
        %3487 = vmatpush1.msra.mxu0 0.0
        %3488 = vmatprep.subr.mxu0 0.0
        %3489 = vmatpush1.msra.mxu0 0.0
        %3490 = vmatprep.subr.mxu0 0.0
        %3491 = vmatpush1.msra.mxu0 0.0
        %3492 = vmatprep.subr.mxu0 0.0
        %3493 = vmatpush1.msra.mxu0 0.0
        %3494 = vmatprep.subr.mxu0 0.0
        %3495 = vmatpush1.msra.mxu0 0.0
        %3496 = vmatprep.subr.mxu0 0.0
        %3497 = vmatpush1.msra.mxu0 0.0
        %3498 = vmatprep.subr.mxu0 0.0
        %3499 = vmatpush1.msra.mxu0 0.0
        %3500 = vmatprep.subr.mxu0 0.0
        %3501 = vmatpush1.msra.mxu0 0.0
        %3502 = vmatprep.subr.mxu0 0.0
        %3503 = vmatpush1.msra.mxu0 0.0
        %3504 = vmatprep.subr.mxu0 0.0
        %3505 = vmatpush1.msra.mxu0 0.0
        %3506 = vmatprep.subr.mxu0 0.0
        %3507 = vmatpush1.msra.mxu0 0.0
        %3508 = vmatprep.subr.mxu0 0.0
        %3509 = vmatpush1.msra.mxu0 0.0
        %3510 = vmatprep.subr.mxu0 0.0
        %3511 = vmatpush1.msra.mxu0 0.0
        %3512 = vmatprep.subr.mxu0 0.0
        %3513 = vmatpush1.msra.mxu0 0.0
        %3514 = vmatprep.subr.mxu0 0.0
        %3515 = vmatpush1.msra.mxu0 0.0
        %3516 = vmatprep.subr.mxu0 0.0
        %3517 = vmatpush1.msra.mxu0 0.0
        %3518 = vmatprep.subr.mxu0 0.0
        %3519 = vmatpush1.msra.mxu0 0.0
        %3520 = vmatprep.subr.mxu0 0.0
        %3521 = vmatpush1.msra.mxu0 0.0
        %3522 = vmatprep.subr.mxu0 0.0
        %3523 = vmatpush1.msra.mxu0 0.0
        %3524 = vmatprep.subr.mxu0 0.0
        %3525 = vmatpush1.msra.mxu0 0.0
        %3526 = vmatprep.subr.mxu0 0.0
        %3527 = vmatpush1.msra.mxu0 0.0
        %3528 = vmatprep.subr.mxu0 0.0
        %3529 = vmatpush1.msra.mxu0 0.0
        %3530 = vmatprep.subr.mxu0 0.0
        %3531 = vmatpush1.msra.mxu0 0.0
        %3532 = vmatprep.subr.mxu0 0.0
        %3533 = vmatpush1.msra.mxu0 0.0
        %3534 = vmatprep.subr.mxu0 0.0
        %3535 = vmatpush1.msra.mxu0 0.0
        %3536 = vmatprep.mubr.f32.mxu0 0.0
        %3537 = vmatmul.mubr.f32.gmra.mrb[0].mxu0 %v3467
        %v3538 = vpop.f32.mrb[0].mxu0
        %v3539 = vadd.f32 %v3459, %v3538
        %v3540 = vpop.f32.mrb[0].mxu0
        %3541 = vmatprep.mubr.f32.mxu0 0.0
        %3542 = vmatmul.mubr.f32.gmra.mrb[0].mxu0 %v3470
        %v3543 = vpop.f32.mrb[0].mxu0
        %v3544 = vadd.f32 %v3464, %v3543
        %v3545 = vpop.f32.mrb[0].mxu0
        %3546 = vdwg.mxu0
        %v3547 = vmax.f32 %v3539, 0.0
        %v3548 = vmax.f32 %v3544, 0.0
        %3551 = vrot.lane.b32.xlu0 %v3547, 65
        %v3552 = vpop.permute.xlu0 %3551
        %3553 = vrot.lane.b32.xlu0 %v3548, 65
        %v3554 = vpop.permute.xlu0 %3553
        %3557 = vrot.lane.b32.xlu0 %v3547, 1
        %v3558 = vpop.permute.xlu0 %3557
        %3559 = vrot.lane.b32.xlu0 %v3548, 1
        %v3560 = vpop.permute.xlu0 %3559
        %v3563 = vsel %vm1595, %v3552, %v3558
        %v3564 = vsel %vm1595, %v3554, %v3560
        %v3565 = vmul.f32 %v3563, %v1600
        %v3566 = vmul.f32 %v3564, %v1600
        %3567 = vrot.lane.b32.xlu0 %v3547, 127
        %v3568 = vpop.permute.xlu0 %3567
        %3569 = vrot.lane.b32.xlu0 %v3548, 127
        %v3570 = vpop.permute.xlu0 %3569
        %3573 = vrot.lane.b32.xlu0 %v3547, 63
        %v3574 = vpop.permute.xlu0 %3573
        %3575 = vrot.lane.b32.xlu0 %v3548, 63
        %v3576 = vpop.permute.xlu0 %3575
        %v3579 = vsel %vm1791, %v3568, %v3574
        %v3580 = vsel %vm1791, %v3570, %v3576
        %v3581 = vmul.f32 %v3579, %v1796
        %v3582 = vmul.f32 %v3580, %v1796
        %3584 = vset.pattern.permute.xlu0 0
        %3585 = vperm.xlu0 %3584, %v3416
        %v3586 = vpop.permute.xlu0 %3585
        %3589 = vset.pattern.permute.xlu0 0
        %3590 = vperm.xlu0 %3589, %v3417
        %v3591 = vpop.permute.xlu0 %3590
        %v3594 = vsel %vm1944, %v3408, 0
        %v3597 = vsel %vm1944, %v3409, 0
        %3599 = vmatprep.subr.mxu0 0.0
        %3600 = vmatpush1.msra.mxu0 %v3565
        %3601 = vmatprep.subr.mxu0 0.0
        %3602 = vmatpush1.msra.mxu0 %v3566
        %3603 = vmatprep.subr.mxu0 0.0
        %3604 = vmatpush1.msra.mxu0 %v3547
        %3605 = vmatprep.subr.mxu0 0.0
        %3606 = vmatpush1.msra.mxu0 %v3548
        %3607 = vmatprep.subr.mxu0 0.0
        %3608 = vmatpush1.msra.mxu0 %v3581
        %3609 = vmatprep.subr.mxu0 0.0
        %3610 = vmatpush1.msra.mxu0 %v3582
        %3611 = vmatprep.subr.mxu0 0.0
        %3612 = vmatpush1.msra.mxu0 0.0
        %3613 = vmatprep.subr.mxu0 0.0
        %3614 = vmatpush1.msra.mxu0 0.0
        %3615 = vmatprep.subr.mxu0 0.0
        %3616 = vmatpush1.msra.mxu0 0.0
        %3617 = vmatprep.subr.mxu0 0.0
        %3618 = vmatpush1.msra.mxu0 0.0
        %3619 = vmatprep.subr.mxu0 0.0
        %3620 = vmatpush1.msra.mxu0 0.0
        %3621 = vmatprep.subr.mxu0 0.0
        %3622 = vmatpush1.msra.mxu0 0.0
        %3623 = vmatprep.subr.mxu0 0.0
        %3624 = vmatpush1.msra.mxu0 0.0
        %3625 = vmatprep.subr.mxu0 0.0
        %3626 = vmatpush1.msra.mxu0 0.0
        %3627 = vmatprep.subr.mxu0 0.0
        %3628 = vmatpush1.msra.mxu0 0.0
        %3629 = vmatprep.subr.mxu0 0.0
        %3630 = vmatpush1.msra.mxu0 0.0
        %3631 = vmatprep.subr.mxu0 0.0
        %3632 = vmatpush1.msra.mxu0 0.0
        %3633 = vmatprep.subr.mxu0 0.0
        %3634 = vmatpush1.msra.mxu0 0.0
        %3635 = vmatprep.subr.mxu0 0.0
        %3636 = vmatpush1.msra.mxu0 0.0
        %3637 = vmatprep.subr.mxu0 0.0
        %3638 = vmatpush1.msra.mxu0 0.0
        %3639 = vmatprep.subr.mxu0 0.0
        %3640 = vmatpush1.msra.mxu0 0.0
        %3641 = vmatprep.subr.mxu0 0.0
        %3642 = vmatpush1.msra.mxu0 0.0
        %3643 = vmatprep.subr.mxu0 0.0
        %3644 = vmatpush1.msra.mxu0 0.0
        %3645 = vmatprep.subr.mxu0 0.0
        %3646 = vmatpush1.msra.mxu0 0.0
        %3647 = vmatprep.subr.mxu0 0.0
        %3648 = vmatpush1.msra.mxu0 0.0
        %3649 = vmatprep.subr.mxu0 0.0
        %3650 = vmatpush1.msra.mxu0 0.0
        %3651 = vmatprep.subr.mxu0 0.0
        %3652 = vmatpush1.msra.mxu0 0.0
        %3653 = vmatprep.subr.mxu0 0.0
        %3654 = vmatpush1.msra.mxu0 0.0
        %3655 = vmatprep.subr.mxu0 0.0
        %3656 = vmatpush1.msra.mxu0 0.0
        %3657 = vmatprep.subr.mxu0 0.0
        %3658 = vmatpush1.msra.mxu0 0.0
        %3659 = vmatprep.subr.mxu0 0.0
        %3660 = vmatpush1.msra.mxu0 0.0
        %3661 = vmatprep.subr.mxu0 0.0
        %3662 = vmatpush1.msra.mxu0 0.0
        %3663 = vmatprep.mubr.f32.mxu0 0.0
        %3664 = vmatmul.mubr.f32.gmra.mrb[0].mxu0 %v3594
        %v3665 = vpop.f32.mrb[0].mxu0
        %v3666 = vadd.f32 %v3586, %v3665
        %v3667 = vpop.f32.mrb[0].mxu0
        %3668 = vmatprep.mubr.f32.mxu0 0.0
        %3669 = vmatmul.mubr.f32.gmra.mrb[0].mxu0 %v3597
        %v3670 = vpop.f32.mrb[0].mxu0
        %v3671 = vadd.f32 %v3591, %v3670
        %v3672 = vpop.f32.mrb[0].mxu0
        %3673 = vdwg.mxu0
        %v3675 = vsel %vm1483, %v3666, 0
        %3677 = vmatprep.subr.mxu0 0.0
        %3678 = vmatpush1.msra.mxu0 %v1248
        %3679 = vmatprep.subr.mxu0 0.0
        %3680 = vmatpush1.msra.mxu0 %v1249
        %3681 = vmatprep.subr.mxu0 0.0
        %3682 = vmatpush1.msra.mxu0 %v1250
        %3683 = vmatprep.subr.mxu0 0.0
        %3684 = vmatpush1.msra.mxu0 %v1251
        %3685 = vmatprep.subr.mxu0 0.0
        %3686 = vmatpush1.msra.mxu0 %v1252
        %3687 = vmatprep.subr.mxu0 0.0
        %3688 = vmatpush1.msra.mxu0 %v1253
        %3689 = vmatprep.subr.mxu0 0.0
        %3690 = vmatpush1.msra.mxu0 %v1254
        %3691 = vmatprep.subr.mxu0 0.0
        %3692 = vmatpush1.msra.mxu0 %v1255
        %3693 = vmatprep.subr.mxu0 0.0
        %3694 = vmatpush1.msra.mxu0 0.0
        %3695 = vmatprep.subr.mxu0 0.0
        %3696 = vmatpush1.msra.mxu0 0.0
        %3697 = vmatprep.subr.mxu0 0.0
        %3698 = vmatpush1.msra.mxu0 0.0
        %3699 = vmatprep.subr.mxu0 0.0
        %3700 = vmatpush1.msra.mxu0 0.0
        %3701 = vmatprep.subr.mxu0 0.0
        %3702 = vmatpush1.msra.mxu0 0.0
        %3703 = vmatprep.subr.mxu0 0.0
        %3704 = vmatpush1.msra.mxu0 0.0
        %3705 = vmatprep.subr.mxu0 0.0
        %3706 = vmatpush1.msra.mxu0 0.0
        %3707 = vmatprep.subr.mxu0 0.0
        %3708 = vmatpush1.msra.mxu0 0.0
        %3709 = vmatprep.subr.mxu0 0.0
        %3710 = vmatpush1.msra.mxu0 0.0
        %3711 = vmatprep.subr.mxu0 0.0
        %3712 = vmatpush1.msra.mxu0 0.0
        %3713 = vmatprep.subr.mxu0 0.0
        %3714 = vmatpush1.msra.mxu0 0.0
        %3715 = vmatprep.subr.mxu0 0.0
        %3716 = vmatpush1.msra.mxu0 0.0
        %3717 = vmatprep.subr.mxu0 0.0
        %3718 = vmatpush1.msra.mxu0 0.0
        %3719 = vmatprep.subr.mxu0 0.0
        %3720 = vmatpush1.msra.mxu0 0.0
        %3721 = vmatprep.subr.mxu0 0.0
        %3722 = vmatpush1.msra.mxu0 0.0
        %3723 = vmatprep.subr.mxu0 0.0
        %3724 = vmatpush1.msra.mxu0 0.0
        %3725 = vmatprep.subr.mxu0 0.0
        %3726 = vmatpush1.msra.mxu0 0.0
        %3727 = vmatprep.subr.mxu0 0.0
        %3728 = vmatpush1.msra.mxu0 0.0
        %3729 = vmatprep.subr.mxu0 0.0
        %3730 = vmatpush1.msra.mxu0 0.0
        %3731 = vmatprep.subr.mxu0 0.0
        %3732 = vmatpush1.msra.mxu0 0.0
        %3733 = vmatprep.subr.mxu0 0.0
        %3734 = vmatpush1.msra.mxu0 0.0
        %3735 = vmatprep.subr.mxu0 0.0
        %3736 = vmatpush1.msra.mxu0 0.0
        %3737 = vmatprep.subr.mxu0 0.0
        %3738 = vmatpush1.msra.mxu0 0.0
        %3739 = vmatprep.subr.mxu0 0.0
        %3740 = vmatpush1.msra.mxu0 0.0
        %3741 = vmatprep.mubr.f32.mxu0 0.0
        %3742 = vmatmul.mubr.f32.gmra.mrb[0].mxu0 %v3675
        %v3743 = vpop.f32.mrb[0].mxu0
        %v3744 = vadd.f32 0.0, %v3743
        %v3745 = vpop.f32.mrb[0].mxu0
        %3746 = vdwg.mxu0
        %v3747 = vld [vmem:[%s1222] sm:$0xff]
        %v3748 = vld [vmem:[%s1222 + $0x8] sm:$0xff]
        %v3749 = vld [vmem:[%s1227] sm:$0xff]
        %v3750 = vld [vmem:[%s1227 + $0x8] sm:$0xff]
        %v3751 = vld [vmem:[%s1227 + $0x10] sm:$0xff]
        %v3752 = vld [vmem:[%s1227 + $0x18] sm:$0xff]
        %3754 = vset.pattern.permute.xlu0 0
        %3755 = vperm.xlu0 %3754, %v3749
        %v3756 = vpop.permute.xlu0 %3755
        %v3759 = vsel %vm2247, %v3747, 0
        %3761 = vmatprep.subr.mxu0 0.0
        %3762 = vmatpush1.msra.mxu0 %v3744
        %3763 = vmatprep.subr.mxu0 0.0
        %3764 = vmatpush1.msra.mxu0 0.0
        %3765 = vmatprep.subr.mxu0 0.0
        %3766 = vmatpush1.msra.mxu0 0.0
        %3767 = vmatprep.subr.mxu0 0.0
        %3768 = vmatpush1.msra.mxu0 0.0
        %3769 = vmatprep.subr.mxu0 0.0
        %3770 = vmatpush1.msra.mxu0 0.0
        %3771 = vmatprep.subr.mxu0 0.0
        %3772 = vmatpush1.msra.mxu0 0.0
        %3773 = vmatprep.subr.mxu0 0.0
        %3774 = vmatpush1.msra.mxu0 0.0
        %3775 = vmatprep.subr.mxu0 0.0
        %3776 = vmatpush1.msra.mxu0 0.0
        %3777 = vmatprep.subr.mxu0 0.0
        %3778 = vmatpush1.msra.mxu0 0.0
        %3779 = vmatprep.subr.mxu0 0.0
        %3780 = vmatpush1.msra.mxu0 0.0
        %3781 = vmatprep.subr.mxu0 0.0
        %3782 = vmatpush1.msra.mxu0 0.0
        %3783 = vmatprep.subr.mxu0 0.0
        %3784 = vmatpush1.msra.mxu0 0.0
        %3785 = vmatprep.subr.mxu0 0.0
        %3786 = vmatpush1.msra.mxu0 0.0
        %3787 = vmatprep.subr.mxu0 0.0
        %3788 = vmatpush1.msra.mxu0 0.0
        %3789 = vmatprep.subr.mxu0 0.0
        %3790 = vmatpush1.msra.mxu0 0.0
        %3791 = vmatprep.subr.mxu0 0.0
        %3792 = vmatpush1.msra.mxu0 0.0
        %3793 = vmatprep.subr.mxu0 0.0
        %3794 = vmatpush1.msra.mxu0 0.0
        %3795 = vmatprep.subr.mxu0 0.0
        %3796 = vmatpush1.msra.mxu0 0.0
        %3797 = vmatprep.subr.mxu0 0.0
        %3798 = vmatpush1.msra.mxu0 0.0
        %3799 = vmatprep.subr.mxu0 0.0
        %3800 = vmatpush1.msra.mxu0 0.0
        %3801 = vmatprep.subr.mxu0 0.0
        %3802 = vmatpush1.msra.mxu0 0.0
        %3803 = vmatprep.subr.mxu0 0.0
        %3804 = vmatpush1.msra.mxu0 0.0
        %3805 = vmatprep.subr.mxu0 0.0
        %3806 = vmatpush1.msra.mxu0 0.0
        %3807 = vmatprep.subr.mxu0 0.0
        %3808 = vmatpush1.msra.mxu0 0.0
        %3809 = vmatprep.subr.mxu0 0.0
        %3810 = vmatpush1.msra.mxu0 0.0
        %3811 = vmatprep.subr.mxu0 0.0
        %3812 = vmatpush1.msra.mxu0 0.0
        %3813 = vmatprep.subr.mxu0 0.0
        %3814 = vmatpush1.msra.mxu0 0.0
        %3815 = vmatprep.subr.mxu0 0.0
        %3816 = vmatpush1.msra.mxu0 0.0
        %3817 = vmatprep.subr.mxu0 0.0
        %3818 = vmatpush1.msra.mxu0 0.0
        %3819 = vmatprep.subr.mxu0 0.0
        %3820 = vmatpush1.msra.mxu0 0.0
        %3821 = vmatprep.subr.mxu0 0.0
        %3822 = vmatpush1.msra.mxu0 0.0
        %3823 = vmatprep.subr.mxu0 0.0
        %3824 = vmatpush1.msra.mxu0 0.0
        %3825 = vmatprep.mubr.f32.mxu0 0.0
        %3826 = vmatmul.mubr.f32.gmra.mrb[0].mxu0 %v3759
        %v3827 = vpop.f32.mrb[0].mxu0
        %v3828 = vadd.f32 %v3756, %v3827
        %v3829 = vpop.f32.mrb[0].mxu0
        %3830 = vdwg.mxu0
        %3832 = vset.pattern.permute.xlu0 0
        %3833 = vperm.xlu0 %3832, %v3750
        %v3834 = vpop.permute.xlu0 %3833
        %v3836 = vmul.f32 %v3828, %v3834
        %3838 = vset.pattern.permute.xlu0 0
        %3839 = vperm.xlu0 %3838, %v3751
        %v3840 = vpop.permute.xlu0 %3839
        %v3842 = vadd.f32 %v3836, %v3840
        %v3843 = vmax.f32 %v3842, 0.0
        %3845 = vset.pattern.permute.xlu0 0
        %3846 = vperm.xlu0 %3845, %v3752
        %v3847 = vpop.permute.xlu0 %3846
        %v3850 = vsel %vm2247, %v3748, 0
        %3852 = vmatprep.subr.mxu0 0.0
        %3853 = vmatpush1.msra.mxu0 %v3843
        %3854 = vmatprep.subr.mxu0 0.0
        %3855 = vmatpush1.msra.mxu0 0.0
        %3856 = vmatprep.subr.mxu0 0.0
        %3857 = vmatpush1.msra.mxu0 0.0
        %3858 = vmatprep.subr.mxu0 0.0
        %3859 = vmatpush1.msra.mxu0 0.0
        %3860 = vmatprep.subr.mxu0 0.0
        %3861 = vmatpush1.msra.mxu0 0.0
        %3862 = vmatprep.subr.mxu0 0.0
        %3863 = vmatpush1.msra.mxu0 0.0
        %3864 = vmatprep.subr.mxu0 0.0
        %3865 = vmatpush1.msra.mxu0 0.0
        %3866 = vmatprep.subr.mxu0 0.0
        %3867 = vmatpush1.msra.mxu0 0.0
        %3868 = vmatprep.subr.mxu0 0.0
        %3869 = vmatpush1.msra.mxu0 0.0
        %3870 = vmatprep.subr.mxu0 0.0
        %3871 = vmatpush1.msra.mxu0 0.0
        %3872 = vmatprep.subr.mxu0 0.0
        %3873 = vmatpush1.msra.mxu0 0.0
        %3874 = vmatprep.subr.mxu0 0.0
        %3875 = vmatpush1.msra.mxu0 0.0
        %3876 = vmatprep.subr.mxu0 0.0
        %3877 = vmatpush1.msra.mxu0 0.0
        %3878 = vmatprep.subr.mxu0 0.0
        %3879 = vmatpush1.msra.mxu0 0.0
        %3880 = vmatprep.subr.mxu0 0.0
        %3881 = vmatpush1.msra.mxu0 0.0
        %3882 = vmatprep.subr.mxu0 0.0
        %3883 = vmatpush1.msra.mxu0 0.0
        %3884 = vmatprep.subr.mxu0 0.0
        %3885 = vmatpush1.msra.mxu0 0.0
        %3886 = vmatprep.subr.mxu0 0.0
        %3887 = vmatpush1.msra.mxu0 0.0
        %3888 = vmatprep.subr.mxu0 0.0
        %3889 = vmatpush1.msra.mxu0 0.0
        %3890 = vmatprep.subr.mxu0 0.0
        %3891 = vmatpush1.msra.mxu0 0.0
        %3892 = vmatprep.subr.mxu0 0.0
        %3893 = vmatpush1.msra.mxu0 0.0
        %3894 = vmatprep.subr.mxu0 0.0
        %3895 = vmatpush1.msra.mxu0 0.0
        %3896 = vmatprep.subr.mxu0 0.0
        %3897 = vmatpush1.msra.mxu0 0.0
        %3898 = vmatprep.subr.mxu0 0.0
        %3899 = vmatpush1.msra.mxu0 0.0
        %3900 = vmatprep.subr.mxu0 0.0
        %3901 = vmatpush1.msra.mxu0 0.0
        %3902 = vmatprep.subr.mxu0 0.0
        %3903 = vmatpush1.msra.mxu0 0.0
        %3904 = vmatprep.subr.mxu0 0.0
        %3905 = vmatpush1.msra.mxu0 0.0
        %3906 = vmatprep.subr.mxu0 0.0
        %3907 = vmatpush1.msra.mxu0 0.0
        %3908 = vmatprep.subr.mxu0 0.0
        %3909 = vmatpush1.msra.mxu0 0.0
        %3910 = vmatprep.subr.mxu0 0.0
        %3911 = vmatpush1.msra.mxu0 0.0
        %3912 = vmatprep.subr.mxu0 0.0
        %3913 = vmatpush1.msra.mxu0 0.0
        %3914 = vmatprep.subr.mxu0 0.0
        %3915 = vmatpush1.msra.mxu0 0.0
        %3916 = vmatprep.mubr.f32.mxu0 0.0
        %3917 = vmatmul.mubr.f32.gmra.mrb[0].mxu0 %v3850
        %v3918 = vpop.f32.mrb[0].mxu0
        %v3919 = vadd.f32 %v3847, %v3918
        %v3920 = vpop.f32.mrb[0].mxu0
        %3921 = vdwg.mxu0
        %v3922 = vxor.u32 %v3919, 2147483648
        %v3923 = vmul.f32 %v3922, 1.442695
        %v3924 = vpow.pop %v3923
        %v3925 = vadd.f32 %v3924, 1.0
        %v3926 = vrcp.pop %v3925
        %v3927 = vmul.f32 1.0, %v3926
        %v3928 = vmul.f32 %v3927, %v3744
        %v3930 = vsel %vm1602, %v3928, 0
        %3932 = vmatprep.subr.mxu0 0.0
        %3933 = vmatpush1.msra.mxu0 %v2423
        %3934 = vmatprep.subr.mxu0 0.0
        %3935 = vmatpush1.msra.mxu0 0.0
        %3936 = vmatprep.subr.mxu0 0.0
        %3937 = vmatpush1.msra.mxu0 0.0
        %3938 = vmatprep.subr.mxu0 0.0
        %3939 = vmatpush1.msra.mxu0 0.0
        %3940 = vmatprep.subr.mxu0 0.0
        %3941 = vmatpush1.msra.mxu0 0.0
        %3942 = vmatprep.subr.mxu0 0.0
        %3943 = vmatpush1.msra.mxu0 0.0
        %3944 = vmatprep.subr.mxu0 0.0
        %3945 = vmatpush1.msra.mxu0 0.0
        %3946 = vmatprep.subr.mxu0 0.0
        %3947 = vmatpush1.msra.mxu0 0.0
        %3948 = vmatprep.subr.mxu0 0.0
        %3949 = vmatpush1.msra.mxu0 0.0
        %3950 = vmatprep.subr.mxu0 0.0
        %3951 = vmatpush1.msra.mxu0 0.0
        %3952 = vmatprep.subr.mxu0 0.0
        %3953 = vmatpush1.msra.mxu0 0.0
        %3954 = vmatprep.subr.mxu0 0.0
        %3955 = vmatpush1.msra.mxu0 0.0
        %3956 = vmatprep.subr.mxu0 0.0
        %3957 = vmatpush1.msra.mxu0 0.0
        %3958 = vmatprep.subr.mxu0 0.0
        %3959 = vmatpush1.msra.mxu0 0.0
        %3960 = vmatprep.subr.mxu0 0.0
        %3961 = vmatpush1.msra.mxu0 0.0
        %3962 = vmatprep.subr.mxu0 0.0
        %3963 = vmatpush1.msra.mxu0 0.0
        %3964 = vmatprep.subr.mxu0 0.0
        %3965 = vmatpush1.msra.mxu0 0.0
        %3966 = vmatprep.subr.mxu0 0.0
        %3967 = vmatpush1.msra.mxu0 0.0
        %3968 = vmatprep.subr.mxu0 0.0
        %3969 = vmatpush1.msra.mxu0 0.0
        %3970 = vmatprep.subr.mxu0 0.0
        %3971 = vmatpush1.msra.mxu0 0.0
        %3972 = vmatprep.subr.mxu0 0.0
        %3973 = vmatpush1.msra.mxu0 0.0
        %3974 = vmatprep.subr.mxu0 0.0
        %3975 = vmatpush1.msra.mxu0 0.0
        %3976 = vmatprep.subr.mxu0 0.0
        %3977 = vmatpush1.msra.mxu0 0.0
        %3978 = vmatprep.subr.mxu0 0.0
        %3979 = vmatpush1.msra.mxu0 0.0
        %3980 = vmatprep.subr.mxu0 0.0
        %3981 = vmatpush1.msra.mxu0 0.0
        %3982 = vmatprep.subr.mxu0 0.0
        %3983 = vmatpush1.msra.mxu0 0.0
        %3984 = vmatprep.subr.mxu0 0.0
        %3985 = vmatpush1.msra.mxu0 0.0
        %3986 = vmatprep.subr.mxu0 0.0
        %3987 = vmatpush1.msra.mxu0 0.0
        %3988 = vmatprep.subr.mxu0 0.0
        %3989 = vmatpush1.msra.mxu0 0.0
        %3990 = vmatprep.subr.mxu0 0.0
        %3991 = vmatpush1.msra.mxu0 0.0
        %3992 = vmatprep.subr.mxu0 0.0
        %3993 = vmatpush1.msra.mxu0 0.0
        %3994 = vmatprep.subr.mxu0 0.0
        %3995 = vmatpush1.msra.mxu0 0.0
        %3996 = vmatprep.mubr.f32.mxu0 0.0
        %3997 = vmatmul.mubr.f32.gmra.mrb[0].mxu0 %v3930
        %v3998 = vpop.f32.mrb[0].mxu0
        %v3999 = vadd.f32 0.0, %v3998
        %v4000 = vpop.f32.mrb[0].mxu0
        %4001 = vdwg.mxu0
        %v4002 = vsub.f32 %v3666, %v3999
        %v4003 = vmul.f32 %v4002, %v4002
        %v4004 = vmul.f32 %v3671, %v3671
        %v4005 = vadd.f32 %v4003, %v4004
        %v4006 = vrsqrt.pop %v4005
        %v4007 = vmul.f32 %v4005, %v4006
        %vm4008 = vcmp.eq.f32.partialorder %v4005, inf
        %v4009 = vsel %vm4008, %v4005, %v4007
        %vm4010 = vcmp.eq.f32.partialorder %v4005, 0.0
        %v4011 = vand.u32 %v4005, 2147483648
        %v4012 = vsel %vm4010, %v4011, %v4009
        %vm4013 = vcmp.gt.f32.partialorder %v4012, 0.0
        %v4014 = vstv %s3093
        %v4015 = vsub.f32 %v4012, %v4014
        %v4016 = vmax.f32 %v4015, 0.0
        %v4017 = vsel %vm4013, %v4012, 1.0
        %v4018 = vrcp.pop %v4017
        %v4019 = vmul.f32 %v4016, %v4018
        %v4020 = vsel %vm4013, %v4019, 0.0
        %v4021 = vmul.f32 %v4002, %v4020
        %v4022 = vmul.f32 %v3671, %v4020
        %4025 = vrot.lane.b32.xlu0 %v4021, 65
        %v4026 = vpop.permute.xlu0 %4025
        %4027 = vrot.lane.b32.xlu0 %v4022, 65
        %v4028 = vpop.permute.xlu0 %4027
        %4031 = vrot.lane.b32.xlu0 %v4021, 1
        %v4032 = vpop.permute.xlu0 %4031
        %4033 = vrot.lane.b32.xlu0 %v4022, 1
        %v4034 = vpop.permute.xlu0 %4033
        %v4037 = vsel %vm1595, %v4026, %v4032
        %v4038 = vsel %vm1595, %v4028, %v4034
        %v4039 = vmul.f32 %v4037, %v1600
        %v4040 = vmul.f32 %v4038, %v1600
        %4041 = vrot.lane.b32.xlu0 %v4021, 127
        %v4042 = vpop.permute.xlu0 %4041
        %4043 = vrot.lane.b32.xlu0 %v4022, 127
        %v4044 = vpop.permute.xlu0 %4043
        %4047 = vrot.lane.b32.xlu0 %v4021, 63
        %v4048 = vpop.permute.xlu0 %4047
        %4049 = vrot.lane.b32.xlu0 %v4022, 63
        %v4050 = vpop.permute.xlu0 %4049
        %v4053 = vsel %vm1791, %v4042, %v4048
        %v4054 = vsel %vm1791, %v4044, %v4050
        %v4055 = vmul.f32 %v4053, %v1796
        %v4056 = vmul.f32 %v4054, %v1796
        %4058 = vset.pattern.permute.xlu0 0
        %4059 = vperm.xlu0 %4058, %v3418
        %v4060 = vpop.permute.xlu0 %4059
        %4063 = vset.pattern.permute.xlu0 0
        %4064 = vperm.xlu0 %4063, %v3419
        %v4065 = vpop.permute.xlu0 %4064
        %v4068 = vsel %vm1944, %v3410, 0
        %v4071 = vsel %vm1944, %v3411, 0
        %4073 = vmatprep.subr.mxu0 0.0
        %4074 = vmatpush1.msra.mxu0 %v4039
        %4075 = vmatprep.subr.mxu0 0.0
        %4076 = vmatpush1.msra.mxu0 %v4040
        %4077 = vmatprep.subr.mxu0 0.0
        %4078 = vmatpush1.msra.mxu0 %v4021
        %4079 = vmatprep.subr.mxu0 0.0
        %4080 = vmatpush1.msra.mxu0 %v4022
        %4081 = vmatprep.subr.mxu0 0.0
        %4082 = vmatpush1.msra.mxu0 %v4055
        %4083 = vmatprep.subr.mxu0 0.0
        %4084 = vmatpush1.msra.mxu0 %v4056
        %4085 = vmatprep.subr.mxu0 0.0
        %4086 = vmatpush1.msra.mxu0 0.0
        %4087 = vmatprep.subr.mxu0 0.0
        %4088 = vmatpush1.msra.mxu0 0.0
        %4089 = vmatprep.subr.mxu0 0.0
        %4090 = vmatpush1.msra.mxu0 0.0
        %4091 = vmatprep.subr.mxu0 0.0
        %4092 = vmatpush1.msra.mxu0 0.0
        %4093 = vmatprep.subr.mxu0 0.0
        %4094 = vmatpush1.msra.mxu0 0.0
        %4095 = vmatprep.subr.mxu0 0.0
        %4096 = vmatpush1.msra.mxu0 0.0
        %4097 = vmatprep.subr.mxu0 0.0
        %4098 = vmatpush1.msra.mxu0 0.0
        %4099 = vmatprep.subr.mxu0 0.0
        %4100 = vmatpush1.msra.mxu0 0.0
        %4101 = vmatprep.subr.mxu0 0.0
        %4102 = vmatpush1.msra.mxu0 0.0
        %4103 = vmatprep.subr.mxu0 0.0
        %4104 = vmatpush1.msra.mxu0 0.0
        %4105 = vmatprep.subr.mxu0 0.0
        %4106 = vmatpush1.msra.mxu0 0.0
        %4107 = vmatprep.subr.mxu0 0.0
        %4108 = vmatpush1.msra.mxu0 0.0
        %4109 = vmatprep.subr.mxu0 0.0
        %4110 = vmatpush1.msra.mxu0 0.0
        %4111 = vmatprep.subr.mxu0 0.0
        %4112 = vmatpush1.msra.mxu0 0.0
        %4113 = vmatprep.subr.mxu0 0.0
        %4114 = vmatpush1.msra.mxu0 0.0
        %4115 = vmatprep.subr.mxu0 0.0
        %4116 = vmatpush1.msra.mxu0 0.0
        %4117 = vmatprep.subr.mxu0 0.0
        %4118 = vmatpush1.msra.mxu0 0.0
        %4119 = vmatprep.subr.mxu0 0.0
        %4120 = vmatpush1.msra.mxu0 0.0
        %4121 = vmatprep.subr.mxu0 0.0
        %4122 = vmatpush1.msra.mxu0 0.0
        %4123 = vmatprep.subr.mxu0 0.0
        %4124 = vmatpush1.msra.mxu0 0.0
        %4125 = vmatprep.subr.mxu0 0.0
        %4126 = vmatpush1.msra.mxu0 0.0
        %4127 = vmatprep.subr.mxu0 0.0
        %4128 = vmatpush1.msra.mxu0 0.0
        %4129 = vmatprep.subr.mxu0 0.0
        %4130 = vmatpush1.msra.mxu0 0.0
        %4131 = vmatprep.subr.mxu0 0.0
        %4132 = vmatpush1.msra.mxu0 0.0
        %4133 = vmatprep.subr.mxu0 0.0
        %4134 = vmatpush1.msra.mxu0 0.0
        %4135 = vmatprep.subr.mxu0 0.0
        %4136 = vmatpush1.msra.mxu0 0.0
        %4137 = vmatprep.mubr.f32.mxu0 0.0
        %4138 = vmatmul.mubr.f32.gmra.mrb[0].mxu0 %v4068
        %v4139 = vpop.f32.mrb[0].mxu0
        %v4140 = vadd.f32 %v4060, %v4139
        %v4141 = vpop.f32.mrb[0].mxu0
        %4142 = vmatprep.mubr.f32.mxu0 0.0
        %4143 = vmatmul.mubr.f32.gmra.mrb[0].mxu0 %v4071
        %v4144 = vpop.f32.mrb[0].mxu0
        %v4145 = vadd.f32 %v4065, %v4144
        %v4146 = vpop.f32.mrb[0].mxu0
        %4147 = vdwg.mxu0
        %v4148 = vmax.f32 %v4140, 0.0
        %v4149 = vmax.f32 %v4145, 0.0
        %4152 = vrot.lane.b32.xlu0 %v4148, 65
        %v4153 = vpop.permute.xlu0 %4152
        %4154 = vrot.lane.b32.xlu0 %v4149, 65
        %v4155 = vpop.permute.xlu0 %4154
        %4158 = vrot.lane.b32.xlu0 %v4148, 1
        %v4159 = vpop.permute.xlu0 %4158
        %4160 = vrot.lane.b32.xlu0 %v4149, 1
        %v4161 = vpop.permute.xlu0 %4160
        %v4164 = vsel %vm1595, %v4153, %v4159
        %v4165 = vsel %vm1595, %v4155, %v4161
        %v4166 = vmul.f32 %v4164, %v1600
        %v4167 = vmul.f32 %v4165, %v1600
        %4168 = vrot.lane.b32.xlu0 %v4148, 127
        %v4169 = vpop.permute.xlu0 %4168
        %4170 = vrot.lane.b32.xlu0 %v4149, 127
        %v4171 = vpop.permute.xlu0 %4170
        %4174 = vrot.lane.b32.xlu0 %v4148, 63
        %v4175 = vpop.permute.xlu0 %4174
        %4176 = vrot.lane.b32.xlu0 %v4149, 63
        %v4177 = vpop.permute.xlu0 %4176
        %v4180 = vsel %vm1791, %v4169, %v4175
        %v4181 = vsel %vm1791, %v4171, %v4177
        %v4182 = vmul.f32 %v4180, %v1796
        %v4183 = vmul.f32 %v4181, %v1796
        %4185 = vset.pattern.permute.xlu0 0
        %4186 = vperm.xlu0 %4185, %v3420
        %v4187 = vpop.permute.xlu0 %4186
        %4190 = vset.pattern.permute.xlu0 0
        %4191 = vperm.xlu0 %4190, %v3421
        %v4192 = vpop.permute.xlu0 %4191
        %v4195 = vsel %vm1944, %v3412, 0
        %v4198 = vsel %vm1944, %v3413, 0
        %4200 = vmatprep.subr.mxu0 0.0
        %4201 = vmatpush1.msra.mxu0 %v4166
        %4202 = vmatprep.subr.mxu0 0.0
        %4203 = vmatpush1.msra.mxu0 %v4167
        %4204 = vmatprep.subr.mxu0 0.0
        %4205 = vmatpush1.msra.mxu0 %v4148
        %4206 = vmatprep.subr.mxu0 0.0
        %4207 = vmatpush1.msra.mxu0 %v4149
        %4208 = vmatprep.subr.mxu0 0.0
        %4209 = vmatpush1.msra.mxu0 %v4182
        %4210 = vmatprep.subr.mxu0 0.0
        %4211 = vmatpush1.msra.mxu0 %v4183
        %4212 = vmatprep.subr.mxu0 0.0
        %4213 = vmatpush1.msra.mxu0 0.0
        %4214 = vmatprep.subr.mxu0 0.0
        %4215 = vmatpush1.msra.mxu0 0.0
        %4216 = vmatprep.subr.mxu0 0.0
        %4217 = vmatpush1.msra.mxu0 0.0
        %4218 = vmatprep.subr.mxu0 0.0
        %4219 = vmatpush1.msra.mxu0 0.0
        %4220 = vmatprep.subr.mxu0 0.0
        %4221 = vmatpush1.msra.mxu0 0.0
        %4222 = vmatprep.subr.mxu0 0.0
        %4223 = vmatpush1.msra.mxu0 0.0
        %4224 = vmatprep.subr.mxu0 0.0
        %4225 = vmatpush1.msra.mxu0 0.0
        %4226 = vmatprep.subr.mxu0 0.0
        %4227 = vmatpush1.msra.mxu0 0.0
        %4228 = vmatprep.subr.mxu0 0.0
        %4229 = vmatpush1.msra.mxu0 0.0
        %4230 = vmatprep.subr.mxu0 0.0
        %4231 = vmatpush1.msra.mxu0 0.0
        %4232 = vmatprep.subr.mxu0 0.0
        %4233 = vmatpush1.msra.mxu0 0.0
        %4234 = vmatprep.subr.mxu0 0.0
        %4235 = vmatpush1.msra.mxu0 0.0
        %4236 = vmatprep.subr.mxu0 0.0
        %4237 = vmatpush1.msra.mxu0 0.0
        %4238 = vmatprep.subr.mxu0 0.0
        %4239 = vmatpush1.msra.mxu0 0.0
        %4240 = vmatprep.subr.mxu0 0.0
        %4241 = vmatpush1.msra.mxu0 0.0
        %4242 = vmatprep.subr.mxu0 0.0
        %4243 = vmatpush1.msra.mxu0 0.0
        %4244 = vmatprep.subr.mxu0 0.0
        %4245 = vmatpush1.msra.mxu0 0.0
        %4246 = vmatprep.subr.mxu0 0.0
        %4247 = vmatpush1.msra.mxu0 0.0
        %4248 = vmatprep.subr.mxu0 0.0
        %4249 = vmatpush1.msra.mxu0 0.0
        %4250 = vmatprep.subr.mxu0 0.0
        %4251 = vmatpush1.msra.mxu0 0.0
        %4252 = vmatprep.subr.mxu0 0.0
        %4253 = vmatpush1.msra.mxu0 0.0
        %4254 = vmatprep.subr.mxu0 0.0
        %4255 = vmatpush1.msra.mxu0 0.0
        %4256 = vmatprep.subr.mxu0 0.0
        %4257 = vmatpush1.msra.mxu0 0.0
        %4258 = vmatprep.subr.mxu0 0.0
        %4259 = vmatpush1.msra.mxu0 0.0
        %4260 = vmatprep.subr.mxu0 0.0
        %4261 = vmatpush1.msra.mxu0 0.0
        %4262 = vmatprep.subr.mxu0 0.0
        %4263 = vmatpush1.msra.mxu0 0.0
        %4264 = vmatprep.mubr.f32.mxu0 0.0
        %4265 = vmatmul.mubr.f32.gmra.mrb[0].mxu0 %v4195
        %v4266 = vpop.f32.mrb[0].mxu0
        %v4267 = vadd.f32 %v4187, %v4266
        %v4268 = vpop.f32.mrb[0].mxu0
        %4269 = vmatprep.mubr.f32.mxu0 0.0
        %4270 = vmatmul.mubr.f32.gmra.mrb[0].mxu0 %v4198
        %v4271 = vpop.f32.mrb[0].mxu0
        %v4272 = vadd.f32 %v4192, %v4271
        %v4273 = vpop.f32.mrb[0].mxu0
        %4274 = vdwg.mxu0
        %v4275 = vld [vmem:[%s1217] sm:$0x3]
        %v4276 = vld [vmem:[%s1213] sm:$0x3]
        %4279 = vrot.lane.b32.xlu0 %v4267, 65
        %v4280 = vpop.permute.xlu0 %4279
        %4281 = vrot.lane.b32.xlu0 %v4272, 65
        %v4282 = vpop.permute.xlu0 %4281
        %4285 = vrot.lane.b32.xlu0 %v4267, 1
        %v4286 = vpop.permute.xlu0 %4285
        %4287 = vrot.lane.b32.xlu0 %v4272, 1
        %v4288 = vpop.permute.xlu0 %4287
        %v4291 = vsel %vm1595, %v4280, %v4286
        %v4292 = vsel %vm1595, %v4282, %v4288
        %v4293 = vmul.f32 %v4291, %v1600
        %v4294 = vmul.f32 %v4292, %v1600
        %4295 = vrot.lane.b32.xlu0 %v4267, 127
        %v4296 = vpop.permute.xlu0 %4295
        %4297 = vrot.lane.b32.xlu0 %v4272, 127
        %v4298 = vpop.permute.xlu0 %4297
        %4301 = vrot.lane.b32.xlu0 %v4267, 63
        %v4302 = vpop.permute.xlu0 %4301
        %4303 = vrot.lane.b32.xlu0 %v4272, 63
        %v4304 = vpop.permute.xlu0 %4303
        %v4307 = vsel %vm1791, %v4296, %v4302
        %v4308 = vsel %vm1791, %v4298, %v4304
        %v4309 = vmul.f32 %v4307, %v1796
        %v4310 = vmul.f32 %v4308, %v1796
        %v4312 = vsel %vm1944, %v4276, 0
        %4314 = vmatprep.subr.mxu0 0.0
        %4315 = vmatpush1.msra.mxu0 %v4293
        %4316 = vmatprep.subr.mxu0 0.0
        %4317 = vmatpush1.msra.mxu0 %v4294
        %4318 = vmatprep.subr.mxu0 0.0
        %4319 = vmatpush1.msra.mxu0 %v4267
        %4320 = vmatprep.subr.mxu0 0.0
        %4321 = vmatpush1.msra.mxu0 %v4272
        %4322 = vmatprep.subr.mxu0 0.0
        %4323 = vmatpush1.msra.mxu0 %v4309
        %4324 = vmatprep.subr.mxu0 0.0
        %4325 = vmatpush1.msra.mxu0 %v4310
        %4326 = vmatprep.subr.mxu0 0.0
        %4327 = vmatpush1.msra.mxu0 0.0
        %4328 = vmatprep.subr.mxu0 0.0
        %4329 = vmatpush1.msra.mxu0 0.0
        %4330 = vmatprep.subr.mxu0 0.0
        %4331 = vmatpush1.msra.mxu0 0.0
        %4332 = vmatprep.subr.mxu0 0.0
        %4333 = vmatpush1.msra.mxu0 0.0
        %4334 = vmatprep.subr.mxu0 0.0
        %4335 = vmatpush1.msra.mxu0 0.0
        %4336 = vmatprep.subr.mxu0 0.0
        %4337 = vmatpush1.msra.mxu0 0.0
        %4338 = vmatprep.subr.mxu0 0.0
        %4339 = vmatpush1.msra.mxu0 0.0
        %4340 = vmatprep.subr.mxu0 0.0
        %4341 = vmatpush1.msra.mxu0 0.0
        %4342 = vmatprep.subr.mxu0 0.0
        %4343 = vmatpush1.msra.mxu0 0.0
        %4344 = vmatprep.subr.mxu0 0.0
        %4345 = vmatpush1.msra.mxu0 0.0
        %4346 = vmatprep.subr.mxu0 0.0
        %4347 = vmatpush1.msra.mxu0 0.0
        %4348 = vmatprep.subr.mxu0 0.0
        %4349 = vmatpush1.msra.mxu0 0.0
        %4350 = vmatprep.subr.mxu0 0.0
        %4351 = vmatpush1.msra.mxu0 0.0
        %4352 = vmatprep.subr.mxu0 0.0
        %4353 = vmatpush1.msra.mxu0 0.0
        %4354 = vmatprep.subr.mxu0 0.0
        %4355 = vmatpush1.msra.mxu0 0.0
        %4356 = vmatprep.subr.mxu0 0.0
        %4357 = vmatpush1.msra.mxu0 0.0
        %4358 = vmatprep.subr.mxu0 0.0
        %4359 = vmatpush1.msra.mxu0 0.0
        %4360 = vmatprep.subr.mxu0 0.0
        %4361 = vmatpush1.msra.mxu0 0.0
        %4362 = vmatprep.subr.mxu0 0.0
        %4363 = vmatpush1.msra.mxu0 0.0
        %4364 = vmatprep.subr.mxu0 0.0
        %4365 = vmatpush1.msra.mxu0 0.0
        %4366 = vmatprep.subr.mxu0 0.0
        %4367 = vmatpush1.msra.mxu0 0.0
        %4368 = vmatprep.subr.mxu0 0.0
        %4369 = vmatpush1.msra.mxu0 0.0
        %4370 = vmatprep.subr.mxu0 0.0
        %4371 = vmatpush1.msra.mxu0 0.0
        %4372 = vmatprep.subr.mxu0 0.0
        %4373 = vmatpush1.msra.mxu0 0.0
        %4374 = vmatprep.subr.mxu0 0.0
        %4375 = vmatpush1.msra.mxu0 0.0
        %4376 = vmatprep.subr.mxu0 0.0
        %4377 = vmatpush1.msra.mxu0 0.0
        %4378 = vmatprep.mubr.f32.mxu0 0.0
        %4379 = vmatmul.mubr.f32.gmra.mrb[0].mxu0 %v4312
        %v4380 = vpop.f32.mrb[0].mxu0
        %v4381 = vadd.f32 0.0, %v4380
        %v4382 = vpop.f32.mrb[0].mxu0
        %4383 = vdwg.mxu0
        %4385 = vset.pattern.permute.xlu0 0
        %4386 = vperm.xlu0 %4385, %v4275
        %v4387 = vpop.permute.xlu0 %4386
        %v4389 = vadd.f32 %v4387, %v4381
        %v4391 = vrot.slane %v4389, 1
        %4392 = vrot.lane.b32.xlu0 %v4391, 32
        %v4393 = vpop.permute.xlu0 %4392
        %v4395 = vsel %vm1449, %v4389, %v4393
        %v4396 = vlaneseq
        %v4397 = vshrl.u32 %v4396, 7
        %v4398 = vsub.s32 0, %v4397
        %v4399 = vrot.slane %v4395, %v4398
        %v4400 = vsel %vm1570, %v4399, 0.0
        %v4401 = vadd.f32 %v4400, 0.0
        %4402 = vrot.lane.b32.xlu0 %v4389, 96
        %v4403 = vpop.permute.xlu0 %4402
        %v4406 = vsel %vm1449, %v4403, %v4391
        %v4407 = vlaneseq
        %v4408 = vshrl.u32 %v4407, 7
        %v4409 = vsub.s32 0, %v4408
        %v4410 = vrot.slane %v4406, %v4409
        %v4411 = vsel %vm2901, %v4410, 0.0
        %v4412 = vadd.f32 %v4401, %v4411
        %v4413 = vadd.f32 %v3091, %v4412
        %v4414 = vmul.f32 %v4413, %v4413
        %4416 = vrot.lane.b32.xlu0 %v4414, 96
        %v4417 = vpop.permute.xlu0 %4416
        %v4419 = vadd.f32 %v4414, %v4417
        %v4420 = vrsqrt.pop %v4419
        %v4421 = vmul.f32 %v4419, %v4420
        %vm4422 = vcmp.eq.f32.partialorder %v4419, inf
        %v4423 = vsel %vm4422, %v4419, %v4421
        %vm4424 = vcmp.eq.f32.partialorder %v4419, 0.0
        %v4425 = vand.u32 %v4419, 2147483648
        %v4426 = vsel %vm4424, %v4425, %v4423
        %vm4427 = vcmp.gt.f32.partialorder %v4426, 0.5
        %v4428 = vsel %vm4427, %v4426, 1.0
        %v4429 = vrcp.pop %v4428
        %v4430 = vmul.f32 %v4413, %v4429
        %v4431 = vmul.f32 %v4430, 0.01
        %v4432 = vsel %vm4427, %v4431, %v4413
        %4434 = vrot.lane.b32.xlu0 %v4428, 32
        %v4435 = vpop.permute.xlu0 %4434
        %v4437 = vrcp.pop %v4435
        %v4438 = vmul.f32 %v4413, %v4437
        %v4439 = vmul.f32 %v4438, 0.01
        %4441 = vrot.lane.b32.xlu0 %v4439, 96
        %v4442 = vpop.permute.xlu0 %4441
        %4445 = vrot.lane.b32.xlu0 %v4413, 96
        %v4446 = vpop.permute.xlu0 %4445
        %v4448 = vsel %vm4427, %v4442, %v4446
        %4450 = vrot.lane.b32.xlu0 %v4448, 32
        %v4451 = vpop.permute.xlu0 %4450
        %v4453 = vsel %vm1449, %v4432, %v4451
        %v4454 = vmul.f32 %v4453, %v2908
        %4456 = vrot.lane.b32.xlu0 %v4454, 96
        %v4457 = vpop.permute.xlu0 %4456
        %v4459 = vsub.f32 %v4454, %v4457
        %4460 = vrot.lane.b32.xlu0 %v2908, 96
        %v4461 = vpop.permute.xlu0 %4460
        %v4463 = vmul.f32 %v4453, %v4461
        %4464 = vrot.lane.b32.xlu0 %v2908, 32
        %v4465 = vpop.permute.xlu0 %4464
        %v4467 = vmul.f32 %v4453, %v4465
        %4469 = vrot.lane.b32.xlu0 %v4467, 96
        %v4470 = vpop.permute.xlu0 %4469
        %v4472 = vadd.f32 %v4463, %v4470
        %4474 = vrot.lane.b32.xlu0 %v4472, 32
        %v4475 = vpop.permute.xlu0 %4474
        %v4477 = vsel %vm1449, %v4459, %v4475
        %v4478 = vmul.f32 %v4477, 0.032258064
        %v4479 = vld [vmem:[%s11] sm:$0xff]
        %v4480 = vld [vmem:[%s11 + $0x8] sm:$0xff]
        %v4481 = vld [vmem:[%s11 + $0x10] sm:$0xff]
        %v4482 = vld [vmem:[%s11 + $0x18] sm:$0xff]
        %v4483 = vld [vmem:[%s11 + $0x20] sm:$0xff]
        %v4484 = vld [vmem:[%s11 + $0x28] sm:$0xff]
        %v4485 = vld [vmem:[%s11 + $0x30] sm:$0xff]
        %v4486 = vld [vmem:[%s11 + $0x38] sm:$0xff]
        %v4487 = vsel %vm1483, %v3063, 0
        %4489 = vmatprep.subr.mxu0 0.0
        %4490 = vmatpush1.msra.mxu0 %v4479
        %4491 = vmatprep.subr.mxu0 0.0
        %4492 = vmatpush1.msra.mxu0 %v4480
        %4493 = vmatprep.subr.mxu0 0.0
        %4494 = vmatpush1.msra.mxu0 %v4481
        %4495 = vmatprep.subr.mxu0 0.0
        %4496 = vmatpush1.msra.mxu0 %v4482
        %4497 = vmatprep.subr.mxu0 0.0
        %4498 = vmatpush1.msra.mxu0 %v4483
        %4499 = vmatprep.subr.mxu0 0.0
        %4500 = vmatpush1.msra.mxu0 %v4484
        %4501 = vmatprep.subr.mxu0 0.0
        %4502 = vmatpush1.msra.mxu0 %v4485
        %4503 = vmatprep.subr.mxu0 0.0
        %4504 = vmatpush1.msra.mxu0 %v4486
        %4505 = vmatprep.subr.mxu0 0.0
        %4506 = vmatpush1.msra.mxu0 0.0
        %4507 = vmatprep.subr.mxu0 0.0
        %4508 = vmatpush1.msra.mxu0 0.0
        %4509 = vmatprep.subr.mxu0 0.0
        %4510 = vmatpush1.msra.mxu0 0.0
        %4511 = vmatprep.subr.mxu0 0.0
        %4512 = vmatpush1.msra.mxu0 0.0
        %4513 = vmatprep.subr.mxu0 0.0
        %4514 = vmatpush1.msra.mxu0 0.0
        %4515 = vmatprep.subr.mxu0 0.0
        %4516 = vmatpush1.msra.mxu0 0.0
        %4517 = vmatprep.subr.mxu0 0.0
        %4518 = vmatpush1.msra.mxu0 0.0
        %4519 = vmatprep.subr.mxu0 0.0
        %4520 = vmatpush1.msra.mxu0 0.0
        %4521 = vmatprep.subr.mxu0 0.0
        %4522 = vmatpush1.msra.mxu0 0.0
        %4523 = vmatprep.subr.mxu0 0.0
        %4524 = vmatpush1.msra.mxu0 0.0
        %4525 = vmatprep.subr.mxu0 0.0
        %4526 = vmatpush1.msra.mxu0 0.0
        %4527 = vmatprep.subr.mxu0 0.0
        %4528 = vmatpush1.msra.mxu0 0.0
        %4529 = vmatprep.subr.mxu0 0.0
        %4530 = vmatpush1.msra.mxu0 0.0
        %4531 = vmatprep.subr.mxu0 0.0
        %4532 = vmatpush1.msra.mxu0 0.0
        %4533 = vmatprep.subr.mxu0 0.0
        %4534 = vmatpush1.msra.mxu0 0.0
        %4535 = vmatprep.subr.mxu0 0.0
        %4536 = vmatpush1.msra.mxu0 0.0
        %4537 = vmatprep.subr.mxu0 0.0
        %4538 = vmatpush1.msra.mxu0 0.0
        %4539 = vmatprep.subr.mxu0 0.0
        %4540 = vmatpush1.msra.mxu0 0.0
        %4541 = vmatprep.subr.mxu0 0.0
        %4542 = vmatpush1.msra.mxu0 0.0
        %4543 = vmatprep.subr.mxu0 0.0
        %4544 = vmatpush1.msra.mxu0 0.0
        %4545 = vmatprep.subr.mxu0 0.0
        %4546 = vmatpush1.msra.mxu0 0.0
        %4547 = vmatprep.subr.mxu0 0.0
        %4548 = vmatpush1.msra.mxu0 0.0
        %4549 = vmatprep.subr.mxu0 0.0
        %4550 = vmatpush1.msra.mxu0 0.0
        %4551 = vmatprep.subr.mxu0 0.0
        %4552 = vmatpush1.msra.mxu0 0.0
        %4553 = vmatprep.mubr.f32.mxu0 0.0
        %4554 = vmatmul.mubr.f32.gmra.mrb[0].mxu0 %v4487
        %v4555 = vpop.f32.mrb[0].mxu0
        %v4556 = vadd.f32 0.0, %v4555
        %v4557 = vpop.f32.mrb[0].mxu0
        %4558 = vdwg.mxu0
        %v4560 = vsel %vm1483, %v4478, 0
        %4562 = vmatprep.subr.mxu0 0.0
        %4563 = vmatpush1.msra.mxu0 %v4479
        %4564 = vmatprep.subr.mxu0 0.0
        %4565 = vmatpush1.msra.mxu0 %v4480
        %4566 = vmatprep.subr.mxu0 0.0
        %4567 = vmatpush1.msra.mxu0 %v4481
        %4568 = vmatprep.subr.mxu0 0.0
        %4569 = vmatpush1.msra.mxu0 %v4482
        %4570 = vmatprep.subr.mxu0 0.0
        %4571 = vmatpush1.msra.mxu0 %v4483
        %4572 = vmatprep.subr.mxu0 0.0
        %4573 = vmatpush1.msra.mxu0 %v4484
        %4574 = vmatprep.subr.mxu0 0.0
        %4575 = vmatpush1.msra.mxu0 %v4485
        %4576 = vmatprep.subr.mxu0 0.0
        %4577 = vmatpush1.msra.mxu0 %v4486
        %4578 = vmatprep.subr.mxu0 0.0
        %4579 = vmatpush1.msra.mxu0 0.0
        %4580 = vmatprep.subr.mxu0 0.0
        %4581 = vmatpush1.msra.mxu0 0.0
        %4582 = vmatprep.subr.mxu0 0.0
        %4583 = vmatpush1.msra.mxu0 0.0
        %4584 = vmatprep.subr.mxu0 0.0
        %4585 = vmatpush1.msra.mxu0 0.0
        %4586 = vmatprep.subr.mxu0 0.0
        %4587 = vmatpush1.msra.mxu0 0.0
        %4588 = vmatprep.subr.mxu0 0.0
        %4589 = vmatpush1.msra.mxu0 0.0
        %4590 = vmatprep.subr.mxu0 0.0
        %4591 = vmatpush1.msra.mxu0 0.0
        %4592 = vmatprep.subr.mxu0 0.0
        %4593 = vmatpush1.msra.mxu0 0.0
        %4594 = vmatprep.subr.mxu0 0.0
        %4595 = vmatpush1.msra.mxu0 0.0
        %4596 = vmatprep.subr.mxu0 0.0
        %4597 = vmatpush1.msra.mxu0 0.0
        %4598 = vmatprep.subr.mxu0 0.0
        %4599 = vmatpush1.msra.mxu0 0.0
        %4600 = vmatprep.subr.mxu0 0.0
        %4601 = vmatpush1.msra.mxu0 0.0
        %4602 = vmatprep.subr.mxu0 0.0
        %4603 = vmatpush1.msra.mxu0 0.0
        %4604 = vmatprep.subr.mxu0 0.0
        %4605 = vmatpush1.msra.mxu0 0.0
        %4606 = vmatprep.subr.mxu0 0.0
        %4607 = vmatpush1.msra.mxu0 0.0
        %4608 = vmatprep.subr.mxu0 0.0
        %4609 = vmatpush1.msra.mxu0 0.0
        %4610 = vmatprep.subr.mxu0 0.0
        %4611 = vmatpush1.msra.mxu0 0.0
        %4612 = vmatprep.subr.mxu0 0.0
        %4613 = vmatpush1.msra.mxu0 0.0
        %4614 = vmatprep.subr.mxu0 0.0
        %4615 = vmatpush1.msra.mxu0 0.0
        %4616 = vmatprep.subr.mxu0 0.0
        %4617 = vmatpush1.msra.mxu0 0.0
        %4618 = vmatprep.subr.mxu0 0.0
        %4619 = vmatpush1.msra.mxu0 0.0
        %4620 = vmatprep.subr.mxu0 0.0
        %4621 = vmatpush1.msra.mxu0 0.0
        %4622 = vmatprep.subr.mxu0 0.0
        %4623 = vmatpush1.msra.mxu0 0.0
        %4624 = vmatprep.subr.mxu0 0.0
        %4625 = vmatpush1.msra.mxu0 0.0
        %4626 = vmatprep.mubr.f32.mxu0 0.0
        %4627 = vmatmul.mubr.f32.gmra.mrb[0].mxu0 %v4560
        %v4628 = vpop.f32.mrb[0].mxu0
        %v4629 = vadd.f32 0.0, %v4628
        %v4630 = vpop.f32.mrb[0].mxu0
        %4631 = vdwg.mxu0
        %v4632 = vsub.f32 %v2990, %v4556
        %v4633 = vadd.f32 %v1556, %v4632
        %4635 = vrot.lane.b32.xlu0 %v4629, 16
        %v4636 = vpop.permute.xlu0 %4635
        %v4638 = vsel %vm1260, %v2987, %v4636
        %v4639 = vld [vmem:[%s15] sm:$0xff]
        %v4640 = vld [vmem:[%s15 + $0x8] sm:$0xff]
        %v4641 = vld [vmem:[%s15 + $0x10] sm:$0xff]
        %v4642 = vld [vmem:[%s15 + $0x18] sm:$0xff]
        %v4644 = vsel %vm1449, %v4638, 0
        %4646 = vmatprep.subr.mxu0 0.0
        %4647 = vmatpush1.msra.mxu0 %v4639
        %4648 = vmatprep.subr.mxu0 0.0
        %4649 = vmatpush1.msra.mxu0 %v4640
        %4650 = vmatprep.subr.mxu0 0.0
        %4651 = vmatpush1.msra.mxu0 %v4641
        %4652 = vmatprep.subr.mxu0 0.0
        %4653 = vmatpush1.msra.mxu0 %v4642
        %4654 = vmatprep.subr.mxu0 0.0
        %4655 = vmatpush1.msra.mxu0 0.0
        %4656 = vmatprep.subr.mxu0 0.0
        %4657 = vmatpush1.msra.mxu0 0.0
        %4658 = vmatprep.subr.mxu0 0.0
        %4659 = vmatpush1.msra.mxu0 0.0
        %4660 = vmatprep.subr.mxu0 0.0
        %4661 = vmatpush1.msra.mxu0 0.0
        %4662 = vmatprep.subr.mxu0 0.0
        %4663 = vmatpush1.msra.mxu0 0.0
        %4664 = vmatprep.subr.mxu0 0.0
        %4665 = vmatpush1.msra.mxu0 0.0
        %4666 = vmatprep.subr.mxu0 0.0
        %4667 = vmatpush1.msra.mxu0 0.0
        %4668 = vmatprep.subr.mxu0 0.0
        %4669 = vmatpush1.msra.mxu0 0.0
        %4670 = vmatprep.subr.mxu0 0.0
        %4671 = vmatpush1.msra.mxu0 0.0
        %4672 = vmatprep.subr.mxu0 0.0
        %4673 = vmatpush1.msra.mxu0 0.0
        %4674 = vmatprep.subr.mxu0 0.0
        %4675 = vmatpush1.msra.mxu0 0.0
        %4676 = vmatprep.subr.mxu0 0.0
        %4677 = vmatpush1.msra.mxu0 0.0
        %4678 = vmatprep.subr.mxu0 0.0
        %4679 = vmatpush1.msra.mxu0 0.0
        %4680 = vmatprep.subr.mxu0 0.0
        %4681 = vmatpush1.msra.mxu0 0.0
        %4682 = vmatprep.subr.mxu0 0.0
        %4683 = vmatpush1.msra.mxu0 0.0
        %4684 = vmatprep.subr.mxu0 0.0
        %4685 = vmatpush1.msra.mxu0 0.0
        %4686 = vmatprep.subr.mxu0 0.0
        %4687 = vmatpush1.msra.mxu0 0.0
        %4688 = vmatprep.subr.mxu0 0.0
        %4689 = vmatpush1.msra.mxu0 0.0
        %4690 = vmatprep.subr.mxu0 0.0
        %4691 = vmatpush1.msra.mxu0 0.0
        %4692 = vmatprep.subr.mxu0 0.0
        %4693 = vmatpush1.msra.mxu0 0.0
        %4694 = vmatprep.subr.mxu0 0.0
        %4695 = vmatpush1.msra.mxu0 0.0
        %4696 = vmatprep.subr.mxu0 0.0
        %4697 = vmatpush1.msra.mxu0 0.0
        %4698 = vmatprep.subr.mxu0 0.0
        %4699 = vmatpush1.msra.mxu0 0.0
        %4700 = vmatprep.subr.mxu0 0.0
        %4701 = vmatpush1.msra.mxu0 0.0
        %4702 = vmatprep.subr.mxu0 0.0
        %4703 = vmatpush1.msra.mxu0 0.0
        %4704 = vmatprep.subr.mxu0 0.0
        %4705 = vmatpush1.msra.mxu0 0.0
        %4706 = vmatprep.subr.mxu0 0.0
        %4707 = vmatpush1.msra.mxu0 0.0
        %4708 = vmatprep.subr.mxu0 0.0
        %4709 = vmatpush1.msra.mxu0 0.0
        %4710 = vmatprep.mubr.f32.mxu0 0.0
        %4711 = vmatmul.mubr.f32.gmra.mrb[0].mxu0 %v4644
        %v4712 = vpop.f32.mrb[0].mxu0
        %v4713 = vadd.f32 0.0, %v4712
        %v4714 = vpop.f32.mrb[0].mxu0
        %4715 = vdwg.mxu0
        %vm4716 = vcmask 517120
        %4717 = vst.msk [vmem:[#allocation2] sm:$0x3] %vm4716, %v4453
        %v4718 = vadd.f32 %v2987, %v4629
        %v4719 = vsub.f32 %v1257, %v4718
        %vm4720 = vcmask 123904
        %4721 = vst.msk [vmem:[#allocation3] sm:$0x3] %vm4720, %v4719
        %4722 = vst.msk [vmem:[%s55] sm:$0x3] %vm4716, %v2908
        %4723 = vst.msk [vmem:[%s57] sm:$0x3] %vm4716, %v4453
        %v4724 = vadd.f32 %v2908, %v4478
        %v4725 = vsub.f32 %v4724, %v4713
        %v4726 = vmul.f32 %v4725, 0.5
        %4727 = vst.msk [vmem:[%s1231] sm:$0x3] %vm4716, %v4726
        %v4728 = vmul.f32 %v4633, 0.25
        %4729 = vst.msk [vmem:[%s1235] sm:$0x3] %vm4720, %v4728
        %p4730 = scmp.lt.s32.totalorder %s74, 1
        %s4731 = scalar_select %p4730, %s74, 1
        %s4732 = smul.addr %s4731, 2
        %s4733 = scalar_lea.vmem %s59, %s4732
        %p4734 = scmp.lt.s32.totalorder %s74, 1
        %s4735 = scalar_select %p4734, %s74, 1
        %s4736 = smul.addr %s4735, 2
        %s4737 = scalar_lea.vmem %s61, %s4736
        // Predicated region
        $region137: #{ogfreq_forward.1} parent=127 // pred_check
          %p4738 = pneg %p734
        $region138: #{ogfreq_forward.1} parent=127 // pred_check_branch
          %4740 = sbr.rel (%p4738) target = $region140
        $region139: #{ogfreq_forward.1} parent=127 // pred_region
          _
        $region140: #{ogfreq_forward.1} parent=127 // pred_fallthru
          _
        // Predicated region
        $region141: #{ogfreq_forward.1} parent=127 // pred_check
          %p4741 = pneg %p755
        $region142: #{ogfreq_forward.1} parent=127 // pred_check_branch
          %4743 = sbr.rel (%p4741) target = $region144
        $region143: #{ogfreq_forward.1} parent=127 // pred_region
          _
        $region144: #{ogfreq_forward.1} parent=127 // pred_fallthru
          _
        // Predicated region
        $region145: #{ogfreq_forward.1} parent=127 // pred_check
          %p4744 = pneg %p781
        $region146: #{ogfreq_forward.1} parent=127 // pred_check_branch
          %4746 = sbr.rel (%p4744) target = $region148
        $region147: #{ogfreq_forward.1} parent=127 // pred_region
          _
        $region148: #{ogfreq_forward.1} parent=127 // pred_fallthru
          _
        // Predicated region
        $region149: #{ogfreq_forward.1} parent=127 // pred_check
          %p4747 = pneg %p807
        $region150: #{ogfreq_forward.1} parent=127 // pred_check_branch
          %4749 = sbr.rel (%p4747) target = $region152
        $region151: #{ogfreq_forward.1} parent=127 // pred_region
          _
        $region152: #{ogfreq_forward.1} parent=127 // pred_fallthru
          _
        // Predicated region
        $region153: #{ogfreq_forward.1} parent=127 // pred_check
          %p4750 = pneg %p734
        $region154: #{ogfreq_forward.1} parent=127 // pred_check_branch
          %4752 = sbr.rel (%p4750) target = $region156
        $region155: #{ogfreq_forward.1} parent=127 // pred_region
          _
        $region156: #{ogfreq_forward.1} parent=127 // pred_fallthru
          _
        // Predicated region
        $region157: #{ogfreq_forward.1} parent=127 // pred_check
          %p4753 = pneg %p755
        $region158: #{ogfreq_forward.1} parent=127 // pred_check_branch
          %4755 = sbr.rel (%p4753) target = $region160
        $region159: #{ogfreq_forward.1} parent=127 // pred_region
          _
        $region160: #{ogfreq_forward.1} parent=127 // pred_fallthru
          _
      $region128: #{ogfreq_forward.1} parent=5 // pred_fallthru
        _
      %p4756 = scmp.le.s32.totalorder 2, %s69
      // Predicated region
      $region161: #{ogfreq_forward.1} parent=5 // pred_check
        %p4757 = pneg %p4756
      $region162: #{ogfreq_forward.1} parent=5 // pred_check_branch
        %4759 = sbr.rel (%p4757) target = $region164
      $region163: #{ogfreq_forward.1} parent=5 // pred_region
        %s4760 = ssub.s32 %s69, 2
        // Predicated region
        $region165: #{ogfreq_forward.1} parent=163 // pred_check
          %p4761 = pneg %p787
        $region166: #{ogfreq_forward.1} parent=163 // pred_check_branch
          %4763 = sbr.rel (%p4761) target = $region168
        $region167: #{ogfreq_forward.1} parent=163 // pred_region
          %p4764 = scmp.lt.s32.totalorder %s75, 1
          %s4765 = scalar_select %p4764, %s75, 1
          %s4766 = smul.addr %s4765, 2
          %s4767 = scalar_lea.vmem %s59, %s4766
        $region168: #{ogfreq_forward.1} parent=163 // pred_fallthru
          _
        // Predicated region
        $region169: #{ogfreq_forward.1} parent=163 // pred_check
          %p4768 = pneg %p813
        $region170: #{ogfreq_forward.1} parent=163 // pred_check_branch
          %4770 = sbr.rel (%p4768) target = $region172
        $region171: #{ogfreq_forward.1} parent=163 // pred_region
          %p4771 = scmp.lt.s32.totalorder %s75, 1
          %s4772 = scalar_select %p4771, %s75, 1
          %s4773 = smul.addr %s4772, 2
          %s4774 = scalar_lea.vmem %s61, %s4773
        $region172: #{ogfreq_forward.1} parent=163 // pred_fallthru
          _
      $region164: #{ogfreq_forward.1} parent=5 // pred_fallthru
        _
    $region6: #{ogfreq_forward.1} parent=1 // loop_footer
      %s73 = sadd.s32 1, %s69
    $region7: #{ogfreq_forward.1} parent=1 // loop_footer_branch
      %68 = sbr.rel target = $region3
    $region8: #{ogfreq_forward.1} parent=1 // loop_exit
      _
    %4775 = vsyncpa [#allocation5], 1
    %s4776 = scalar_lea.sflag [#allocation5], 1
    %4777 = vsyncpa %s4776, 1

</llo_original>
